<compile_context>
chip_gen: v6e
topology: v6e:2x2x1
jax: 0.10.0
libtpu: 0.0.40
codegen_flags: <defaults>
</compile_context>

<pallas_src>
import functools

import jax
import jax.numpy as jnp
from jax.experimental import pallas as pl
from jax.experimental.pallas import tpu as pltpu


# --------------------------------------------------------------------------- kernel

def _deepwalk_mf_kernel(p_full_ref, dinv_scaled_ref, out_ref, *, T, tm):
    """Per-row-tile kernel.

    p_full_ref      : VMEM (N, N) f32/bf16 -- full P, resident RHS of every matmul
    dinv_scaled_ref : VMEM (1, N) f32      -- (vol_G / T / b) * (1/deg)
    out_ref         : VMEM (tm, N) f32     -- output tile; doubles as the S accumulator
    """
    row0 = pl.multiple_of(pl.program_id(0) * tm, tm)
    p_full = p_full_ref[...]
    op_dtype = p_full.dtype

    # Rows of P^1 for this tile, sliced from the resident copy (no duplicated HBM read).
    xp0 = p_full_ref[pl.ds(row0, tm), :].astype(jnp.float32)
    out_ref[...] = xp0                          # S starts with P^1

    def body(_, xp):
        # (P^i)[rows, :] = (P^{i-1})[rows, :] @ P   -- hot path on the MXU, f32 accumulate.
        xp = jnp.dot(xp.astype(op_dtype), p_full,
                     preferred_element_type=jnp.float32)
        out_ref[...] += xp
        return xp

    # Unrolled: iteration i's f32 accumulate + cast hides under iteration i+1's MXU
    # pushes. T-1 is small (default 9), so code growth is bounded.
    jax.lax.fori_loop(0, T - 1, body, xp0, unroll=True)

    out = out_ref[...] * dinv_scaled_ref[...]   # (tm,N)*(1,N): scale + column D_inv in one pass
    out = jnp.maximum(out, 0.001)               # torch.clamp(min=0.001)
    out_ref[...] = jnp.log(out)


# --------------------------------------------------------------------- build helpers

def _pick_tm(N, tm):
    """Largest row tile <= requested that divides N."""
    tm = min(tm, N)
    while N % tm != 0 and tm > 8:
        tm //= 2
    return tm


def _single_buffered(block_shape, index_map):
    """Single-buffer a grid-invariant (or tight) block when this jax supports it."""
    if hasattr(pl, "Buffered"):
        try:
            return pl.BlockSpec(block_shape, index_map, pipeline_mode=pl.Buffered(1))
        except TypeError:
            # This jax version has no pipeline_mode kwarg; plain double-buffered spec.
            pass
    return pl.BlockSpec(block_shape, index_map)


def _vmem_cap_bytes():
    """Physical per-core VMEM with headroom (v5e/v6e 128 MiB, v7x 64 MiB per TC)."""
    try:
        phys = int(pltpu.get_tpu_info().vmem_capacity_bytes)
    except Exception:
        phys = 128 * 1024 * 1024
    return int(phys * 0.88)          # ~56 MiB on v7x, ~112 MiB on v5e/v6e


def _vmem_need_bytes(N, tm, p_itemsize, out_bufs):
    tile_f32 = tm * N * 4
    resident = N * N * p_itemsize                 # single-buffered resident P
    work = 3 * tile_f32                           # xp carry + operand cast + epilogue temps
    return int(1.25 * (resident + out_bufs * tile_f32 + work + 8 * N))


def _build_call(N, tm, T, vmem_bytes, *, single_buffer_out):
    out_spec = (_single_buffered((tm, N), lambda i: (i, 0)) if single_buffer_out
                else pl.BlockSpec((tm, N), lambda i: (i, 0)))
    grid_spec = pltpu.PrefetchScalarGridSpec(
        num_scalar_prefetch=0,
        grid=(N // tm,),
        in_specs=[
            _single_buffered((N, N), lambda i: (0, 0)),   # resident P (matmul RHS)
            _single_buffered((1, N), lambda i: (0, 0)),   # scaled 1/deg row
        ],
        out_specs=out_spec,
    )
    return pl.pallas_call(
        functools.partial(_deepwalk_mf_kernel, T=T, tm=tm),
        out_shape=jax.ShapeDtypeStruct((N, N), jnp.float32),
        grid_spec=grid_spec,
        compiler_params=pltpu.CompilerParams(
            # Row tiles are independent: shards across the 2 TensorCores on v7x.
            dimension_semantics=("parallel",),
            vmem_limit_bytes=vmem_bytes,
        ),
    )


# ---------------------------------------------------------------------------- API

def deepwalk_mf_forward(X, T=10, b=5, tm=None, use_bf16_operands=False):
    """X: (N, N) float32 adjacency. Returns (N, N) float32 log-PMI-like matrix.

    tm: row-tile size; None -> auto (256, bumped to 512 on 128-MiB parts when it fits;
        128 is a fine choice on v5e's 128-wide MXUs).
    use_bf16_operands: keep the resident P (and the per-iteration LHS cast) in bf16
        with f32 accumulation. ~3-4x on the MXU hot path on all generations and halves
        the resident footprint, but compounds rounding over T chained powers --
        validate tolerance at target N/T before using it for accuracy-critical work.
    """
    X = X.astype(jnp.float32)
    N = X.shape[0]
    assert X.shape == (N, N)
    assert N % 128 == 0, "N must be a multiple of 128 (lane width)"

    cap = _vmem_cap_bytes()
    p_itemsize = 2 if use_bf16_operands else 4

    if tm is None:
        tm = 256
        # On 128-MiB parts (v5e/v6e) a 512-row tile halves grid overhead when it fits.
        if (cap > 100 * 1024 * 1024 and N >= 512
                and _vmem_need_bytes(N, 512, p_itemsize, 2) <= cap):
            tm = 512
    tm = _pick_tm(N, tm)
    assert tm % 8 == 0 and N % tm == 0

    # Fit the plan into physical VMEM: first single-buffer the output, then shrink the
    # row tile. Never fall back toward MORE VMEM.
    single_buffer_out = False
    need = _vmem_need_bytes(N, tm, p_itemsize, 2)
    if need > cap:
        single_buffer_out = True
        need = _vmem_need_bytes(N, tm, p_itemsize, 1)
    while need > cap and tm > 8:
        tm = _pick_tm(N, tm // 2)
        need = _vmem_need_bytes(N, tm, p_itemsize, 1)
    if need > cap:
        raise ValueError(
            f"N={N} exceeds the VMEM residency ceiling on this TPU "
            f"(need ~{need >> 20} MiB, cap ~{cap >> 20} MiB); try "
            "use_bf16_operands=True or an HBM-streamed RHS variant.")
    vmem_bytes = min(max(need, 32 * 1024 * 1024), cap)

    # Parameter setup (the module's set_d_rt): degrees, D_inv, vol_G -- plain JAX glue.
    deg = jnp.sum(X, axis=1)                          # d_rt
    d_inv = 1.0 / deg                                 # diag of D_inv (inf if deg == 0)
    vol_G = jnp.sum(deg)
    P = d_inv[:, None] * X                            # D_inv @ X  (row scaling)
    P_op = P.astype(jnp.bfloat16) if use_bf16_operands else P.astype(jnp.float32)
    # Fold the scalar (vol_G / T / b) into the column-scaling vector: one VPU pass.
    dinv_scaled = (d_inv * (vol_G / T / b))[None, :].astype(jnp.float32)

    call = _build_call(N, tm, T, vmem_bytes, single_buffer_out=single_buffer_out)
    return call(P_op, dinv_scaled)


def deepwalk_mf_reference(X, T=10, b=5):
    """Pure-JAX reference mirroring the PyTorch code line by line (in f32)."""
    X = X.astype(jnp.float32)
    N = X.shape[0]
    deg = jnp.sum(X, axis=1)
    D_inv = jnp.diag(1.0 / deg)
    vol_G = jnp.sum(deg)
    P = D_inv @ X
    X_power = jnp.eye(N, dtype=jnp.float32)
    S = jnp.zeros_like(X)
    for _ in range(T):
        X_power = P @ X_power
        S = S + X_power
    out = S * (vol_G / T / b)
    out = out @ D_inv
    out = jnp.maximum(out, 0.001)
    return jnp.log(out)


# ---------------------------------------------------------------------------- test

if __name__ == "__main__":
    N, T, b = 256, 10, 5
    key = jax.random.PRNGKey(0)
    # Deterministic synthetic adjacency: sparse-ish symmetric graph with self-loops
    # (self-loops guarantee strictly positive degrees).
    B = (jax.random.uniform(key, (N, N)) < 0.15).astype(jnp.float32)
    X = jnp.maximum(B, B.T)
    X = jnp.maximum(X, jnp.eye(N, dtype=jnp.float32))

    ref = deepwalk_mf_reference(X, T=T, b=b)

    # f32 operand path (accuracy path), multi-tile grid.
    out = jax.block_until_ready(
        deepwalk_mf_forward(X, T=T, b=b, tm=128, use_bf16_operands=False))
    assert out.shape == (N, N) and out.dtype == jnp.float32
    err_f32 = float(jnp.max(jnp.abs(out - ref)))
    assert err_f32 < 1e-3, err_f32

    # bf16 operand path (MXU fast path), single-tile grid; looser tolerance because
    # bf16 rounding compounds over the T chained powers.
    out_bf16 = jax.block_until_ready(
        deepwalk_mf_forward(X, T=T, b=b, tm=256, use_bf16_operands=True))
    assert out_bf16.shape == (N, N) and out_bf16.dtype == jnp.float32
    assert bool(jnp.all(jnp.isfinite(out_bf16)))
    err_bf16 = float(jnp.max(jnp.abs(out_bf16 - ref)))
    assert err_bf16 < 0.1, err_bf16

    print("KERNEL_OK")
</pallas_src>

<mosaic_0001>
module attributes {stable_mosaic.version = 11 : i64} {
  func.func @_deepwalk_mf_kernel(%arg0: i32, %arg1: memref<256x256xf32, #tpu.memory_space<vmem>>, %arg2: memref<1x256xf32, #tpu.memory_space<vmem>>, %arg3: memref<128x256xf32, #tpu.memory_space<vmem>>) attributes {dimension_semantics = [#tpu.dimension_semantics<parallel>], iteration_bounds = array<i64: 2>, scalar_prefetch = 0 : i64, scratch_operands = 0 : i64, tpu.core_type = #tpu.core_type<tc>, window_params = [{pipeline_mode = #tpu.pipeline_mode<synchronous>, transform_indices = @transform_0, window_bounds = array<i64: 256, 256>}, {pipeline_mode = #tpu.pipeline_mode<synchronous>, transform_indices = @transform_1, window_bounds = array<i64: 1, 256>}, {transform_indices = @transform_2, window_bounds = array<i64: 128, 256>}]} {
    %c128_i32 = arith.constant 128 : i32
    %0 = arith.muli %arg0, %c128_i32 : i32
    %1 = tpu.assume_multiple %0, 128 : i32
    %c0 = arith.constant 0 : index
    %c0_0 = arith.constant 0 : index
    %2 = vector.load %arg1[%c0, %c0_0] : memref<256x256xf32, #tpu.memory_space<vmem>>, vector<256x256xf32>
    %3 = arith.index_cast %1 : i32 to index
    %c0_1 = arith.constant 0 : index
    %4 = vector.load %arg1[%3, %c0_1] : memref<256x256xf32, #tpu.memory_space<vmem>>, vector<128x256xf32>
    %c0_2 = arith.constant 0 : index
    %c0_3 = arith.constant 0 : index
    %5 = vector.load %arg3[%c0_2, %c0_3] : memref<128x256xf32, #tpu.memory_space<vmem>>, vector<128x256xf32>
    tpu.vector_store %arg3[%c0_2, %c0_3], %4 {strides = array<i32>} : memref<128x256xf32, #tpu.memory_space<vmem>>, vector<128x256xf32>,
    %c0_i32 = arith.constant 0 : i32
    %cst = arith.constant dense<0.000000e+00> : vector<128x256xf32>
    %6 = tpu.matmul %4, %2, %cst {dimension_numbers = #tpu.dot_dimension_numbers<[1], [0], [0], [1], [0, 0, 1, 1], [], []>} : vector<128x256xf32>, vector<256x256xf32>, vector<128x256xf32> -> vector<128x256xf32>
    %c0_4 = arith.constant 0 : index
    %c0_5 = arith.constant 0 : index
    %7 = vector.load %arg3[%c0_4, %c0_5] : memref<128x256xf32, #tpu.memory_space<vmem>>, vector<128x256xf32>
    %8 = arith.addf %7, %6 : vector<128x256xf32>
    %c0_6 = arith.constant 0 : index
    %c0_7 = arith.constant 0 : index
    %9 = vector.load %arg3[%c0_6, %c0_7] : memref<128x256xf32, #tpu.memory_space<vmem>>, vector<128x256xf32>
    tpu.vector_store %arg3[%c0_6, %c0_7], %8 {strides = array<i32>} : memref<128x256xf32, #tpu.memory_space<vmem>>, vector<128x256xf32>,
    %c1_i32 = arith.constant 1 : i32
    %cst_8 = arith.constant dense<0.000000e+00> : vector<128x256xf32>
    %10 = tpu.matmul %6, %2, %cst_8 {dimension_numbers = #tpu.dot_dimension_numbers<[1], [0], [0], [1], [0, 0, 1, 1], [], []>} : vector<128x256xf32>, vector<256x256xf32>, vector<128x256xf32> -> vector<128x256xf32>
    %c0_9 = arith.constant 0 : index
    %c0_10 = arith.constant 0 : index
    %11 = vector.load %arg3[%c0_9, %c0_10] : memref<128x256xf32, #tpu.memory_space<vmem>>, vector<128x256xf32>
    %12 = arith.addf %11, %10 : vector<128x256xf32>
    %c0_11 = arith.constant 0 : index
    %c0_12 = arith.constant 0 : index
    %13 = vector.load %arg3[%c0_11, %c0_12] : memref<128x256xf32, #tpu.memory_space<vmem>>, vector<128x256xf32>
    tpu.vector_store %arg3[%c0_11, %c0_12], %12 {strides = array<i32>} : memref<128x256xf32, #tpu.memory_space<vmem>>, vector<128x256xf32>,
    %c2_i32 = arith.constant 2 : i32
    %cst_13 = arith.constant dense<0.000000e+00> : vector<128x256xf32>
    %14 = tpu.matmul %10, %2, %cst_13 {dimension_numbers = #tpu.dot_dimension_numbers<[1], [0], [0], [1], [0, 0, 1, 1], [], []>} : vector<128x256xf32>, vector<256x256xf32>, vector<128x256xf32> -> vector<128x256xf32>
    %c0_14 = arith.constant 0 : index
    %c0_15 = arith.constant 0 : index
    %15 = vector.load %arg3[%c0_14, %c0_15] : memref<128x256xf32, #tpu.memory_space<vmem>>, vector<128x256xf32>
    %16 = arith.addf %15, %14 : vector<128x256xf32>
    %c0_16 = arith.constant 0 : index
    %c0_17 = arith.constant 0 : index
    %17 = vector.load %arg3[%c0_16, %c0_17] : memref<128x256xf32, #tpu.memory_space<vmem>>, vector<128x256xf32>
    tpu.vector_store %arg3[%c0_16, %c0_17], %16 {strides = array<i32>} : memref<128x256xf32, #tpu.memory_space<vmem>>, vector<128x256xf32>,
    %c3_i32 = arith.constant 3 : i32
    %cst_18 = arith.constant dense<0.000000e+00> : vector<128x256xf32>
    %18 = tpu.matmul %14, %2, %cst_18 {dimension_numbers = #tpu.dot_dimension_numbers<[1], [0], [0], [1], [0, 0, 1, 1], [], []>} : vector<128x256xf32>, vector<256x256xf32>, vector<128x256xf32> -> vector<128x256xf32>
    %c0_19 = arith.constant 0 : index
    %c0_20 = arith.constant 0 : index
    %19 = vector.load %arg3[%c0_19, %c0_20] : memref<128x256xf32, #tpu.memory_space<vmem>>, vector<128x256xf32>
    %20 = arith.addf %19, %18 : vector<128x256xf32>
    %c0_21 = arith.constant 0 : index
    %c0_22 = arith.constant 0 : index
    %21 = vector.load %arg3[%c0_21, %c0_22] : memref<128x256xf32, #tpu.memory_space<vmem>>, vector<128x256xf32>
    tpu.vector_store %arg3[%c0_21, %c0_22], %20 {strides = array<i32>} : memref<128x256xf32, #tpu.memory_space<vmem>>, vector<128x256xf32>,
    %c4_i32 = arith.constant 4 : i32
    %cst_23 = arith.constant dense<0.000000e+00> : vector<128x256xf32>
    %22 = tpu.matmul %18, %2, %cst_23 {dimension_numbers = #tpu.dot_dimension_numbers<[1], [0], [0], [1], [0, 0, 1, 1], [], []>} : vector<128x256xf32>, vector<256x256xf32>, vector<128x256xf32> -> vector<128x256xf32>
    %c0_24 = arith.constant 0 : index
    %c0_25 = arith.constant 0 : index
    %23 = vector.load %arg3[%c0_24, %c0_25] : memref<128x256xf32, #tpu.memory_space<vmem>>, vector<128x256xf32>
    %24 = arith.addf %23, %22 : vector<128x256xf32>
    %c0_26 = arith.constant 0 : index
    %c0_27 = arith.constant 0 : index
    %25 = vector.load %arg3[%c0_26, %c0_27] : memref<128x256xf32, #tpu.memory_space<vmem>>, vector<128x256xf32>
    tpu.vector_store %arg3[%c0_26, %c0_27], %24 {strides = array<i32>} : memref<128x256xf32, #tpu.memory_space<vmem>>, vector<128x256xf32>,
    %c5_i32 = arith.constant 5 : i32
    %cst_28 = arith.constant dense<0.000000e+00> : vector<128x256xf32>
    %26 = tpu.matmul %22, %2, %cst_28 {dimension_numbers = #tpu.dot_dimension_numbers<[1], [0], [0], [1], [0, 0, 1, 1], [], []>} : vector<128x256xf32>, vector<256x256xf32>, vector<128x256xf32> -> vector<128x256xf32>
    %c0_29 = arith.constant 0 : index
    %c0_30 = arith.constant 0 : index
    %27 = vector.load %arg3[%c0_29, %c0_30] : memref<128x256xf32, #tpu.memory_space<vmem>>, vector<128x256xf32>
    %28 = arith.addf %27, %26 : vector<128x256xf32>
    %c0_31 = arith.constant 0 : index
    %c0_32 = arith.constant 0 : index
    %29 = vector.load %arg3[%c0_31, %c0_32] : memref<128x256xf32, #tpu.memory_space<vmem>>, vector<128x256xf32>
    tpu.vector_store %arg3[%c0_31, %c0_32], %28 {strides = array<i32>} : memref<128x256xf32, #tpu.memory_space<vmem>>, vector<128x256xf32>,
    %c6_i32 = arith.constant 6 : i32
    %cst_33 = arith.constant dense<0.000000e+00> : vector<128x256xf32>
    %30 = tpu.matmul %26, %2, %cst_33 {dimension_numbers = #tpu.dot_dimension_numbers<[1], [0], [0], [1], [0, 0, 1, 1], [], []>} : vector<128x256xf32>, vector<256x256xf32>, vector<128x256xf32> -> vector<128x256xf32>
    %c0_34 = arith.constant 0 : index
    %c0_35 = arith.constant 0 : index
    %31 = vector.load %arg3[%c0_34, %c0_35] : memref<128x256xf32, #tpu.memory_space<vmem>>, vector<128x256xf32>
    %32 = arith.addf %31, %30 : vector<128x256xf32>
    %c0_36 = arith.constant 0 : index
    %c0_37 = arith.constant 0 : index
    %33 = vector.load %arg3[%c0_36, %c0_37] : memref<128x256xf32, #tpu.memory_space<vmem>>, vector<128x256xf32>
    tpu.vector_store %arg3[%c0_36, %c0_37], %32 {strides = array<i32>} : memref<128x256xf32, #tpu.memory_space<vmem>>, vector<128x256xf32>,
    %c7_i32 = arith.constant 7 : i32
    %cst_38 = arith.constant dense<0.000000e+00> : vector<128x256xf32>
    %34 = tpu.matmul %30, %2, %cst_38 {dimension_numbers = #tpu.dot_dimension_numbers<[1], [0], [0], [1], [0, 0, 1, 1], [], []>} : vector<128x256xf32>, vector<256x256xf32>, vector<128x256xf32> -> vector<128x256xf32>
    %c0_39 = arith.constant 0 : index
    %c0_40 = arith.constant 0 : index
    %35 = vector.load %arg3[%c0_39, %c0_40] : memref<128x256xf32, #tpu.memory_space<vmem>>, vector<128x256xf32>
    %36 = arith.addf %35, %34 : vector<128x256xf32>
    %c0_41 = arith.constant 0 : index
    %c0_42 = arith.constant 0 : index
    %37 = vector.load %arg3[%c0_41, %c0_42] : memref<128x256xf32, #tpu.memory_space<vmem>>, vector<128x256xf32>
    tpu.vector_store %arg3[%c0_41, %c0_42], %36 {strides = array<i32>} : memref<128x256xf32, #tpu.memory_space<vmem>>, vector<128x256xf32>,
    %c8_i32 = arith.constant 8 : i32
    %cst_43 = arith.constant dense<0.000000e+00> : vector<128x256xf32>
    %38 = tpu.matmul %34, %2, %cst_43 {dimension_numbers = #tpu.dot_dimension_numbers<[1], [0], [0], [1], [0, 0, 1, 1], [], []>} : vector<128x256xf32>, vector<256x256xf32>, vector<128x256xf32> -> vector<128x256xf32>
    %c0_44 = arith.constant 0 : index
    %c0_45 = arith.constant 0 : index
    %39 = vector.load %arg3[%c0_44, %c0_45] : memref<128x256xf32, #tpu.memory_space<vmem>>, vector<128x256xf32>
    %40 = arith.addf %39, %38 : vector<128x256xf32>
    %c0_46 = arith.constant 0 : index
    %c0_47 = arith.constant 0 : index
    %41 = vector.load %arg3[%c0_46, %c0_47] : memref<128x256xf32, #tpu.memory_space<vmem>>, vector<128x256xf32>
    tpu.vector_store %arg3[%c0_46, %c0_47], %40 {strides = array<i32>} : memref<128x256xf32, #tpu.memory_space<vmem>>, vector<128x256xf32>,
    %c0_48 = arith.constant 0 : index
    %c0_49 = arith.constant 0 : index
    %42 = vector.load %arg3[%c0_48, %c0_49] : memref<128x256xf32, #tpu.memory_space<vmem>>, vector<128x256xf32>
    %c0_50 = arith.constant 0 : index
    %c0_51 = arith.constant 0 : index
    %43 = vector.load %arg2[%c0_50, %c0_51] : memref<1x256xf32, #tpu.memory_space<vmem>>, vector<1x256xf32>
    %44 = vector.broadcast %43 : vector<1x256xf32> to vector<128x256xf32>
    %45 = arith.mulf %42, %44 : vector<128x256xf32>
    %cst_52 = arith.constant 1.000000e-03 : f32
    %46 = vector.broadcast %cst_52 : f32 to vector<128x256xf32>
    %47 = arith.maximumf %45, %46 : vector<128x256xf32>
    %48 = math.log %47 : vector<128x256xf32>
    %c0_53 = arith.constant 0 : index
    %c0_54 = arith.constant 0 : index
    %49 = vector.load %arg3[%c0_53, %c0_54] : memref<128x256xf32, #tpu.memory_space<vmem>>, vector<128x256xf32>
    tpu.vector_store %arg3[%c0_53, %c0_54], %48 {strides = array<i32>} : memref<128x256xf32, #tpu.memory_space<vmem>>, vector<128x256xf32>,
    return
  }
  func.func @transform_0(%arg0: i32) -> (i32, i32) {
    %c0_i32 = arith.constant 0 : i32
    %c0_i32_0 = arith.constant 0 : i32
    %c0_i32_1 = arith.constant 0 : i32
    return %c0_i32, %c0_i32_0 : i32, i32
  }
  func.func @transform_1(%arg0: i32) -> (i32, i32) {
    %c0_i32 = arith.constant 0 : i32
    %c0_i32_0 = arith.constant 0 : i32
    %c0_i32_1 = arith.constant 0 : i32
    return %c0_i32, %c0_i32_0 : i32, i32
  }
  func.func @transform_2(%arg0: i32) -> (i32, i32) {
    %c0_i32 = arith.constant 0 : i32
    %c0_i32_0 = arith.constant 0 : i32
    return %arg0, %c0_i32 : i32, i32
  }
}

</mosaic_0001>

<llo_original>
// kernel: tpu_custom_call.1
$region0: #{tpu_custom_call.1}
  #allocation0 [shape = 'u32[]', space=smem, size = 0x4, offset = 0x4, fixed_abs, tag = 'smem constant byte address 0x4 - core index']
  #allocation1 [shape = 'u32[144,128]{1,0:T(1,128)}', space=vmem, size = 0x12000, scoped, tag = 'internal scratch']
  %s0 = inlined_call_operand.hbm [shape: f32[256,256], index: 0, kind: input, shape index: {}]
  %s1 = inlined_call_operand.hbm [shape: f32[1,256], index: 1, kind: input, shape index: {}]
  %s2 = inlined_call_operand.hbm [shape: f32[256,256], index: 2, kind: output, shape index: {}]
  %s3 = sld [smem:[#allocation0]]
  $region49: #{tpu_custom_call.1} parent=0
    _
  %s5 = ssub.s32 1, %s3
  %s6 = scalar_select 0, %s5, %s3
  $region1: #{tpu_custom_call.1} parent=0
    #allocation2 [shape = 'u8[262144]{0}', space=vmem, size = 0x40000, scoped, tag = 'input window, operand 0, single buffered']
    #allocation3 [shape = 's32[2]{0}', space=sflag, size = 0x8, scoped, tag = 'scoped memory for tpu_custom_call.1']
    #allocation4 [shape = 's32[2]{0}', space=sflag, size = 0x8, scoped, tag = 'scoped memory for tpu_custom_call.1']
    #allocation5 [shape = 'u8[1024]{0}', space=vmem, size = 0x400, scoped, tag = 'input window, operand 1, single buffered']
    #allocation6 [shape = 's32[1]{0}', space=sflag, size = 0x4, scoped, tag = 'scoped memory for tpu_custom_call.1']
    #allocation7 [shape = 'u8[262144]{0}', space=vmem, size = 0x40000, scoped, tag = 'output window, operand 0']
    %7 = vsyncpa [#allocation3], 0
    %8 = vsyncpa [#allocation6], 0
    %9 = vsyncpa [#allocation4], 0
    %s10 = scalar_lea.sflag [#allocation4], 1
    %11 = vsyncpa %s10, 0
    loop: start=0, step=1, limit=4
    $region2: #{tpu_custom_call.1} parent=1 // loop_pre_header
      _
    $region3: #{tpu_custom_call.1} parent=1 // loop_header
      %s13 = sphi 0, %s17
      %p14 = scmp.ge.s32.totalorder %s13, 4
      %s21 = sphi 0, %s21
      %s23 = sphi 0, %s21
      %s24 = sphi 0, %s23
      %s38 = sphi 0, %s24
      %s42 = sphi 0, %s42
      %s44 = sphi 0, %s42
      %s45 = sphi 0, %s44
      %s59 = sphi 0, %s45
      %s65 = sphi 0, %s67
      %s68 = sphi 0, %s65
      %s69 = sphi 0, %s68
      %s85 = sphi 0, %s69
    $region4: #{tpu_custom_call.1} parent=1 // loop_header_branch
      %16 = sbr.rel (%p14) target = $region8
    $region5: #{tpu_custom_call.1} parent=1 // loop_body
      %s18 = ssub.s32 %s13, 1
      %s19 = ssub.s32 %s13, 2
      %s20 = sadd.s32 %s13, 1
      %s22 = sadd.s32 %s21, 1
      %p25 = scmp.eq.s32.totalorder %s13, 1
      %p26 = scmp.ne.s32.totalorder %s21, %s23
      %p27 = scmp.eq.s32.totalorder %s13, 0
      %p28 = por %p26, %p27
      %p29 = scmp.ne.s32.totalorder %s21, %s23
      %p30 = scmp.eq.s32.totalorder %s18, 1
      %p31 = por %p29, %p30
      %p32 = scmp.ne.s32.totalorder %s23, %s24
      %p33 = scmp.eq.s32.totalorder %s18, 0
      %p34 = por %p32, %p33
      %p35 = scmp.ne.s32.totalorder %s23, %s24
      %p36 = scmp.eq.s32.totalorder %s19, 1
      %p37 = por %p35, %p36
      %p39 = scmp.ne.s32.totalorder %s24, %s38
      %p40 = scmp.eq.s32.totalorder %s19, 0
      %p41 = por %p39, %p40
      %s43 = sadd.s32 %s42, 1
      %p46 = scmp.eq.s32.totalorder %s13, 1
      %p47 = scmp.ne.s32.totalorder %s42, %s44
      %p48 = scmp.eq.s32.totalorder %s13, 0
      %p49 = por %p47, %p48
      %p50 = scmp.ne.s32.totalorder %s42, %s44
      %p51 = scmp.eq.s32.totalorder %s18, 1
      %p52 = por %p50, %p51
      %p53 = scmp.ne.s32.totalorder %s44, %s45
      %p54 = scmp.eq.s32.totalorder %s18, 0
      %p55 = por %p53, %p54
      %p56 = scmp.ne.s32.totalorder %s44, %s45
      %p57 = scmp.eq.s32.totalorder %s19, 1
      %p58 = por %p56, %p57
      %p60 = scmp.ne.s32.totalorder %s45, %s59
      %p61 = scmp.eq.s32.totalorder %s19, 0
      %p62 = por %p60, %p61
      %s63 = ssub.s32 %s13, %s20
      %p64 = scmp.eq.s32.totalorder %s63, 0
      %s66 = sadd.s32 %s65, 1
      %s67 = scalar_select %p64, %s65, %s66
      %p70 = pneg %p64
      %p71 = scmp.eq.s32.totalorder %s13, 1
      %p72 = por %p70, %p71
      %p73 = scmp.ne.s32.totalorder %s65, %s68
      %p74 = scmp.eq.s32.totalorder %s13, 0
      %p75 = por %p73, %p74
      %p76 = scmp.ne.s32.totalorder %s65, %s68
      %p77 = scmp.eq.s32.totalorder %s18, 1
      %p78 = por %p76, %p77
      %p79 = scmp.ne.s32.totalorder %s68, %s69
      %p80 = scmp.eq.s32.totalorder %s18, 0
      %p81 = por %p79, %p80
      %p82 = scmp.ne.s32.totalorder %s68, %s69
      %p83 = scmp.eq.s32.totalorder %s19, 1
      %p84 = por %p82, %p83
      %p86 = scmp.ne.s32.totalorder %s69, %s85
      %p87 = scmp.eq.s32.totalorder %s19, 0
      %p88 = por %p86, %p87
      %p89 = scmp.le.s32.totalorder 1, %s13
      %p90 = scmp.lt.s32.totalorder %s13, 3
      %p91 = pnand %p89, %p90
      %p92 = pneg %p91
      // Predicated region
      $region9: #{tpu_custom_call.1} parent=5 // pred_check
        _
      $region10: #{tpu_custom_call.1} parent=5 // pred_check_branch
        %94 = sbr.rel (%p91) target = $region12
      $region11: #{tpu_custom_call.1} parent=5 // pred_region
        %s95 = ssub.s32 %s13, 1
        // Predicated region
        $region13: #{tpu_custom_call.1} parent=11 // pred_check
          %p96 = pneg %p34
        $region14: #{tpu_custom_call.1} parent=11 // pred_check_branch
          %98 = sbr.rel (%p96) target = $region16
        $region15: #{tpu_custom_call.1} parent=11 // pred_region
          %s100 = ssub.s32 8192, 8192
          %101 = vsyncadd [#allocation3], %s100
          %s102 = sshll.u32 [#allocation2], 4
          %s103 = int_to_ptr.vmem [resolvable:$true] %s102
          %108 = dma.hbm_to_vmem [thread:$0]  %s0, 8192, %s103, [#allocation3], 256, 256, 16
        $region16: #{tpu_custom_call.1} parent=11 // pred_fallthru
          _
        // Predicated region
        $region17: #{tpu_custom_call.1} parent=11 // pred_check
          %p109 = pneg %p55
        $region18: #{tpu_custom_call.1} parent=11 // pred_check_branch
          %111 = sbr.rel (%p109) target = $region20
        $region19: #{tpu_custom_call.1} parent=11 // pred_region
          %s113 = ssub.s32 32, 32
          %114 = vsyncadd [#allocation6], %s113
          %s116 = sshll.u32 [#allocation5], 4
          %s117 = int_to_ptr.vmem [resolvable:$true] %s116
          %119 = dma.hbm_to_vmem [thread:$0]  %s1, 32, %s117, [#allocation6]
        $region20: #{tpu_custom_call.1} parent=11 // pred_fallthru
          _
      $region12: #{tpu_custom_call.1} parent=5 // pred_fallthru
        _
      %p120 = scmp.lt.s32.totalorder %s13, 2
      // Predicated region
      $region21: #{tpu_custom_call.1} parent=5 // pred_check
        %p121 = pneg %p120
      $region22: #{tpu_custom_call.1} parent=5 // pred_check_branch
        %123 = sbr.rel (%p121) target = $region24
      $region23: #{tpu_custom_call.1} parent=5 // pred_region
        _
      $region24: #{tpu_custom_call.1} parent=5 // pred_fallthru
        _
      %p124 = scmp.le.s32.totalorder 1, %s13
      %p125 = scmp.lt.s32.totalorder %s13, 3
      %p126 = pnand %p124, %p125
      %p127 = pneg %p126
      // Predicated region
      $region25: #{tpu_custom_call.1} parent=5 // pred_check
        _
      $region26: #{tpu_custom_call.1} parent=5 // pred_check_branch
        %129 = sbr.rel (%p126) target = $region28
      $region27: #{tpu_custom_call.1} parent=5 // pred_region
        %s130 = ssub.s32 %s13, 1
        // Predicated region
        $region29: #{tpu_custom_call.1} parent=27 // pred_check
          %p131 = pneg %p34
        $region30: #{tpu_custom_call.1} parent=27 // pred_check_branch
          %133 = sbr.rel (%p131) target = $region32
        $region31: #{tpu_custom_call.1} parent=27 // pred_region
          %134 = dma.done [#allocation3], 8192
        $region32: #{tpu_custom_call.1} parent=27 // pred_fallthru
          _
        // Predicated region
        $region33: #{tpu_custom_call.1} parent=27 // pred_check
          %p135 = pneg %p55
        $region34: #{tpu_custom_call.1} parent=27 // pred_check_branch
          %137 = sbr.rel (%p135) target = $region36
        $region35: #{tpu_custom_call.1} parent=27 // pred_region
          %138 = dma.done [#allocation6], 32
        $region36: #{tpu_custom_call.1} parent=27 // pred_fallthru
          _
        %p139 = pneg %p34
        %p140 = pneg %p31
        %p141 = pneg %p55
        %p142 = pneg %p52
        %p143 = pneg %p81
        %p144 = pneg %p78
        %s145 = sand.u32 %s68, 1
        %s146 = scalar_lea.sflag [#allocation4], %s145
        %s147 = sand.u32 %s68, 1
        %s148 = smul.addr %s147, 256
        %s149 = scalar_lea.vmem [#allocation7], %s148
        %s150 = smul.u32 16, %s18
        %s151 = smul.u32 %s18, 128
        %v152 = vld [vmem:[#allocation2] sm:$0xff]
        %v153 = vld [vmem:[#allocation2 + $0x8] sm:$0xff]
        %v154 = vld [vmem:[#allocation2 + $0x10] sm:$0xff]
        %v155 = vld [vmem:[#allocation2 + $0x18] sm:$0xff]
        %v156 = vld [vmem:[#allocation2 + $0x20] sm:$0xff]
        %v157 = vld [vmem:[#allocation2 + $0x28] sm:$0xff]
        %v158 = vld [vmem:[#allocation2 + $0x30] sm:$0xff]
        %v159 = vld [vmem:[#allocation2 + $0x38] sm:$0xff]
        %v160 = vld [vmem:[#allocation2 + $0x40] sm:$0xff]
        %v161 = vld [vmem:[#allocation2 + $0x48] sm:$0xff]
        %v162 = vld [vmem:[#allocation2 + $0x50] sm:$0xff]
        %v163 = vld [vmem:[#allocation2 + $0x58] sm:$0xff]
        %v164 = vld [vmem:[#allocation2 + $0x60] sm:$0xff]
        %v165 = vld [vmem:[#allocation2 + $0x68] sm:$0xff]
        %v166 = vld [vmem:[#allocation2 + $0x70] sm:$0xff]
        %v167 = vld [vmem:[#allocation2 + $0x78] sm:$0xff]
        %v168 = vld [vmem:[#allocation2 + $0x80] sm:$0xff]
        %v169 = vld [vmem:[#allocation2 + $0x88] sm:$0xff]
        %v170 = vld [vmem:[#allocation2 + $0x90] sm:$0xff]
        %v171 = vld [vmem:[#allocation2 + $0x98] sm:$0xff]
        %v172 = vld [vmem:[#allocation2 + $0xa0] sm:$0xff]
        %v173 = vld [vmem:[#allocation2 + $0xa8] sm:$0xff]
        %v174 = vld [vmem:[#allocation2 + $0xb0] sm:$0xff]
        %v175 = vld [vmem:[#allocation2 + $0xb8] sm:$0xff]
        %v176 = vld [vmem:[#allocation2 + $0xc0] sm:$0xff]
        %v177 = vld [vmem:[#allocation2 + $0xc8] sm:$0xff]
        %v178 = vld [vmem:[#allocation2 + $0xd0] sm:$0xff]
        %v179 = vld [vmem:[#allocation2 + $0xd8] sm:$0xff]
        %v180 = vld [vmem:[#allocation2 + $0xe0] sm:$0xff]
        %v181 = vld [vmem:[#allocation2 + $0xe8] sm:$0xff]
        %v182 = vld [vmem:[#allocation2 + $0xf0] sm:$0xff]
        %v183 = vld [vmem:[#allocation2 + $0xf8] sm:$0xff]
        %v184 = vld [vmem:[#allocation2 + $0x100] sm:$0xff]
        %v185 = vld [vmem:[#allocation2 + $0x108] sm:$0xff]
        %v186 = vld [vmem:[#allocation2 + $0x110] sm:$0xff]
        %v187 = vld [vmem:[#allocation2 + $0x118] sm:$0xff]
        %v188 = vld [vmem:[#allocation2 + $0x120] sm:$0xff]
        %v189 = vld [vmem:[#allocation2 + $0x128] sm:$0xff]
        %v190 = vld [vmem:[#allocation2 + $0x130] sm:$0xff]
        %v191 = vld [vmem:[#allocation2 + $0x138] sm:$0xff]
        %v192 = vld [vmem:[#allocation2 + $0x140] sm:$0xff]
        %v193 = vld [vmem:[#allocation2 + $0x148] sm:$0xff]
        %v194 = vld [vmem:[#allocation2 + $0x150] sm:$0xff]
        %v195 = vld [vmem:[#allocation2 + $0x158] sm:$0xff]
        %v196 = vld [vmem:[#allocation2 + $0x160] sm:$0xff]
        %v197 = vld [vmem:[#allocation2 + $0x168] sm:$0xff]
        %v198 = vld [vmem:[#allocation2 + $0x170] sm:$0xff]
        %v199 = vld [vmem:[#allocation2 + $0x178] sm:$0xff]
        %v200 = vld [vmem:[#allocation2 + $0x180] sm:$0xff]
        %v201 = vld [vmem:[#allocation2 + $0x188] sm:$0xff]
        %v202 = vld [vmem:[#allocation2 + $0x190] sm:$0xff]
        %v203 = vld [vmem:[#allocation2 + $0x198] sm:$0xff]
        %v204 = vld [vmem:[#allocation2 + $0x1a0] sm:$0xff]
        %v205 = vld [vmem:[#allocation2 + $0x1a8] sm:$0xff]
        %v206 = vld [vmem:[#allocation2 + $0x1b0] sm:$0xff]
        %v207 = vld [vmem:[#allocation2 + $0x1b8] sm:$0xff]
        %v208 = vld [vmem:[#allocation2 + $0x1c0] sm:$0xff]
        %v209 = vld [vmem:[#allocation2 + $0x1c8] sm:$0xff]
        %v210 = vld [vmem:[#allocation2 + $0x1d0] sm:$0xff]
        %v211 = vld [vmem:[#allocation2 + $0x1d8] sm:$0xff]
        %v212 = vld [vmem:[#allocation2 + $0x1e0] sm:$0xff]
        %v213 = vld [vmem:[#allocation2 + $0x1e8] sm:$0xff]
        %v214 = vld [vmem:[#allocation2 + $0x1f0] sm:$0xff]
        %v215 = vld [vmem:[#allocation2 + $0x1f8] sm:$0xff]
        %s216 = sshra.s32 %s151, 3
        %s217 = sand.u32 %s151, 7
        %s218 = smul.u32 %s216, 2
        %s219 = smul.addr %s218, 8
        %s220 = scalar_lea.vmem [#allocation2], %s219
        %v221 = vld [vmem:[%s220] sm:$0xff]
        %v222 = vld [vmem:[%s220 + $0x8] sm:$0xff]
        %v223 = vld [vmem:[%s220 + $0x10] sm:$0xff]
        %v224 = vld [vmem:[%s220 + $0x18] sm:$0xff]
        %v225 = vld [vmem:[%s220 + $0x20] sm:$0xff]
        %v226 = vld [vmem:[%s220 + $0x28] sm:$0xff]
        %v227 = vld [vmem:[%s220 + $0x30] sm:$0xff]
        %v228 = vld [vmem:[%s220 + $0x38] sm:$0xff]
        %v229 = vld [vmem:[%s220 + $0x40] sm:$0xff]
        %v230 = vld [vmem:[%s220 + $0x48] sm:$0xff]
        %v231 = vld [vmem:[%s220 + $0x50] sm:$0xff]
        %v232 = vld [vmem:[%s220 + $0x58] sm:$0xff]
        %v233 = vld [vmem:[%s220 + $0x60] sm:$0xff]
        %v234 = vld [vmem:[%s220 + $0x68] sm:$0xff]
        %v235 = vld [vmem:[%s220 + $0x70] sm:$0xff]
        %v236 = vld [vmem:[%s220 + $0x78] sm:$0xff]
        %v237 = vld [vmem:[%s220 + $0x80] sm:$0xff]
        %v238 = vld [vmem:[%s220 + $0x88] sm:$0xff]
        %v239 = vld [vmem:[%s220 + $0x90] sm:$0xff]
        %v240 = vld [vmem:[%s220 + $0x98] sm:$0xff]
        %v241 = vld [vmem:[%s220 + $0xa0] sm:$0xff]
        %v242 = vld [vmem:[%s220 + $0xa8] sm:$0xff]
        %v243 = vld [vmem:[%s220 + $0xb0] sm:$0xff]
        %v244 = vld [vmem:[%s220 + $0xb8] sm:$0xff]
        %v245 = vld [vmem:[%s220 + $0xc0] sm:$0xff]
        %v246 = vld [vmem:[%s220 + $0xc8] sm:$0xff]
        %v247 = vld [vmem:[%s220 + $0xd0] sm:$0xff]
        %v248 = vld [vmem:[%s220 + $0xd8] sm:$0xff]
        %v249 = vld [vmem:[%s220 + $0xe0] sm:$0xff]
        %v250 = vld [vmem:[%s220 + $0xe8] sm:$0xff]
        %v251 = vld [vmem:[%s220 + $0xf0] sm:$0xff]
        %v252 = vld [vmem:[%s220 + $0xf8] sm:$0xff]
        %253 = vst [vmem:[%s149] sm:$0xff] %v221
        %254 = vst [vmem:[%s149 + $0x8] sm:$0xff] %v222
        %255 = vst [vmem:[%s149 + $0x10] sm:$0xff] %v223
        %256 = vst [vmem:[%s149 + $0x18] sm:$0xff] %v224
        %257 = vst [vmem:[%s149 + $0x20] sm:$0xff] %v225
        %258 = vst [vmem:[%s149 + $0x28] sm:$0xff] %v226
        %259 = vst [vmem:[%s149 + $0x30] sm:$0xff] %v227
        %260 = vst [vmem:[%s149 + $0x38] sm:$0xff] %v228
        %261 = vst [vmem:[%s149 + $0x40] sm:$0xff] %v229
        %262 = vst [vmem:[%s149 + $0x48] sm:$0xff] %v230
        %263 = vst [vmem:[%s149 + $0x50] sm:$0xff] %v231
        %264 = vst [vmem:[%s149 + $0x58] sm:$0xff] %v232
        %265 = vst [vmem:[%s149 + $0x60] sm:$0xff] %v233
        %266 = vst [vmem:[%s149 + $0x68] sm:$0xff] %v234
        %267 = vst [vmem:[%s149 + $0x70] sm:$0xff] %v235
        %268 = vst [vmem:[%s149 + $0x78] sm:$0xff] %v236
        %269 = vst [vmem:[%s149 + $0x80] sm:$0xff] %v237
        %270 = vst [vmem:[%s149 + $0x88] sm:$0xff] %v238
        %271 = vst [vmem:[%s149 + $0x90] sm:$0xff] %v239
        %272 = vst [vmem:[%s149 + $0x98] sm:$0xff] %v240
        %273 = vst [vmem:[%s149 + $0xa0] sm:$0xff] %v241
        %274 = vst [vmem:[%s149 + $0xa8] sm:$0xff] %v242
        %275 = vst [vmem:[%s149 + $0xb0] sm:$0xff] %v243
        %276 = vst [vmem:[%s149 + $0xb8] sm:$0xff] %v244
        %277 = vst [vmem:[%s149 + $0xc0] sm:$0xff] %v245
        %278 = vst [vmem:[%s149 + $0xc8] sm:$0xff] %v246
        %279 = vst [vmem:[%s149 + $0xd0] sm:$0xff] %v247
        %280 = vst [vmem:[%s149 + $0xd8] sm:$0xff] %v248
        %281 = vst [vmem:[%s149 + $0xe0] sm:$0xff] %v249
        %282 = vst [vmem:[%s149 + $0xe8] sm:$0xff] %v250
        %283 = vst [vmem:[%s149 + $0xf0] sm:$0xff] %v251
        %284 = vst [vmem:[%s149 + $0xf8] sm:$0xff] %v252
        %285 = vmatprep.subr.mxu0 %v183
        %286 = vmatpush1.msra.mxu0 %v182
        %287 = vmatprep.subr.mxu0 %v181
        %288 = vmatpush1.msra.mxu0 %v180
        %289 = vmatprep.subr.mxu0 %v179
        %290 = vmatpush1.msra.mxu0 %v178
        %291 = vmatprep.subr.mxu0 %v177
        %292 = vmatpush1.msra.mxu0 %v176
        %293 = vmatprep.subr.mxu0 %v175
        %294 = vmatpush1.msra.mxu0 %v174
        %295 = vmatprep.subr.mxu0 %v173
        %296 = vmatpush1.msra.mxu0 %v172
        %297 = vmatprep.subr.mxu0 %v171
        %298 = vmatpush1.msra.mxu0 %v170
        %299 = vmatprep.subr.mxu0 %v169
        %300 = vmatpush1.msra.mxu0 %v168
        %301 = vmatprep.subr.mxu0 %v167
        %302 = vmatpush1.msra.mxu0 %v166
        %303 = vmatprep.subr.mxu0 %v165
        %304 = vmatpush1.msra.mxu0 %v164
        %305 = vmatprep.subr.mxu0 %v163
        %306 = vmatpush1.msra.mxu0 %v162
        %307 = vmatprep.subr.mxu0 %v161
        %308 = vmatpush1.msra.mxu0 %v160
        %309 = vmatprep.subr.mxu0 %v159
        %310 = vmatpush1.msra.mxu0 %v158
        %311 = vmatprep.subr.mxu0 %v157
        %312 = vmatpush1.msra.mxu0 %v156
        %313 = vmatprep.subr.mxu0 %v155
        %314 = vmatpush1.msra.mxu0 %v154
        %315 = vmatprep.subr.mxu0 %v153
        %316 = vmatpush1.msra.mxu0 %v152
        %317 = vmatprep.subr.mxu0 %v215
        %318 = vmatpush2.msra.mxu0 %v214
        %319 = vmatprep.subr.mxu0 %v213
        %320 = vmatpush2.msra.mxu0 %v212
        %321 = vmatprep.subr.mxu0 %v211
        %322 = vmatpush2.msra.mxu0 %v210
        %323 = vmatprep.subr.mxu0 %v209
        %324 = vmatpush2.msra.mxu0 %v208
        %325 = vmatprep.subr.mxu0 %v207
        %326 = vmatpush2.msra.mxu0 %v206
        %327 = vmatprep.subr.mxu0 %v205
        %328 = vmatpush2.msra.mxu0 %v204
        %329 = vmatprep.subr.mxu0 %v203
        %330 = vmatpush2.msra.mxu0 %v202
        %331 = vmatprep.subr.mxu0 %v201
        %332 = vmatpush2.msra.mxu0 %v200
        %333 = vmatprep.subr.mxu0 %v199
        %334 = vmatpush2.msra.mxu0 %v198
        %335 = vmatprep.subr.mxu0 %v197
        %336 = vmatpush2.msra.mxu0 %v196
        %337 = vmatprep.subr.mxu0 %v195
        %338 = vmatpush2.msra.mxu0 %v194
        %339 = vmatprep.subr.mxu0 %v193
        %340 = vmatpush2.msra.mxu0 %v192
        %341 = vmatprep.subr.mxu0 %v191
        %342 = vmatpush2.msra.mxu0 %v190
        %343 = vmatprep.subr.mxu0 %v189
        %344 = vmatpush2.msra.mxu0 %v188
        %345 = vmatprep.subr.mxu0 %v187
        %346 = vmatpush2.msra.mxu0 %v186
        %347 = vmatprep.subr.mxu0 %v185
        %348 = vmatpush2.msra.mxu0 %v184
        %349 = vmatprep.mubr.f32.mxu0 %v222
        %350 = vmatmul.mubr.f32.gmra.mxu0 %v221
        %v351 = vpop.f32.mrf.mxu0
        %v352 = vadd.f32 0.0, %v351
        %v353 = vpop.f32.mrf.mxu0
        %v354 = vadd.f32 0.0, %v353
        %355 = vmatprep.mubr.f32.mxu0 %v224
        %356 = vmatmul.mubr.f32.gmra.mxu0 %v223
        %v357 = vpop.f32.mrf.mxu0
        %v358 = vadd.f32 0.0, %v357
        %v359 = vpop.f32.mrf.mxu0
        %v360 = vadd.f32 0.0, %v359
        %361 = vmatprep.mubr.f32.mxu0 %v226
        %362 = vmatmul.mubr.f32.gmra.mxu0 %v225
        %v363 = vpop.f32.mrf.mxu0
        %v364 = vadd.f32 0.0, %v363
        %v365 = vpop.f32.mrf.mxu0
        %v366 = vadd.f32 0.0, %v365
        %367 = vmatprep.mubr.f32.mxu0 %v228
        %368 = vmatmul.mubr.f32.gmra.mxu0 %v227
        %v369 = vpop.f32.mrf.mxu0
        %v370 = vadd.f32 0.0, %v369
        %v371 = vpop.f32.mrf.mxu0
        %v372 = vadd.f32 0.0, %v371
        %373 = vmatprep.mubr.f32.mxu0 %v230
        %374 = vmatmul.mubr.f32.gmra.mxu0 %v229
        %v375 = vpop.f32.mrf.mxu0
        %v376 = vadd.f32 0.0, %v375
        %v377 = vpop.f32.mrf.mxu0
        %v378 = vadd.f32 0.0, %v377
        %379 = vmatprep.mubr.f32.mxu0 %v232
        %380 = vmatmul.mubr.f32.gmra.mxu0 %v231
        %v381 = vpop.f32.mrf.mxu0
        %v382 = vadd.f32 0.0, %v381
        %v383 = vpop.f32.mrf.mxu0
        %v384 = vadd.f32 0.0, %v383
        %385 = vmatprep.mubr.f32.mxu0 %v234
        %386 = vmatmul.mubr.f32.gmra.mxu0 %v233
        %v387 = vpop.f32.mrf.mxu0
        %v388 = vadd.f32 0.0, %v387
        %v389 = vpop.f32.mrf.mxu0
        %v390 = vadd.f32 0.0, %v389
        %391 = vmatprep.mubr.f32.mxu0 %v236
        %392 = vmatmul.mubr.f32.gmra.mxu0 %v235
        %v393 = vpop.f32.mrf.mxu0
        %v394 = vadd.f32 0.0, %v393
        %v395 = vpop.f32.mrf.mxu0
        %v396 = vadd.f32 0.0, %v395
        %397 = vmatprep.mubr.f32.mxu0 %v238
        %398 = vmatmul.mubr.f32.gmra.mxu0 %v237
        %v399 = vpop.f32.mrf.mxu0
        %v400 = vadd.f32 0.0, %v399
        %v401 = vpop.f32.mrf.mxu0
        %v402 = vadd.f32 0.0, %v401
        %403 = vmatprep.mubr.f32.mxu0 %v240
        %404 = vmatmul.mubr.f32.gmra.mxu0 %v239
        %v405 = vpop.f32.mrf.mxu0
        %v406 = vadd.f32 0.0, %v405
        %v407 = vpop.f32.mrf.mxu0
        %v408 = vadd.f32 0.0, %v407
        %409 = vmatprep.mubr.f32.mxu0 %v242
        %410 = vmatmul.mubr.f32.gmra.mxu0 %v241
        %v411 = vpop.f32.mrf.mxu0
        %v412 = vadd.f32 0.0, %v411
        %v413 = vpop.f32.mrf.mxu0
        %v414 = vadd.f32 0.0, %v413
        %415 = vmatprep.mubr.f32.mxu0 %v244
        %416 = vmatmul.mubr.f32.gmra.mxu0 %v243
        %v417 = vpop.f32.mrf.mxu0
        %v418 = vadd.f32 0.0, %v417
        %v419 = vpop.f32.mrf.mxu0
        %v420 = vadd.f32 0.0, %v419
        %421 = vmatprep.mubr.f32.mxu0 %v246
        %422 = vmatmul.mubr.f32.gmra.mxu0 %v245
        %v423 = vpop.f32.mrf.mxu0
        %v424 = vadd.f32 0.0, %v423
        %v425 = vpop.f32.mrf.mxu0
        %v426 = vadd.f32 0.0, %v425
        %427 = vmatprep.mubr.f32.mxu0 %v248
        %428 = vmatmul.mubr.f32.gmra.mxu0 %v247
        %v429 = vpop.f32.mrf.mxu0
        %v430 = vadd.f32 0.0, %v429
        %v431 = vpop.f32.mrf.mxu0
        %v432 = vadd.f32 0.0, %v431
        %433 = vmatprep.mubr.f32.mxu0 %v250
        %434 = vmatmul.mubr.f32.gmra.mxu0 %v249
        %v435 = vpop.f32.mrf.mxu0
        %v436 = vadd.f32 0.0, %v435
        %v437 = vpop.f32.mrf.mxu0
        %v438 = vadd.f32 0.0, %v437
        %439 = vmatprep.mubr.f32.mxu0 %v252
        %440 = vmatmul.mubr.f32.gmra.mxu0 %v251
        %v441 = vpop.f32.mrf.mxu0
        %v442 = vadd.f32 0.0, %v441
        %v443 = vpop.f32.mrf.mxu0
        %v444 = vadd.f32 0.0, %v443
        %445 = vdwg.mxu0
        %v446 = vld [vmem:[%s149] sm:$0xff]
        %v447 = vld [vmem:[%s149 + $0x8] sm:$0xff]
        %v448 = vld [vmem:[%s149 + $0x10] sm:$0xff]
        %v449 = vld [vmem:[%s149 + $0x18] sm:$0xff]
        %v450 = vld [vmem:[%s149 + $0x20] sm:$0xff]
        %v451 = vld [vmem:[%s149 + $0x28] sm:$0xff]
        %v452 = vld [vmem:[%s149 + $0x30] sm:$0xff]
        %v453 = vld [vmem:[%s149 + $0x38] sm:$0xff]
        %v454 = vld [vmem:[%s149 + $0x40] sm:$0xff]
        %v455 = vld [vmem:[%s149 + $0x48] sm:$0xff]
        %v456 = vld [vmem:[%s149 + $0x50] sm:$0xff]
        %v457 = vld [vmem:[%s149 + $0x58] sm:$0xff]
        %v458 = vld [vmem:[%s149 + $0x60] sm:$0xff]
        %v459 = vld [vmem:[%s149 + $0x68] sm:$0xff]
        %v460 = vld [vmem:[%s149 + $0x70] sm:$0xff]
        %v461 = vld [vmem:[%s149 + $0x78] sm:$0xff]
        %v462 = vld [vmem:[%s149 + $0x80] sm:$0xff]
        %v463 = vld [vmem:[%s149 + $0x88] sm:$0xff]
        %v464 = vld [vmem:[%s149 + $0x90] sm:$0xff]
        %v465 = vld [vmem:[%s149 + $0x98] sm:$0xff]
        %v466 = vld [vmem:[%s149 + $0xa0] sm:$0xff]
        %v467 = vld [vmem:[%s149 + $0xa8] sm:$0xff]
        %v468 = vld [vmem:[%s149 + $0xb0] sm:$0xff]
        %v469 = vld [vmem:[%s149 + $0xb8] sm:$0xff]
        %v470 = vld [vmem:[%s149 + $0xc0] sm:$0xff]
        %v471 = vld [vmem:[%s149 + $0xc8] sm:$0xff]
        %v472 = vld [vmem:[%s149 + $0xd0] sm:$0xff]
        %v473 = vld [vmem:[%s149 + $0xd8] sm:$0xff]
        %v474 = vld [vmem:[%s149 + $0xe0] sm:$0xff]
        %v475 = vld [vmem:[%s149 + $0xe8] sm:$0xff]
        %v476 = vld [vmem:[%s149 + $0xf0] sm:$0xff]
        %v477 = vld [vmem:[%s149 + $0xf8] sm:$0xff]
        %v478 = vadd.f32 %v446, %v352
        %v479 = vadd.f32 %v447, %v354
        %v480 = vadd.f32 %v448, %v358
        %v481 = vadd.f32 %v449, %v360
        %v482 = vadd.f32 %v450, %v364
        %v483 = vadd.f32 %v451, %v366
        %v484 = vadd.f32 %v452, %v370
        %v485 = vadd.f32 %v453, %v372
        %v486 = vadd.f32 %v454, %v376
        %v487 = vadd.f32 %v455, %v378
        %v488 = vadd.f32 %v456, %v382
        %v489 = vadd.f32 %v457, %v384
        %v490 = vadd.f32 %v458, %v388
        %v491 = vadd.f32 %v459, %v390
        %v492 = vadd.f32 %v460, %v394
        %v493 = vadd.f32 %v461, %v396
        %v494 = vadd.f32 %v462, %v400
        %v495 = vadd.f32 %v463, %v402
        %v496 = vadd.f32 %v464, %v406
        %v497 = vadd.f32 %v465, %v408
        %v498 = vadd.f32 %v466, %v412
        %v499 = vadd.f32 %v467, %v414
        %v500 = vadd.f32 %v468, %v418
        %v501 = vadd.f32 %v469, %v420
        %v502 = vadd.f32 %v470, %v424
        %v503 = vadd.f32 %v471, %v426
        %v504 = vadd.f32 %v472, %v430
        %v505 = vadd.f32 %v473, %v432
        %v506 = vadd.f32 %v474, %v436
        %v507 = vadd.f32 %v475, %v438
        %v508 = vadd.f32 %v476, %v442
        %v509 = vadd.f32 %v477, %v444
        %510 = vst [vmem:[%s149] sm:$0xff] %v478
        %511 = vst [vmem:[%s149 + $0x8] sm:$0xff] %v479
        %512 = vst [vmem:[%s149 + $0x10] sm:$0xff] %v480
        %513 = vst [vmem:[%s149 + $0x18] sm:$0xff] %v481
        %514 = vst [vmem:[%s149 + $0x20] sm:$0xff] %v482
        %515 = vst [vmem:[%s149 + $0x28] sm:$0xff] %v483
        %516 = vst [vmem:[%s149 + $0x30] sm:$0xff] %v484
        %517 = vst [vmem:[%s149 + $0x38] sm:$0xff] %v485
        %518 = vst [vmem:[%s149 + $0x40] sm:$0xff] %v486
        %519 = vst [vmem:[%s149 + $0x48] sm:$0xff] %v487
        %520 = vst [vmem:[%s149 + $0x50] sm:$0xff] %v488
        %521 = vst [vmem:[%s149 + $0x58] sm:$0xff] %v489
        %522 = vst [vmem:[%s149 + $0x60] sm:$0xff] %v490
        %523 = vst [vmem:[%s149 + $0x68] sm:$0xff] %v491
        %524 = vst [vmem:[%s149 + $0x70] sm:$0xff] %v492
        %525 = vst [vmem:[%s149 + $0x78] sm:$0xff] %v493
        %526 = vst [vmem:[%s149 + $0x80] sm:$0xff] %v494
        %527 = vst [vmem:[%s149 + $0x88] sm:$0xff] %v495
        %528 = vst [vmem:[%s149 + $0x90] sm:$0xff] %v496
        %529 = vst [vmem:[%s149 + $0x98] sm:$0xff] %v497
        %530 = vst [vmem:[%s149 + $0xa0] sm:$0xff] %v498
        %531 = vst [vmem:[%s149 + $0xa8] sm:$0xff] %v499
        %532 = vst [vmem:[%s149 + $0xb0] sm:$0xff] %v500
        %533 = vst [vmem:[%s149 + $0xb8] sm:$0xff] %v501
        %534 = vst [vmem:[%s149 + $0xc0] sm:$0xff] %v502
        %535 = vst [vmem:[%s149 + $0xc8] sm:$0xff] %v503
        %536 = vst [vmem:[%s149 + $0xd0] sm:$0xff] %v504
        %537 = vst [vmem:[%s149 + $0xd8] sm:$0xff] %v505
        %538 = vst [vmem:[%s149 + $0xe0] sm:$0xff] %v506
        %539 = vst [vmem:[%s149 + $0xe8] sm:$0xff] %v507
        %540 = vst [vmem:[%s149 + $0xf0] sm:$0xff] %v508
        %541 = vst [vmem:[%s149 + $0xf8] sm:$0xff] %v509
        %542 = vmatprep.subr.mxu0 %v183
        %543 = vmatpush1.msra.mxu0 %v182
        %544 = vmatprep.subr.mxu0 %v181
        %545 = vmatpush1.msra.mxu0 %v180
        %546 = vmatprep.subr.mxu0 %v179
        %547 = vmatpush1.msra.mxu0 %v178
        %548 = vmatprep.subr.mxu0 %v177
        %549 = vmatpush1.msra.mxu0 %v176
        %550 = vmatprep.subr.mxu0 %v175
        %551 = vmatpush1.msra.mxu0 %v174
        %552 = vmatprep.subr.mxu0 %v173
        %553 = vmatpush1.msra.mxu0 %v172
        %554 = vmatprep.subr.mxu0 %v171
        %555 = vmatpush1.msra.mxu0 %v170
        %556 = vmatprep.subr.mxu0 %v169
        %557 = vmatpush1.msra.mxu0 %v168
        %558 = vmatprep.subr.mxu0 %v167
        %559 = vmatpush1.msra.mxu0 %v166
        %560 = vmatprep.subr.mxu0 %v165
        %561 = vmatpush1.msra.mxu0 %v164
        %562 = vmatprep.subr.mxu0 %v163
        %563 = vmatpush1.msra.mxu0 %v162
        %564 = vmatprep.subr.mxu0 %v161
        %565 = vmatpush1.msra.mxu0 %v160
        %566 = vmatprep.subr.mxu0 %v159
        %567 = vmatpush1.msra.mxu0 %v158
        %568 = vmatprep.subr.mxu0 %v157
        %569 = vmatpush1.msra.mxu0 %v156
        %570 = vmatprep.subr.mxu0 %v155
        %571 = vmatpush1.msra.mxu0 %v154
        %572 = vmatprep.subr.mxu0 %v153
        %573 = vmatpush1.msra.mxu0 %v152
        %574 = vmatprep.subr.mxu0 %v215
        %575 = vmatpush2.msra.mxu0 %v214
        %576 = vmatprep.subr.mxu0 %v213
        %577 = vmatpush2.msra.mxu0 %v212
        %578 = vmatprep.subr.mxu0 %v211
        %579 = vmatpush2.msra.mxu0 %v210
        %580 = vmatprep.subr.mxu0 %v209
        %581 = vmatpush2.msra.mxu0 %v208
        %582 = vmatprep.subr.mxu0 %v207
        %583 = vmatpush2.msra.mxu0 %v206
        %584 = vmatprep.subr.mxu0 %v205
        %585 = vmatpush2.msra.mxu0 %v204
        %586 = vmatprep.subr.mxu0 %v203
        %587 = vmatpush2.msra.mxu0 %v202
        %588 = vmatprep.subr.mxu0 %v201
        %589 = vmatpush2.msra.mxu0 %v200
        %590 = vmatprep.subr.mxu0 %v199
        %591 = vmatpush2.msra.mxu0 %v198
        %592 = vmatprep.subr.mxu0 %v197
        %593 = vmatpush2.msra.mxu0 %v196
        %594 = vmatprep.subr.mxu0 %v195
        %595 = vmatpush2.msra.mxu0 %v194
        %596 = vmatprep.subr.mxu0 %v193
        %597 = vmatpush2.msra.mxu0 %v192
        %598 = vmatprep.subr.mxu0 %v191
        %599 = vmatpush2.msra.mxu0 %v190
        %600 = vmatprep.subr.mxu0 %v189
        %601 = vmatpush2.msra.mxu0 %v188
        %602 = vmatprep.subr.mxu0 %v187
        %603 = vmatpush2.msra.mxu0 %v186
        %604 = vmatprep.subr.mxu0 %v185
        %605 = vmatpush2.msra.mxu0 %v184
        %606 = vmatprep.mubr.f32.mxu0 %v354
        %607 = vmatmul.mubr.f32.gmra.mxu0 %v352
        %v608 = vpop.f32.mrf.mxu0
        %v609 = vadd.f32 0.0, %v608
        %v610 = vpop.f32.mrf.mxu0
        %v611 = vadd.f32 0.0, %v610
        %612 = vmatprep.mubr.f32.mxu0 %v360
        %613 = vmatmul.mubr.f32.gmra.mxu0 %v358
        %v614 = vpop.f32.mrf.mxu0
        %v615 = vadd.f32 0.0, %v614
        %v616 = vpop.f32.mrf.mxu0
        %v617 = vadd.f32 0.0, %v616
        %618 = vmatprep.mubr.f32.mxu0 %v366
        %619 = vmatmul.mubr.f32.gmra.mxu0 %v364
        %v620 = vpop.f32.mrf.mxu0
        %v621 = vadd.f32 0.0, %v620
        %v622 = vpop.f32.mrf.mxu0
        %v623 = vadd.f32 0.0, %v622
        %624 = vmatprep.mubr.f32.mxu0 %v372
        %625 = vmatmul.mubr.f32.gmra.mxu0 %v370
        %v626 = vpop.f32.mrf.mxu0
        %v627 = vadd.f32 0.0, %v626
        %v628 = vpop.f32.mrf.mxu0
        %v629 = vadd.f32 0.0, %v628
        %630 = vmatprep.mubr.f32.mxu0 %v378
        %631 = vmatmul.mubr.f32.gmra.mxu0 %v376
        %v632 = vpop.f32.mrf.mxu0
        %v633 = vadd.f32 0.0, %v632
        %v634 = vpop.f32.mrf.mxu0
        %v635 = vadd.f32 0.0, %v634
        %636 = vmatprep.mubr.f32.mxu0 %v384
        %637 = vmatmul.mubr.f32.gmra.mxu0 %v382
        %v638 = vpop.f32.mrf.mxu0
        %v639 = vadd.f32 0.0, %v638
        %v640 = vpop.f32.mrf.mxu0
        %v641 = vadd.f32 0.0, %v640
        %642 = vmatprep.mubr.f32.mxu0 %v390
        %643 = vmatmul.mubr.f32.gmra.mxu0 %v388
        %v644 = vpop.f32.mrf.mxu0
        %v645 = vadd.f32 0.0, %v644
        %v646 = vpop.f32.mrf.mxu0
        %v647 = vadd.f32 0.0, %v646
        %648 = vmatprep.mubr.f32.mxu0 %v396
        %649 = vmatmul.mubr.f32.gmra.mxu0 %v394
        %v650 = vpop.f32.mrf.mxu0
        %v651 = vadd.f32 0.0, %v650
        %v652 = vpop.f32.mrf.mxu0
        %v653 = vadd.f32 0.0, %v652
        %654 = vmatprep.mubr.f32.mxu0 %v402
        %655 = vmatmul.mubr.f32.gmra.mxu0 %v400
        %v656 = vpop.f32.mrf.mxu0
        %v657 = vadd.f32 0.0, %v656
        %v658 = vpop.f32.mrf.mxu0
        %v659 = vadd.f32 0.0, %v658
        %660 = vmatprep.mubr.f32.mxu0 %v408
        %661 = vmatmul.mubr.f32.gmra.mxu0 %v406
        %v662 = vpop.f32.mrf.mxu0
        %v663 = vadd.f32 0.0, %v662
        %v664 = vpop.f32.mrf.mxu0
        %v665 = vadd.f32 0.0, %v664
        %666 = vmatprep.mubr.f32.mxu0 %v414
        %667 = vmatmul.mubr.f32.gmra.mxu0 %v412
        %v668 = vpop.f32.mrf.mxu0
        %v669 = vadd.f32 0.0, %v668
        %v670 = vpop.f32.mrf.mxu0
        %v671 = vadd.f32 0.0, %v670
        %672 = vmatprep.mubr.f32.mxu0 %v420
        %673 = vmatmul.mubr.f32.gmra.mxu0 %v418
        %v674 = vpop.f32.mrf.mxu0
        %v675 = vadd.f32 0.0, %v674
        %v676 = vpop.f32.mrf.mxu0
        %v677 = vadd.f32 0.0, %v676
        %678 = vmatprep.mubr.f32.mxu0 %v426
        %679 = vmatmul.mubr.f32.gmra.mxu0 %v424
        %v680 = vpop.f32.mrf.mxu0
        %v681 = vadd.f32 0.0, %v680
        %v682 = vpop.f32.mrf.mxu0
        %v683 = vadd.f32 0.0, %v682
        %684 = vmatprep.mubr.f32.mxu0 %v432
        %685 = vmatmul.mubr.f32.gmra.mxu0 %v430
        %v686 = vpop.f32.mrf.mxu0
        %v687 = vadd.f32 0.0, %v686
        %v688 = vpop.f32.mrf.mxu0
        %v689 = vadd.f32 0.0, %v688
        %690 = vmatprep.mubr.f32.mxu0 %v438
        %691 = vmatmul.mubr.f32.gmra.mxu0 %v436
        %v692 = vpop.f32.mrf.mxu0
        %v693 = vadd.f32 0.0, %v692
        %v694 = vpop.f32.mrf.mxu0
        %v695 = vadd.f32 0.0, %v694
        %696 = vmatprep.mubr.f32.mxu0 %v444
        %697 = vmatmul.mubr.f32.gmra.mxu0 %v442
        %v698 = vpop.f32.mrf.mxu0
        %v699 = vadd.f32 0.0, %v698
        %v700 = vpop.f32.mrf.mxu0
        %v701 = vadd.f32 0.0, %v700
        %702 = vdwg.mxu0
        %v703 = vld [vmem:[%s149] sm:$0xff]
        %v704 = vld [vmem:[%s149 + $0x8] sm:$0xff]
        %v705 = vld [vmem:[%s149 + $0x10] sm:$0xff]
        %v706 = vld [vmem:[%s149 + $0x18] sm:$0xff]
        %v707 = vld [vmem:[%s149 + $0x20] sm:$0xff]
        %v708 = vld [vmem:[%s149 + $0x28] sm:$0xff]
        %v709 = vld [vmem:[%s149 + $0x30] sm:$0xff]
        %v710 = vld [vmem:[%s149 + $0x38] sm:$0xff]
        %v711 = vld [vmem:[%s149 + $0x40] sm:$0xff]
        %v712 = vld [vmem:[%s149 + $0x48] sm:$0xff]
        %v713 = vld [vmem:[%s149 + $0x50] sm:$0xff]
        %v714 = vld [vmem:[%s149 + $0x58] sm:$0xff]
        %v715 = vld [vmem:[%s149 + $0x60] sm:$0xff]
        %v716 = vld [vmem:[%s149 + $0x68] sm:$0xff]
        %v717 = vld [vmem:[%s149 + $0x70] sm:$0xff]
        %v718 = vld [vmem:[%s149 + $0x78] sm:$0xff]
        %v719 = vld [vmem:[%s149 + $0x80] sm:$0xff]
        %v720 = vld [vmem:[%s149 + $0x88] sm:$0xff]
        %v721 = vld [vmem:[%s149 + $0x90] sm:$0xff]
        %v722 = vld [vmem:[%s149 + $0x98] sm:$0xff]
        %v723 = vld [vmem:[%s149 + $0xa0] sm:$0xff]
        %v724 = vld [vmem:[%s149 + $0xa8] sm:$0xff]
        %v725 = vld [vmem:[%s149 + $0xb0] sm:$0xff]
        %v726 = vld [vmem:[%s149 + $0xb8] sm:$0xff]
        %v727 = vld [vmem:[%s149 + $0xc0] sm:$0xff]
        %v728 = vld [vmem:[%s149 + $0xc8] sm:$0xff]
        %v729 = vld [vmem:[%s149 + $0xd0] sm:$0xff]
        %v730 = vld [vmem:[%s149 + $0xd8] sm:$0xff]
        %v731 = vld [vmem:[%s149 + $0xe0] sm:$0xff]
        %v732 = vld [vmem:[%s149 + $0xe8] sm:$0xff]
        %v733 = vld [vmem:[%s149 + $0xf0] sm:$0xff]
        %v734 = vld [vmem:[%s149 + $0xf8] sm:$0xff]
        %v735 = vadd.f32 %v703, %v609
        %v736 = vadd.f32 %v704, %v611
        %v737 = vadd.f32 %v705, %v615
        %v738 = vadd.f32 %v706, %v617
        %v739 = vadd.f32 %v707, %v621
        %v740 = vadd.f32 %v708, %v623
        %v741 = vadd.f32 %v709, %v627
        %v742 = vadd.f32 %v710, %v629
        %v743 = vadd.f32 %v711, %v633
        %v744 = vadd.f32 %v712, %v635
        %v745 = vadd.f32 %v713, %v639
        %v746 = vadd.f32 %v714, %v641
        %v747 = vadd.f32 %v715, %v645
        %v748 = vadd.f32 %v716, %v647
        %v749 = vadd.f32 %v717, %v651
        %v750 = vadd.f32 %v718, %v653
        %v751 = vadd.f32 %v719, %v657
        %v752 = vadd.f32 %v720, %v659
        %v753 = vadd.f32 %v721, %v663
        %v754 = vadd.f32 %v722, %v665
        %v755 = vadd.f32 %v723, %v669
        %v756 = vadd.f32 %v724, %v671
        %v757 = vadd.f32 %v725, %v675
        %v758 = vadd.f32 %v726, %v677
        %v759 = vadd.f32 %v727, %v681
        %v760 = vadd.f32 %v728, %v683
        %v761 = vadd.f32 %v729, %v687
        %v762 = vadd.f32 %v730, %v689
        %v763 = vadd.f32 %v731, %v693
        %v764 = vadd.f32 %v732, %v695
        %v765 = vadd.f32 %v733, %v699
        %v766 = vadd.f32 %v734, %v701
        %767 = vst [vmem:[%s149] sm:$0xff] %v735
        %768 = vst [vmem:[%s149 + $0x8] sm:$0xff] %v736
        %769 = vst [vmem:[%s149 + $0x10] sm:$0xff] %v737
        %770 = vst [vmem:[%s149 + $0x18] sm:$0xff] %v738
        %771 = vst [vmem:[%s149 + $0x20] sm:$0xff] %v739
        %772 = vst [vmem:[%s149 + $0x28] sm:$0xff] %v740
        %773 = vst [vmem:[%s149 + $0x30] sm:$0xff] %v741
        %774 = vst [vmem:[%s149 + $0x38] sm:$0xff] %v742
        %775 = vst [vmem:[%s149 + $0x40] sm:$0xff] %v743
        %776 = vst [vmem:[%s149 + $0x48] sm:$0xff] %v744
        %777 = vst [vmem:[%s149 + $0x50] sm:$0xff] %v745
        %778 = vst [vmem:[%s149 + $0x58] sm:$0xff] %v746
        %779 = vst [vmem:[%s149 + $0x60] sm:$0xff] %v747
        %780 = vst [vmem:[%s149 + $0x68] sm:$0xff] %v748
        %781 = vst [vmem:[%s149 + $0x70] sm:$0xff] %v749
        %782 = vst [vmem:[%s149 + $0x78] sm:$0xff] %v750
        %783 = vst [vmem:[%s149 + $0x80] sm:$0xff] %v751
        %784 = vst [vmem:[%s149 + $0x88] sm:$0xff] %v752
        %785 = vst [vmem:[%s149 + $0x90] sm:$0xff] %v753
        %786 = vst [vmem:[%s149 + $0x98] sm:$0xff] %v754
        %787 = vst [vmem:[%s149 + $0xa0] sm:$0xff] %v755
        %788 = vst [vmem:[%s149 + $0xa8] sm:$0xff] %v756
        %789 = vst [vmem:[%s149 + $0xb0] sm:$0xff] %v757
        %790 = vst [vmem:[%s149 + $0xb8] sm:$0xff] %v758
        %791 = vst [vmem:[%s149 + $0xc0] sm:$0xff] %v759
        %792 = vst [vmem:[%s149 + $0xc8] sm:$0xff] %v760
        %793 = vst [vmem:[%s149 + $0xd0] sm:$0xff] %v761
        %794 = vst [vmem:[%s149 + $0xd8] sm:$0xff] %v762
        %795 = vst [vmem:[%s149 + $0xe0] sm:$0xff] %v763
        %796 = vst [vmem:[%s149 + $0xe8] sm:$0xff] %v764
        %797 = vst [vmem:[%s149 + $0xf0] sm:$0xff] %v765
        %798 = vst [vmem:[%s149 + $0xf8] sm:$0xff] %v766
        %799 = vmatprep.subr.mxu0 %v183
        %800 = vmatpush1.msra.mxu0 %v182
        %801 = vmatprep.subr.mxu0 %v181
        %802 = vmatpush1.msra.mxu0 %v180
        %803 = vmatprep.subr.mxu0 %v179
        %804 = vmatpush1.msra.mxu0 %v178
        %805 = vmatprep.subr.mxu0 %v177
        %806 = vmatpush1.msra.mxu0 %v176
        %807 = vmatprep.subr.mxu0 %v175
        %808 = vmatpush1.msra.mxu0 %v174
        %809 = vmatprep.subr.mxu0 %v173
        %810 = vmatpush1.msra.mxu0 %v172
        %811 = vmatprep.subr.mxu0 %v171
        %812 = vmatpush1.msra.mxu0 %v170
        %813 = vmatprep.subr.mxu0 %v169
        %814 = vmatpush1.msra.mxu0 %v168
        %815 = vmatprep.subr.mxu0 %v167
        %816 = vmatpush1.msra.mxu0 %v166
        %817 = vmatprep.subr.mxu0 %v165
        %818 = vmatpush1.msra.mxu0 %v164
        %819 = vmatprep.subr.mxu0 %v163
        %820 = vmatpush1.msra.mxu0 %v162
        %821 = vmatprep.subr.mxu0 %v161
        %822 = vmatpush1.msra.mxu0 %v160
        %823 = vmatprep.subr.mxu0 %v159
        %824 = vmatpush1.msra.mxu0 %v158
        %825 = vmatprep.subr.mxu0 %v157
        %826 = vmatpush1.msra.mxu0 %v156
        %827 = vmatprep.subr.mxu0 %v155
        %828 = vmatpush1.msra.mxu0 %v154
        %829 = vmatprep.subr.mxu0 %v153
        %830 = vmatpush1.msra.mxu0 %v152
        %831 = vmatprep.subr.mxu0 %v215
        %832 = vmatpush2.msra.mxu0 %v214
        %833 = vmatprep.subr.mxu0 %v213
        %834 = vmatpush2.msra.mxu0 %v212
        %835 = vmatprep.subr.mxu0 %v211
        %836 = vmatpush2.msra.mxu0 %v210
        %837 = vmatprep.subr.mxu0 %v209
        %838 = vmatpush2.msra.mxu0 %v208
        %839 = vmatprep.subr.mxu0 %v207
        %840 = vmatpush2.msra.mxu0 %v206
        %841 = vmatprep.subr.mxu0 %v205
        %842 = vmatpush2.msra.mxu0 %v204
        %843 = vmatprep.subr.mxu0 %v203
        %844 = vmatpush2.msra.mxu0 %v202
        %845 = vmatprep.subr.mxu0 %v201
        %846 = vmatpush2.msra.mxu0 %v200
        %847 = vmatprep.subr.mxu0 %v199
        %848 = vmatpush2.msra.mxu0 %v198
        %849 = vmatprep.subr.mxu0 %v197
        %850 = vmatpush2.msra.mxu0 %v196
        %851 = vmatprep.subr.mxu0 %v195
        %852 = vmatpush2.msra.mxu0 %v194
        %853 = vmatprep.subr.mxu0 %v193
        %854 = vmatpush2.msra.mxu0 %v192
        %855 = vmatprep.subr.mxu0 %v191
        %856 = vmatpush2.msra.mxu0 %v190
        %857 = vmatprep.subr.mxu0 %v189
        %858 = vmatpush2.msra.mxu0 %v188
        %859 = vmatprep.subr.mxu0 %v187
        %860 = vmatpush2.msra.mxu0 %v186
        %861 = vmatprep.subr.mxu0 %v185
        %862 = vmatpush2.msra.mxu0 %v184
        %863 = vmatprep.mubr.f32.mxu0 %v611
        %864 = vmatmul.mubr.f32.gmra.mxu0 %v609
        %v865 = vpop.f32.mrf.mxu0
        %v866 = vadd.f32 0.0, %v865
        %v867 = vpop.f32.mrf.mxu0
        %v868 = vadd.f32 0.0, %v867
        %869 = vmatprep.mubr.f32.mxu0 %v617
        %870 = vmatmul.mubr.f32.gmra.mxu0 %v615
        %v871 = vpop.f32.mrf.mxu0
        %v872 = vadd.f32 0.0, %v871
        %v873 = vpop.f32.mrf.mxu0
        %v874 = vadd.f32 0.0, %v873
        %875 = vmatprep.mubr.f32.mxu0 %v623
        %876 = vmatmul.mubr.f32.gmra.mxu0 %v621
        %v877 = vpop.f32.mrf.mxu0
        %v878 = vadd.f32 0.0, %v877
        %v879 = vpop.f32.mrf.mxu0
        %v880 = vadd.f32 0.0, %v879
        %881 = vmatprep.mubr.f32.mxu0 %v629
        %882 = vmatmul.mubr.f32.gmra.mxu0 %v627
        %v883 = vpop.f32.mrf.mxu0
        %v884 = vadd.f32 0.0, %v883
        %v885 = vpop.f32.mrf.mxu0
        %v886 = vadd.f32 0.0, %v885
        %887 = vmatprep.mubr.f32.mxu0 %v635
        %888 = vmatmul.mubr.f32.gmra.mxu0 %v633
        %v889 = vpop.f32.mrf.mxu0
        %v890 = vadd.f32 0.0, %v889
        %v891 = vpop.f32.mrf.mxu0
        %v892 = vadd.f32 0.0, %v891
        %893 = vmatprep.mubr.f32.mxu0 %v641
        %894 = vmatmul.mubr.f32.gmra.mxu0 %v639
        %v895 = vpop.f32.mrf.mxu0
        %v896 = vadd.f32 0.0, %v895
        %v897 = vpop.f32.mrf.mxu0
        %v898 = vadd.f32 0.0, %v897
        %899 = vmatprep.mubr.f32.mxu0 %v647
        %900 = vmatmul.mubr.f32.gmra.mxu0 %v645
        %v901 = vpop.f32.mrf.mxu0
        %v902 = vadd.f32 0.0, %v901
        %v903 = vpop.f32.mrf.mxu0
        %v904 = vadd.f32 0.0, %v903
        %905 = vmatprep.mubr.f32.mxu0 %v653
        %906 = vmatmul.mubr.f32.gmra.mxu0 %v651
        %v907 = vpop.f32.mrf.mxu0
        %v908 = vadd.f32 0.0, %v907
        %v909 = vpop.f32.mrf.mxu0
        %v910 = vadd.f32 0.0, %v909
        %911 = vmatprep.mubr.f32.mxu0 %v659
        %912 = vmatmul.mubr.f32.gmra.mxu0 %v657
        %v913 = vpop.f32.mrf.mxu0
        %v914 = vadd.f32 0.0, %v913
        %v915 = vpop.f32.mrf.mxu0
        %v916 = vadd.f32 0.0, %v915
        %917 = vmatprep.mubr.f32.mxu0 %v665
        %918 = vmatmul.mubr.f32.gmra.mxu0 %v663
        %v919 = vpop.f32.mrf.mxu0
        %v920 = vadd.f32 0.0, %v919
        %v921 = vpop.f32.mrf.mxu0
        %v922 = vadd.f32 0.0, %v921
        %923 = vmatprep.mubr.f32.mxu0 %v671
        %924 = vmatmul.mubr.f32.gmra.mxu0 %v669
        %v925 = vpop.f32.mrf.mxu0
        %v926 = vadd.f32 0.0, %v925
        %v927 = vpop.f32.mrf.mxu0
        %v928 = vadd.f32 0.0, %v927
        %929 = vmatprep.mubr.f32.mxu0 %v677
        %930 = vmatmul.mubr.f32.gmra.mxu0 %v675
        %v931 = vpop.f32.mrf.mxu0
        %v932 = vadd.f32 0.0, %v931
        %v933 = vpop.f32.mrf.mxu0
        %v934 = vadd.f32 0.0, %v933
        %935 = vmatprep.mubr.f32.mxu0 %v683
        %936 = vmatmul.mubr.f32.gmra.mxu0 %v681
        %v937 = vpop.f32.mrf.mxu0
        %v938 = vadd.f32 0.0, %v937
        %v939 = vpop.f32.mrf.mxu0
        %v940 = vadd.f32 0.0, %v939
        %941 = vmatprep.mubr.f32.mxu0 %v689
        %942 = vmatmul.mubr.f32.gmra.mxu0 %v687
        %v943 = vpop.f32.mrf.mxu0
        %v944 = vadd.f32 0.0, %v943
        %v945 = vpop.f32.mrf.mxu0
        %v946 = vadd.f32 0.0, %v945
        %947 = vmatprep.mubr.f32.mxu0 %v695
        %948 = vmatmul.mubr.f32.gmra.mxu0 %v693
        %v949 = vpop.f32.mrf.mxu0
        %v950 = vadd.f32 0.0, %v949
        %v951 = vpop.f32.mrf.mxu0
        %v952 = vadd.f32 0.0, %v951
        %953 = vmatprep.mubr.f32.mxu0 %v701
        %954 = vmatmul.mubr.f32.gmra.mxu0 %v699
        %v955 = vpop.f32.mrf.mxu0
        %v956 = vadd.f32 0.0, %v955
        %v957 = vpop.f32.mrf.mxu0
        %v958 = vadd.f32 0.0, %v957
        %959 = vdwg.mxu0
        %v960 = vld [vmem:[%s149] sm:$0xff]
        %v961 = vld [vmem:[%s149 + $0x8] sm:$0xff]
        %v962 = vld [vmem:[%s149 + $0x10] sm:$0xff]
        %v963 = vld [vmem:[%s149 + $0x18] sm:$0xff]
        %v964 = vld [vmem:[%s149 + $0x20] sm:$0xff]
        %v965 = vld [vmem:[%s149 + $0x28] sm:$0xff]
        %v966 = vld [vmem:[%s149 + $0x30] sm:$0xff]
        %v967 = vld [vmem:[%s149 + $0x38] sm:$0xff]
        %v968 = vld [vmem:[%s149 + $0x40] sm:$0xff]
        %v969 = vld [vmem:[%s149 + $0x48] sm:$0xff]
        %v970 = vld [vmem:[%s149 + $0x50] sm:$0xff]
        %v971 = vld [vmem:[%s149 + $0x58] sm:$0xff]
        %v972 = vld [vmem:[%s149 + $0x60] sm:$0xff]
        %v973 = vld [vmem:[%s149 + $0x68] sm:$0xff]
        %v974 = vld [vmem:[%s149 + $0x70] sm:$0xff]
        %v975 = vld [vmem:[%s149 + $0x78] sm:$0xff]
        %v976 = vld [vmem:[%s149 + $0x80] sm:$0xff]
        %v977 = vld [vmem:[%s149 + $0x88] sm:$0xff]
        %v978 = vld [vmem:[%s149 + $0x90] sm:$0xff]
        %v979 = vld [vmem:[%s149 + $0x98] sm:$0xff]
        %v980 = vld [vmem:[%s149 + $0xa0] sm:$0xff]
        %v981 = vld [vmem:[%s149 + $0xa8] sm:$0xff]
        %v982 = vld [vmem:[%s149 + $0xb0] sm:$0xff]
        %v983 = vld [vmem:[%s149 + $0xb8] sm:$0xff]
        %v984 = vld [vmem:[%s149 + $0xc0] sm:$0xff]
        %v985 = vld [vmem:[%s149 + $0xc8] sm:$0xff]
        %v986 = vld [vmem:[%s149 + $0xd0] sm:$0xff]
        %v987 = vld [vmem:[%s149 + $0xd8] sm:$0xff]
        %v988 = vld [vmem:[%s149 + $0xe0] sm:$0xff]
        %v989 = vld [vmem:[%s149 + $0xe8] sm:$0xff]
        %v990 = vld [vmem:[%s149 + $0xf0] sm:$0xff]
        %v991 = vld [vmem:[%s149 + $0xf8] sm:$0xff]
        %v992 = vadd.f32 %v960, %v866
        %v993 = vadd.f32 %v961, %v868
        %v994 = vadd.f32 %v962, %v872
        %v995 = vadd.f32 %v963, %v874
        %v996 = vadd.f32 %v964, %v878
        %v997 = vadd.f32 %v965, %v880
        %v998 = vadd.f32 %v966, %v884
        %v999 = vadd.f32 %v967, %v886
        %v1000 = vadd.f32 %v968, %v890
        %v1001 = vadd.f32 %v969, %v892
        %v1002 = vadd.f32 %v970, %v896
        %v1003 = vadd.f32 %v971, %v898
        %v1004 = vadd.f32 %v972, %v902
        %v1005 = vadd.f32 %v973, %v904
        %v1006 = vadd.f32 %v974, %v908
        %v1007 = vadd.f32 %v975, %v910
        %v1008 = vadd.f32 %v976, %v914
        %v1009 = vadd.f32 %v977, %v916
        %v1010 = vadd.f32 %v978, %v920
        %v1011 = vadd.f32 %v979, %v922
        %v1012 = vadd.f32 %v980, %v926
        %v1013 = vadd.f32 %v981, %v928
        %v1014 = vadd.f32 %v982, %v932
        %v1015 = vadd.f32 %v983, %v934
        %v1016 = vadd.f32 %v984, %v938
        %v1017 = vadd.f32 %v985, %v940
        %v1018 = vadd.f32 %v986, %v944
        %v1019 = vadd.f32 %v987, %v946
        %v1020 = vadd.f32 %v988, %v950
        %v1021 = vadd.f32 %v989, %v952
        %v1022 = vadd.f32 %v990, %v956
        %v1023 = vadd.f32 %v991, %v958
        %1024 = vst [vmem:[%s149] sm:$0xff] %v992
        %1025 = vst [vmem:[%s149 + $0x8] sm:$0xff] %v993
        %1026 = vst [vmem:[%s149 + $0x10] sm:$0xff] %v994
        %1027 = vst [vmem:[%s149 + $0x18] sm:$0xff] %v995
        %1028 = vst [vmem:[%s149 + $0x20] sm:$0xff] %v996
        %1029 = vst [vmem:[%s149 + $0x28] sm:$0xff] %v997
        %1030 = vst [vmem:[%s149 + $0x30] sm:$0xff] %v998
        %1031 = vst [vmem:[%s149 + $0x38] sm:$0xff] %v999
        %1032 = vst [vmem:[%s149 + $0x40] sm:$0xff] %v1000
        %1033 = vst [vmem:[%s149 + $0x48] sm:$0xff] %v1001
        %1034 = vst [vmem:[%s149 + $0x50] sm:$0xff] %v1002
        %1035 = vst [vmem:[%s149 + $0x58] sm:$0xff] %v1003
        %1036 = vst [vmem:[%s149 + $0x60] sm:$0xff] %v1004
        %1037 = vst [vmem:[%s149 + $0x68] sm:$0xff] %v1005
        %1038 = vst [vmem:[%s149 + $0x70] sm:$0xff] %v1006
        %1039 = vst [vmem:[%s149 + $0x78] sm:$0xff] %v1007
        %1040 = vst [vmem:[%s149 + $0x80] sm:$0xff] %v1008
        %1041 = vst [vmem:[%s149 + $0x88] sm:$0xff] %v1009
        %1042 = vst [vmem:[%s149 + $0x90] sm:$0xff] %v1010
        %1043 = vst [vmem:[%s149 + $0x98] sm:$0xff] %v1011
        %1044 = vst [vmem:[%s149 + $0xa0] sm:$0xff] %v1012
        %1045 = vst [vmem:[%s149 + $0xa8] sm:$0xff] %v1013
        %1046 = vst [vmem:[%s149 + $0xb0] sm:$0xff] %v1014
        %1047 = vst [vmem:[%s149 + $0xb8] sm:$0xff] %v1015
        %1048 = vst [vmem:[%s149 + $0xc0] sm:$0xff] %v1016
        %1049 = vst [vmem:[%s149 + $0xc8] sm:$0xff] %v1017
        %1050 = vst [vmem:[%s149 + $0xd0] sm:$0xff] %v1018
        %1051 = vst [vmem:[%s149 + $0xd8] sm:$0xff] %v1019
        %1052 = vst [vmem:[%s149 + $0xe0] sm:$0xff] %v1020
        %1053 = vst [vmem:[%s149 + $0xe8] sm:$0xff] %v1021
        %1054 = vst [vmem:[%s149 + $0xf0] sm:$0xff] %v1022
        %1055 = vst [vmem:[%s149 + $0xf8] sm:$0xff] %v1023
        %1056 = vmatprep.subr.mxu0 %v183
        %1057 = vmatpush1.msra.mxu0 %v182
        %1058 = vmatprep.subr.mxu0 %v181
        %1059 = vmatpush1.msra.mxu0 %v180
        %1060 = vmatprep.subr.mxu0 %v179
        %1061 = vmatpush1.msra.mxu0 %v178
        %1062 = vmatprep.subr.mxu0 %v177
        %1063 = vmatpush1.msra.mxu0 %v176
        %1064 = vmatprep.subr.mxu0 %v175
        %1065 = vmatpush1.msra.mxu0 %v174
        %1066 = vmatprep.subr.mxu0 %v173
        %1067 = vmatpush1.msra.mxu0 %v172
        %1068 = vmatprep.subr.mxu0 %v171
        %1069 = vmatpush1.msra.mxu0 %v170
        %1070 = vmatprep.subr.mxu0 %v169
        %1071 = vmatpush1.msra.mxu0 %v168
        %1072 = vmatprep.subr.mxu0 %v167
        %1073 = vmatpush1.msra.mxu0 %v166
        %1074 = vmatprep.subr.mxu0 %v165
        %1075 = vmatpush1.msra.mxu0 %v164
        %1076 = vmatprep.subr.mxu0 %v163
        %1077 = vmatpush1.msra.mxu0 %v162
        %1078 = vmatprep.subr.mxu0 %v161
        %1079 = vmatpush1.msra.mxu0 %v160
        %1080 = vmatprep.subr.mxu0 %v159
        %1081 = vmatpush1.msra.mxu0 %v158
        %1082 = vmatprep.subr.mxu0 %v157
        %1083 = vmatpush1.msra.mxu0 %v156
        %1084 = vmatprep.subr.mxu0 %v155
        %1085 = vmatpush1.msra.mxu0 %v154
        %1086 = vmatprep.subr.mxu0 %v153
        %1087 = vmatpush1.msra.mxu0 %v152
        %1088 = vmatprep.subr.mxu0 %v215
        %1089 = vmatpush2.msra.mxu0 %v214
        %1090 = vmatprep.subr.mxu0 %v213
        %1091 = vmatpush2.msra.mxu0 %v212
        %1092 = vmatprep.subr.mxu0 %v211
        %1093 = vmatpush2.msra.mxu0 %v210
        %1094 = vmatprep.subr.mxu0 %v209
        %1095 = vmatpush2.msra.mxu0 %v208
        %1096 = vmatprep.subr.mxu0 %v207
        %1097 = vmatpush2.msra.mxu0 %v206
        %1098 = vmatprep.subr.mxu0 %v205
        %1099 = vmatpush2.msra.mxu0 %v204
        %1100 = vmatprep.subr.mxu0 %v203
        %1101 = vmatpush2.msra.mxu0 %v202
        %1102 = vmatprep.subr.mxu0 %v201
        %1103 = vmatpush2.msra.mxu0 %v200
        %1104 = vmatprep.subr.mxu0 %v199
        %1105 = vmatpush2.msra.mxu0 %v198
        %1106 = vmatprep.subr.mxu0 %v197
        %1107 = vmatpush2.msra.mxu0 %v196
        %1108 = vmatprep.subr.mxu0 %v195
        %1109 = vmatpush2.msra.mxu0 %v194
        %1110 = vmatprep.subr.mxu0 %v193
        %1111 = vmatpush2.msra.mxu0 %v192
        %1112 = vmatprep.subr.mxu0 %v191
        %1113 = vmatpush2.msra.mxu0 %v190
        %1114 = vmatprep.subr.mxu0 %v189
        %1115 = vmatpush2.msra.mxu0 %v188
        %1116 = vmatprep.subr.mxu0 %v187
        %1117 = vmatpush2.msra.mxu0 %v186
        %1118 = vmatprep.subr.mxu0 %v185
        %1119 = vmatpush2.msra.mxu0 %v184
        %1120 = vmatprep.mubr.f32.mxu0 %v868
        %1121 = vmatmul.mubr.f32.gmra.mxu0 %v866
        %v1122 = vpop.f32.mrf.mxu0
        %v1123 = vadd.f32 0.0, %v1122
        %v1124 = vpop.f32.mrf.mxu0
        %v1125 = vadd.f32 0.0, %v1124
        %1126 = vmatprep.mubr.f32.mxu0 %v874
        %1127 = vmatmul.mubr.f32.gmra.mxu0 %v872
        %v1128 = vpop.f32.mrf.mxu0
        %v1129 = vadd.f32 0.0, %v1128
        %v1130 = vpop.f32.mrf.mxu0
        %v1131 = vadd.f32 0.0, %v1130
        %1132 = vmatprep.mubr.f32.mxu0 %v880
        %1133 = vmatmul.mubr.f32.gmra.mxu0 %v878
        %v1134 = vpop.f32.mrf.mxu0
        %v1135 = vadd.f32 0.0, %v1134
        %v1136 = vpop.f32.mrf.mxu0
        %v1137 = vadd.f32 0.0, %v1136
        %1138 = vmatprep.mubr.f32.mxu0 %v886
        %1139 = vmatmul.mubr.f32.gmra.mxu0 %v884
        %v1140 = vpop.f32.mrf.mxu0
        %v1141 = vadd.f32 0.0, %v1140
        %v1142 = vpop.f32.mrf.mxu0
        %v1143 = vadd.f32 0.0, %v1142
        %1144 = vmatprep.mubr.f32.mxu0 %v892
        %1145 = vmatmul.mubr.f32.gmra.mxu0 %v890
        %v1146 = vpop.f32.mrf.mxu0
        %v1147 = vadd.f32 0.0, %v1146
        %v1148 = vpop.f32.mrf.mxu0
        %v1149 = vadd.f32 0.0, %v1148
        %1150 = vmatprep.mubr.f32.mxu0 %v898
        %1151 = vmatmul.mubr.f32.gmra.mxu0 %v896
        %v1152 = vpop.f32.mrf.mxu0
        %v1153 = vadd.f32 0.0, %v1152
        %v1154 = vpop.f32.mrf.mxu0
        %v1155 = vadd.f32 0.0, %v1154
        %1156 = vmatprep.mubr.f32.mxu0 %v904
        %1157 = vmatmul.mubr.f32.gmra.mxu0 %v902
        %v1158 = vpop.f32.mrf.mxu0
        %v1159 = vadd.f32 0.0, %v1158
        %v1160 = vpop.f32.mrf.mxu0
        %v1161 = vadd.f32 0.0, %v1160
        %1162 = vmatprep.mubr.f32.mxu0 %v910
        %1163 = vmatmul.mubr.f32.gmra.mxu0 %v908
        %v1164 = vpop.f32.mrf.mxu0
        %v1165 = vadd.f32 0.0, %v1164
        %v1166 = vpop.f32.mrf.mxu0
        %v1167 = vadd.f32 0.0, %v1166
        %1168 = vmatprep.mubr.f32.mxu0 %v916
        %1169 = vmatmul.mubr.f32.gmra.mxu0 %v914
        %v1170 = vpop.f32.mrf.mxu0
        %v1171 = vadd.f32 0.0, %v1170
        %v1172 = vpop.f32.mrf.mxu0
        %v1173 = vadd.f32 0.0, %v1172
        %1174 = vmatprep.mubr.f32.mxu0 %v922
        %1175 = vmatmul.mubr.f32.gmra.mxu0 %v920
        %v1176 = vpop.f32.mrf.mxu0
        %v1177 = vadd.f32 0.0, %v1176
        %v1178 = vpop.f32.mrf.mxu0
        %v1179 = vadd.f32 0.0, %v1178
        %1180 = vmatprep.mubr.f32.mxu0 %v928
        %1181 = vmatmul.mubr.f32.gmra.mxu0 %v926
        %v1182 = vpop.f32.mrf.mxu0
        %v1183 = vadd.f32 0.0, %v1182
        %v1184 = vpop.f32.mrf.mxu0
        %v1185 = vadd.f32 0.0, %v1184
        %1186 = vmatprep.mubr.f32.mxu0 %v934
        %1187 = vmatmul.mubr.f32.gmra.mxu0 %v932
        %v1188 = vpop.f32.mrf.mxu0
        %v1189 = vadd.f32 0.0, %v1188
        %v1190 = vpop.f32.mrf.mxu0
        %v1191 = vadd.f32 0.0, %v1190
        %1192 = vmatprep.mubr.f32.mxu0 %v940
        %1193 = vmatmul.mubr.f32.gmra.mxu0 %v938
        %v1194 = vpop.f32.mrf.mxu0
        %v1195 = vadd.f32 0.0, %v1194
        %v1196 = vpop.f32.mrf.mxu0
        %v1197 = vadd.f32 0.0, %v1196
        %1198 = vmatprep.mubr.f32.mxu0 %v946
        %1199 = vmatmul.mubr.f32.gmra.mxu0 %v944
        %v1200 = vpop.f32.mrf.mxu0
        %v1201 = vadd.f32 0.0, %v1200
        %v1202 = vpop.f32.mrf.mxu0
        %v1203 = vadd.f32 0.0, %v1202
        %1204 = vmatprep.mubr.f32.mxu0 %v952
        %1205 = vmatmul.mubr.f32.gmra.mxu0 %v950
        %v1206 = vpop.f32.mrf.mxu0
        %v1207 = vadd.f32 0.0, %v1206
        %v1208 = vpop.f32.mrf.mxu0
        %v1209 = vadd.f32 0.0, %v1208
        %1210 = vmatprep.mubr.f32.mxu0 %v958
        %1211 = vmatmul.mubr.f32.gmra.mxu0 %v956
        %v1212 = vpop.f32.mrf.mxu0
        %v1213 = vadd.f32 0.0, %v1212
        %v1214 = vpop.f32.mrf.mxu0
        %v1215 = vadd.f32 0.0, %v1214
        %1216 = vdwg.mxu0
        %v1217 = vld [vmem:[%s149] sm:$0xff]
        %v1218 = vld [vmem:[%s149 + $0x8] sm:$0xff]
        %v1219 = vld [vmem:[%s149 + $0x10] sm:$0xff]
        %v1220 = vld [vmem:[%s149 + $0x18] sm:$0xff]
        %v1221 = vld [vmem:[%s149 + $0x20] sm:$0xff]
        %v1222 = vld [vmem:[%s149 + $0x28] sm:$0xff]
        %v1223 = vld [vmem:[%s149 + $0x30] sm:$0xff]
        %v1224 = vld [vmem:[%s149 + $0x38] sm:$0xff]
        %v1225 = vld [vmem:[%s149 + $0x40] sm:$0xff]
        %v1226 = vld [vmem:[%s149 + $0x48] sm:$0xff]
        %v1227 = vld [vmem:[%s149 + $0x50] sm:$0xff]
        %v1228 = vld [vmem:[%s149 + $0x58] sm:$0xff]
        %v1229 = vld [vmem:[%s149 + $0x60] sm:$0xff]
        %v1230 = vld [vmem:[%s149 + $0x68] sm:$0xff]
        %v1231 = vld [vmem:[%s149 + $0x70] sm:$0xff]
        %v1232 = vld [vmem:[%s149 + $0x78] sm:$0xff]
        %v1233 = vld [vmem:[%s149 + $0x80] sm:$0xff]
        %v1234 = vld [vmem:[%s149 + $0x88] sm:$0xff]
        %v1235 = vld [vmem:[%s149 + $0x90] sm:$0xff]
        %v1236 = vld [vmem:[%s149 + $0x98] sm:$0xff]
        %v1237 = vld [vmem:[%s149 + $0xa0] sm:$0xff]
        %v1238 = vld [vmem:[%s149 + $0xa8] sm:$0xff]
        %v1239 = vld [vmem:[%s149 + $0xb0] sm:$0xff]
        %v1240 = vld [vmem:[%s149 + $0xb8] sm:$0xff]
        %v1241 = vld [vmem:[%s149 + $0xc0] sm:$0xff]
        %v1242 = vld [vmem:[%s149 + $0xc8] sm:$0xff]
        %v1243 = vld [vmem:[%s149 + $0xd0] sm:$0xff]
        %v1244 = vld [vmem:[%s149 + $0xd8] sm:$0xff]
        %v1245 = vld [vmem:[%s149 + $0xe0] sm:$0xff]
        %v1246 = vld [vmem:[%s149 + $0xe8] sm:$0xff]
        %v1247 = vld [vmem:[%s149 + $0xf0] sm:$0xff]
        %v1248 = vld [vmem:[%s149 + $0xf8] sm:$0xff]
        %v1249 = vadd.f32 %v1217, %v1123
        %v1250 = vadd.f32 %v1218, %v1125
        %v1251 = vadd.f32 %v1219, %v1129
        %v1252 = vadd.f32 %v1220, %v1131
        %v1253 = vadd.f32 %v1221, %v1135
        %v1254 = vadd.f32 %v1222, %v1137
        %v1255 = vadd.f32 %v1223, %v1141
        %v1256 = vadd.f32 %v1224, %v1143
        %v1257 = vadd.f32 %v1225, %v1147
        %v1258 = vadd.f32 %v1226, %v1149
        %v1259 = vadd.f32 %v1227, %v1153
        %v1260 = vadd.f32 %v1228, %v1155
        %v1261 = vadd.f32 %v1229, %v1159
        %v1262 = vadd.f32 %v1230, %v1161
        %v1263 = vadd.f32 %v1231, %v1165
        %v1264 = vadd.f32 %v1232, %v1167
        %v1265 = vadd.f32 %v1233, %v1171
        %v1266 = vadd.f32 %v1234, %v1173
        %v1267 = vadd.f32 %v1235, %v1177
        %v1268 = vadd.f32 %v1236, %v1179
        %v1269 = vadd.f32 %v1237, %v1183
        %v1270 = vadd.f32 %v1238, %v1185
        %v1271 = vadd.f32 %v1239, %v1189
        %v1272 = vadd.f32 %v1240, %v1191
        %v1273 = vadd.f32 %v1241, %v1195
        %v1274 = vadd.f32 %v1242, %v1197
        %v1275 = vadd.f32 %v1243, %v1201
        %v1276 = vadd.f32 %v1244, %v1203
        %v1277 = vadd.f32 %v1245, %v1207
        %v1278 = vadd.f32 %v1246, %v1209
        %v1279 = vadd.f32 %v1247, %v1213
        %v1280 = vadd.f32 %v1248, %v1215
        %1281 = vst [vmem:[%s149] sm:$0xff] %v1249
        %1282 = vst [vmem:[%s149 + $0x8] sm:$0xff] %v1250
        %1283 = vst [vmem:[%s149 + $0x10] sm:$0xff] %v1251
        %1284 = vst [vmem:[%s149 + $0x18] sm:$0xff] %v1252
        %1285 = vst [vmem:[%s149 + $0x20] sm:$0xff] %v1253
        %1286 = vst [vmem:[%s149 + $0x28] sm:$0xff] %v1254
        %1287 = vst [vmem:[%s149 + $0x30] sm:$0xff] %v1255
        %1288 = vst [vmem:[%s149 + $0x38] sm:$0xff] %v1256
        %1289 = vst [vmem:[%s149 + $0x40] sm:$0xff] %v1257
        %1290 = vst [vmem:[%s149 + $0x48] sm:$0xff] %v1258
        %1291 = vst [vmem:[%s149 + $0x50] sm:$0xff] %v1259
        %1292 = vst [vmem:[%s149 + $0x58] sm:$0xff] %v1260
        %1293 = vst [vmem:[%s149 + $0x60] sm:$0xff] %v1261
        %1294 = vst [vmem:[%s149 + $0x68] sm:$0xff] %v1262
        %1295 = vst [vmem:[%s149 + $0x70] sm:$0xff] %v1263
        %1296 = vst [vmem:[%s149 + $0x78] sm:$0xff] %v1264
        %1297 = vst [vmem:[%s149 + $0x80] sm:$0xff] %v1265
        %1298 = vst [vmem:[%s149 + $0x88] sm:$0xff] %v1266
        %1299 = vst [vmem:[%s149 + $0x90] sm:$0xff] %v1267
        %1300 = vst [vmem:[%s149 + $0x98] sm:$0xff] %v1268
        %1301 = vst [vmem:[%s149 + $0xa0] sm:$0xff] %v1269
        %1302 = vst [vmem:[%s149 + $0xa8] sm:$0xff] %v1270
        %1303 = vst [vmem:[%s149 + $0xb0] sm:$0xff] %v1271
        %1304 = vst [vmem:[%s149 + $0xb8] sm:$0xff] %v1272
        %1305 = vst [vmem:[%s149 + $0xc0] sm:$0xff] %v1273
        %1306 = vst [vmem:[%s149 + $0xc8] sm:$0xff] %v1274
        %1307 = vst [vmem:[%s149 + $0xd0] sm:$0xff] %v1275
        %1308 = vst [vmem:[%s149 + $0xd8] sm:$0xff] %v1276
        %1309 = vst [vmem:[%s149 + $0xe0] sm:$0xff] %v1277
        %1310 = vst [vmem:[%s149 + $0xe8] sm:$0xff] %v1278
        %1311 = vst [vmem:[%s149 + $0xf0] sm:$0xff] %v1279
        %1312 = vst [vmem:[%s149 + $0xf8] sm:$0xff] %v1280
        %1313 = vmatprep.subr.mxu0 %v183
        %1314 = vmatpush1.msra.mxu0 %v182
        %1315 = vmatprep.subr.mxu0 %v181
        %1316 = vmatpush1.msra.mxu0 %v180
        %1317 = vmatprep.subr.mxu0 %v179
        %1318 = vmatpush1.msra.mxu0 %v178
        %1319 = vmatprep.subr.mxu0 %v177
        %1320 = vmatpush1.msra.mxu0 %v176
        %1321 = vmatprep.subr.mxu0 %v175
        %1322 = vmatpush1.msra.mxu0 %v174
        %1323 = vmatprep.subr.mxu0 %v173
        %1324 = vmatpush1.msra.mxu0 %v172
        %1325 = vmatprep.subr.mxu0 %v171
        %1326 = vmatpush1.msra.mxu0 %v170
        %1327 = vmatprep.subr.mxu0 %v169
        %1328 = vmatpush1.msra.mxu0 %v168
        %1329 = vmatprep.subr.mxu0 %v167
        %1330 = vmatpush1.msra.mxu0 %v166
        %1331 = vmatprep.subr.mxu0 %v165
        %1332 = vmatpush1.msra.mxu0 %v164
        %1333 = vmatprep.subr.mxu0 %v163
        %1334 = vmatpush1.msra.mxu0 %v162
        %1335 = vmatprep.subr.mxu0 %v161
        %1336 = vmatpush1.msra.mxu0 %v160
        %1337 = vmatprep.subr.mxu0 %v159
        %1338 = vmatpush1.msra.mxu0 %v158
        %1339 = vmatprep.subr.mxu0 %v157
        %1340 = vmatpush1.msra.mxu0 %v156
        %1341 = vmatprep.subr.mxu0 %v155
        %1342 = vmatpush1.msra.mxu0 %v154
        %1343 = vmatprep.subr.mxu0 %v153
        %1344 = vmatpush1.msra.mxu0 %v152
        %1345 = vmatprep.subr.mxu0 %v215
        %1346 = vmatpush2.msra.mxu0 %v214
        %1347 = vmatprep.subr.mxu0 %v213
        %1348 = vmatpush2.msra.mxu0 %v212
        %1349 = vmatprep.subr.mxu0 %v211
        %1350 = vmatpush2.msra.mxu0 %v210
        %1351 = vmatprep.subr.mxu0 %v209
        %1352 = vmatpush2.msra.mxu0 %v208
        %1353 = vmatprep.subr.mxu0 %v207
        %1354 = vmatpush2.msra.mxu0 %v206
        %1355 = vmatprep.subr.mxu0 %v205
        %1356 = vmatpush2.msra.mxu0 %v204
        %1357 = vmatprep.subr.mxu0 %v203
        %1358 = vmatpush2.msra.mxu0 %v202
        %1359 = vmatprep.subr.mxu0 %v201
        %1360 = vmatpush2.msra.mxu0 %v200
        %1361 = vmatprep.subr.mxu0 %v199
        %1362 = vmatpush2.msra.mxu0 %v198
        %1363 = vmatprep.subr.mxu0 %v197
        %1364 = vmatpush2.msra.mxu0 %v196
        %1365 = vmatprep.subr.mxu0 %v195
        %1366 = vmatpush2.msra.mxu0 %v194
        %1367 = vmatprep.subr.mxu0 %v193
        %1368 = vmatpush2.msra.mxu0 %v192
        %1369 = vmatprep.subr.mxu0 %v191
        %1370 = vmatpush2.msra.mxu0 %v190
        %1371 = vmatprep.subr.mxu0 %v189
        %1372 = vmatpush2.msra.mxu0 %v188
        %1373 = vmatprep.subr.mxu0 %v187
        %1374 = vmatpush2.msra.mxu0 %v186
        %1375 = vmatprep.subr.mxu0 %v185
        %1376 = vmatpush2.msra.mxu0 %v184
        %1377 = vmatprep.mubr.f32.mxu0 %v1125
        %1378 = vmatmul.mubr.f32.gmra.mxu0 %v1123
        %v1379 = vpop.f32.mrf.mxu0
        %v1380 = vadd.f32 0.0, %v1379
        %v1381 = vpop.f32.mrf.mxu0
        %v1382 = vadd.f32 0.0, %v1381
        %1383 = vmatprep.mubr.f32.mxu0 %v1131
        %1384 = vmatmul.mubr.f32.gmra.mxu0 %v1129
        %v1385 = vpop.f32.mrf.mxu0
        %v1386 = vadd.f32 0.0, %v1385
        %v1387 = vpop.f32.mrf.mxu0
        %v1388 = vadd.f32 0.0, %v1387
        %1389 = vmatprep.mubr.f32.mxu0 %v1137
        %1390 = vmatmul.mubr.f32.gmra.mxu0 %v1135
        %v1391 = vpop.f32.mrf.mxu0
        %v1392 = vadd.f32 0.0, %v1391
        %v1393 = vpop.f32.mrf.mxu0
        %v1394 = vadd.f32 0.0, %v1393
        %1395 = vmatprep.mubr.f32.mxu0 %v1143
        %1396 = vmatmul.mubr.f32.gmra.mxu0 %v1141
        %v1397 = vpop.f32.mrf.mxu0
        %v1398 = vadd.f32 0.0, %v1397
        %v1399 = vpop.f32.mrf.mxu0
        %v1400 = vadd.f32 0.0, %v1399
        %1401 = vmatprep.mubr.f32.mxu0 %v1149
        %1402 = vmatmul.mubr.f32.gmra.mxu0 %v1147
        %v1403 = vpop.f32.mrf.mxu0
        %v1404 = vadd.f32 0.0, %v1403
        %v1405 = vpop.f32.mrf.mxu0
        %v1406 = vadd.f32 0.0, %v1405
        %1407 = vmatprep.mubr.f32.mxu0 %v1155
        %1408 = vmatmul.mubr.f32.gmra.mxu0 %v1153
        %v1409 = vpop.f32.mrf.mxu0
        %v1410 = vadd.f32 0.0, %v1409
        %v1411 = vpop.f32.mrf.mxu0
        %v1412 = vadd.f32 0.0, %v1411
        %1413 = vmatprep.mubr.f32.mxu0 %v1161
        %1414 = vmatmul.mubr.f32.gmra.mxu0 %v1159
        %v1415 = vpop.f32.mrf.mxu0
        %v1416 = vadd.f32 0.0, %v1415
        %v1417 = vpop.f32.mrf.mxu0
        %v1418 = vadd.f32 0.0, %v1417
        %1419 = vmatprep.mubr.f32.mxu0 %v1167
        %1420 = vmatmul.mubr.f32.gmra.mxu0 %v1165
        %v1421 = vpop.f32.mrf.mxu0
        %v1422 = vadd.f32 0.0, %v1421
        %v1423 = vpop.f32.mrf.mxu0
        %v1424 = vadd.f32 0.0, %v1423
        %1425 = vmatprep.mubr.f32.mxu0 %v1173
        %1426 = vmatmul.mubr.f32.gmra.mxu0 %v1171
        %v1427 = vpop.f32.mrf.mxu0
        %v1428 = vadd.f32 0.0, %v1427
        %v1429 = vpop.f32.mrf.mxu0
        %v1430 = vadd.f32 0.0, %v1429
        %1431 = vmatprep.mubr.f32.mxu0 %v1179
        %1432 = vmatmul.mubr.f32.gmra.mxu0 %v1177
        %v1433 = vpop.f32.mrf.mxu0
        %v1434 = vadd.f32 0.0, %v1433
        %v1435 = vpop.f32.mrf.mxu0
        %v1436 = vadd.f32 0.0, %v1435
        %1437 = vmatprep.mubr.f32.mxu0 %v1185
        %1438 = vmatmul.mubr.f32.gmra.mxu0 %v1183
        %v1439 = vpop.f32.mrf.mxu0
        %v1440 = vadd.f32 0.0, %v1439
        %v1441 = vpop.f32.mrf.mxu0
        %v1442 = vadd.f32 0.0, %v1441
        %1443 = vmatprep.mubr.f32.mxu0 %v1191
        %1444 = vmatmul.mubr.f32.gmra.mxu0 %v1189
        %v1445 = vpop.f32.mrf.mxu0
        %v1446 = vadd.f32 0.0, %v1445
        %v1447 = vpop.f32.mrf.mxu0
        %v1448 = vadd.f32 0.0, %v1447
        %1449 = vmatprep.mubr.f32.mxu0 %v1197
        %1450 = vmatmul.mubr.f32.gmra.mxu0 %v1195
        %v1451 = vpop.f32.mrf.mxu0
        %v1452 = vadd.f32 0.0, %v1451
        %v1453 = vpop.f32.mrf.mxu0
        %v1454 = vadd.f32 0.0, %v1453
        %1455 = vmatprep.mubr.f32.mxu0 %v1203
        %1456 = vmatmul.mubr.f32.gmra.mxu0 %v1201
        %v1457 = vpop.f32.mrf.mxu0
        %v1458 = vadd.f32 0.0, %v1457
        %v1459 = vpop.f32.mrf.mxu0
        %v1460 = vadd.f32 0.0, %v1459
        %1461 = vmatprep.mubr.f32.mxu0 %v1209
        %1462 = vmatmul.mubr.f32.gmra.mxu0 %v1207
        %v1463 = vpop.f32.mrf.mxu0
        %v1464 = vadd.f32 0.0, %v1463
        %v1465 = vpop.f32.mrf.mxu0
        %v1466 = vadd.f32 0.0, %v1465
        %1467 = vmatprep.mubr.f32.mxu0 %v1215
        %1468 = vmatmul.mubr.f32.gmra.mxu0 %v1213
        %v1469 = vpop.f32.mrf.mxu0
        %v1470 = vadd.f32 0.0, %v1469
        %v1471 = vpop.f32.mrf.mxu0
        %v1472 = vadd.f32 0.0, %v1471
        %1473 = vdwg.mxu0
        %v1474 = vld [vmem:[%s149] sm:$0xff]
        %v1475 = vld [vmem:[%s149 + $0x8] sm:$0xff]
        %v1476 = vld [vmem:[%s149 + $0x10] sm:$0xff]
        %v1477 = vld [vmem:[%s149 + $0x18] sm:$0xff]
        %v1478 = vld [vmem:[%s149 + $0x20] sm:$0xff]
        %v1479 = vld [vmem:[%s149 + $0x28] sm:$0xff]
        %v1480 = vld [vmem:[%s149 + $0x30] sm:$0xff]
        %v1481 = vld [vmem:[%s149 + $0x38] sm:$0xff]
        %v1482 = vld [vmem:[%s149 + $0x40] sm:$0xff]
        %v1483 = vld [vmem:[%s149 + $0x48] sm:$0xff]
        %v1484 = vld [vmem:[%s149 + $0x50] sm:$0xff]
        %v1485 = vld [vmem:[%s149 + $0x58] sm:$0xff]
        %v1486 = vld [vmem:[%s149 + $0x60] sm:$0xff]
        %v1487 = vld [vmem:[%s149 + $0x68] sm:$0xff]
        %v1488 = vld [vmem:[%s149 + $0x70] sm:$0xff]
        %v1489 = vld [vmem:[%s149 + $0x78] sm:$0xff]
        %v1490 = vld [vmem:[%s149 + $0x80] sm:$0xff]
        %v1491 = vld [vmem:[%s149 + $0x88] sm:$0xff]
        %v1492 = vld [vmem:[%s149 + $0x90] sm:$0xff]
        %v1493 = vld [vmem:[%s149 + $0x98] sm:$0xff]
        %v1494 = vld [vmem:[%s149 + $0xa0] sm:$0xff]
        %v1495 = vld [vmem:[%s149 + $0xa8] sm:$0xff]
        %v1496 = vld [vmem:[%s149 + $0xb0] sm:$0xff]
        %v1497 = vld [vmem:[%s149 + $0xb8] sm:$0xff]
        %v1498 = vld [vmem:[%s149 + $0xc0] sm:$0xff]
        %v1499 = vld [vmem:[%s149 + $0xc8] sm:$0xff]
        %v1500 = vld [vmem:[%s149 + $0xd0] sm:$0xff]
        %v1501 = vld [vmem:[%s149 + $0xd8] sm:$0xff]
        %v1502 = vld [vmem:[%s149 + $0xe0] sm:$0xff]
        %v1503 = vld [vmem:[%s149 + $0xe8] sm:$0xff]
        %v1504 = vld [vmem:[%s149 + $0xf0] sm:$0xff]
        %v1505 = vld [vmem:[%s149 + $0xf8] sm:$0xff]
        %v1506 = vadd.f32 %v1474, %v1380
        %v1507 = vadd.f32 %v1475, %v1382
        %v1508 = vadd.f32 %v1476, %v1386
        %v1509 = vadd.f32 %v1477, %v1388
        %v1510 = vadd.f32 %v1478, %v1392
        %v1511 = vadd.f32 %v1479, %v1394
        %v1512 = vadd.f32 %v1480, %v1398
        %v1513 = vadd.f32 %v1481, %v1400
        %v1514 = vadd.f32 %v1482, %v1404
        %v1515 = vadd.f32 %v1483, %v1406
        %v1516 = vadd.f32 %v1484, %v1410
        %v1517 = vadd.f32 %v1485, %v1412
        %v1518 = vadd.f32 %v1486, %v1416
        %v1519 = vadd.f32 %v1487, %v1418
        %v1520 = vadd.f32 %v1488, %v1422
        %v1521 = vadd.f32 %v1489, %v1424
        %v1522 = vadd.f32 %v1490, %v1428
        %v1523 = vadd.f32 %v1491, %v1430
        %v1524 = vadd.f32 %v1492, %v1434
        %v1525 = vadd.f32 %v1493, %v1436
        %v1526 = vadd.f32 %v1494, %v1440
        %v1527 = vadd.f32 %v1495, %v1442
        %v1528 = vadd.f32 %v1496, %v1446
        %v1529 = vadd.f32 %v1497, %v1448
        %v1530 = vadd.f32 %v1498, %v1452
        %v1531 = vadd.f32 %v1499, %v1454
        %v1532 = vadd.f32 %v1500, %v1458
        %v1533 = vadd.f32 %v1501, %v1460
        %v1534 = vadd.f32 %v1502, %v1464
        %v1535 = vadd.f32 %v1503, %v1466
        %v1536 = vadd.f32 %v1504, %v1470
        %v1537 = vadd.f32 %v1505, %v1472
        %1538 = vst [vmem:[%s149] sm:$0xff] %v1506
        %1539 = vst [vmem:[%s149 + $0x8] sm:$0xff] %v1507
        %1540 = vst [vmem:[%s149 + $0x10] sm:$0xff] %v1508
        %1541 = vst [vmem:[%s149 + $0x18] sm:$0xff] %v1509
        %1542 = vst [vmem:[%s149 + $0x20] sm:$0xff] %v1510
        %1543 = vst [vmem:[%s149 + $0x28] sm:$0xff] %v1511
        %1544 = vst [vmem:[%s149 + $0x30] sm:$0xff] %v1512
        %1545 = vst [vmem:[%s149 + $0x38] sm:$0xff] %v1513
        %1546 = vst [vmem:[%s149 + $0x40] sm:$0xff] %v1514
        %1547 = vst [vmem:[%s149 + $0x48] sm:$0xff] %v1515
        %1548 = vst [vmem:[%s149 + $0x50] sm:$0xff] %v1516
        %1549 = vst [vmem:[%s149 + $0x58] sm:$0xff] %v1517
        %1550 = vst [vmem:[%s149 + $0x60] sm:$0xff] %v1518
        %1551 = vst [vmem:[%s149 + $0x68] sm:$0xff] %v1519
        %1552 = vst [vmem:[%s149 + $0x70] sm:$0xff] %v1520
        %1553 = vst [vmem:[%s149 + $0x78] sm:$0xff] %v1521
        %1554 = vst [vmem:[%s149 + $0x80] sm:$0xff] %v1522
        %1555 = vst [vmem:[%s149 + $0x88] sm:$0xff] %v1523
        %1556 = vst [vmem:[%s149 + $0x90] sm:$0xff] %v1524
        %1557 = vst [vmem:[%s149 + $0x98] sm:$0xff] %v1525
        %1558 = vst [vmem:[%s149 + $0xa0] sm:$0xff] %v1526
        %1559 = vst [vmem:[%s149 + $0xa8] sm:$0xff] %v1527
        %1560 = vst [vmem:[%s149 + $0xb0] sm:$0xff] %v1528
        %1561 = vst [vmem:[%s149 + $0xb8] sm:$0xff] %v1529
        %1562 = vst [vmem:[%s149 + $0xc0] sm:$0xff] %v1530
        %1563 = vst [vmem:[%s149 + $0xc8] sm:$0xff] %v1531
        %1564 = vst [vmem:[%s149 + $0xd0] sm:$0xff] %v1532
        %1565 = vst [vmem:[%s149 + $0xd8] sm:$0xff] %v1533
        %1566 = vst [vmem:[%s149 + $0xe0] sm:$0xff] %v1534
        %1567 = vst [vmem:[%s149 + $0xe8] sm:$0xff] %v1535
        %1568 = vst [vmem:[%s149 + $0xf0] sm:$0xff] %v1536
        %1569 = vst [vmem:[%s149 + $0xf8] sm:$0xff] %v1537
        %1570 = vmatprep.subr.mxu0 %v183
        %1571 = vmatpush1.msra.mxu0 %v182
        %1572 = vmatprep.subr.mxu0 %v181
        %1573 = vmatpush1.msra.mxu0 %v180
        %1574 = vmatprep.subr.mxu0 %v179
        %1575 = vmatpush1.msra.mxu0 %v178
        %1576 = vmatprep.subr.mxu0 %v177
        %1577 = vmatpush1.msra.mxu0 %v176
        %1578 = vmatprep.subr.mxu0 %v175
        %1579 = vmatpush1.msra.mxu0 %v174
        %1580 = vmatprep.subr.mxu0 %v173
        %1581 = vmatpush1.msra.mxu0 %v172
        %1582 = vmatprep.subr.mxu0 %v171
        %1583 = vmatpush1.msra.mxu0 %v170
        %1584 = vmatprep.subr.mxu0 %v169
        %1585 = vmatpush1.msra.mxu0 %v168
        %1586 = vmatprep.subr.mxu0 %v167
        %1587 = vmatpush1.msra.mxu0 %v166
        %1588 = vmatprep.subr.mxu0 %v165
        %1589 = vmatpush1.msra.mxu0 %v164
        %1590 = vmatprep.subr.mxu0 %v163
        %1591 = vmatpush1.msra.mxu0 %v162
        %1592 = vmatprep.subr.mxu0 %v161
        %1593 = vmatpush1.msra.mxu0 %v160
        %1594 = vmatprep.subr.mxu0 %v159
        %1595 = vmatpush1.msra.mxu0 %v158
        %1596 = vmatprep.subr.mxu0 %v157
        %1597 = vmatpush1.msra.mxu0 %v156
        %1598 = vmatprep.subr.mxu0 %v155
        %1599 = vmatpush1.msra.mxu0 %v154
        %1600 = vmatprep.subr.mxu0 %v153
        %1601 = vmatpush1.msra.mxu0 %v152
        %1602 = vmatprep.subr.mxu0 %v215
        %1603 = vmatpush2.msra.mxu0 %v214
        %1604 = vmatprep.subr.mxu0 %v213
        %1605 = vmatpush2.msra.mxu0 %v212
        %1606 = vmatprep.subr.mxu0 %v211
        %1607 = vmatpush2.msra.mxu0 %v210
        %1608 = vmatprep.subr.mxu0 %v209
        %1609 = vmatpush2.msra.mxu0 %v208
        %1610 = vmatprep.subr.mxu0 %v207
        %1611 = vmatpush2.msra.mxu0 %v206
        %1612 = vmatprep.subr.mxu0 %v205
        %1613 = vmatpush2.msra.mxu0 %v204
        %1614 = vmatprep.subr.mxu0 %v203
        %1615 = vmatpush2.msra.mxu0 %v202
        %1616 = vmatprep.subr.mxu0 %v201
        %1617 = vmatpush2.msra.mxu0 %v200
        %1618 = vmatprep.subr.mxu0 %v199
        %1619 = vmatpush2.msra.mxu0 %v198
        %1620 = vmatprep.subr.mxu0 %v197
        %1621 = vmatpush2.msra.mxu0 %v196
        %1622 = vmatprep.subr.mxu0 %v195
        %1623 = vmatpush2.msra.mxu0 %v194
        %1624 = vmatprep.subr.mxu0 %v193
        %1625 = vmatpush2.msra.mxu0 %v192
        %1626 = vmatprep.subr.mxu0 %v191
        %1627 = vmatpush2.msra.mxu0 %v190
        %1628 = vmatprep.subr.mxu0 %v189
        %1629 = vmatpush2.msra.mxu0 %v188
        %1630 = vmatprep.subr.mxu0 %v187
        %1631 = vmatpush2.msra.mxu0 %v186
        %1632 = vmatprep.subr.mxu0 %v185
        %1633 = vmatpush2.msra.mxu0 %v184
        %1634 = vmatprep.mubr.f32.mxu0 %v1382
        %1635 = vmatmul.mubr.f32.gmra.mxu0 %v1380
        %v1636 = vpop.f32.mrf.mxu0
        %v1637 = vadd.f32 0.0, %v1636
        %v1638 = vpop.f32.mrf.mxu0
        %v1639 = vadd.f32 0.0, %v1638
        %1640 = vmatprep.mubr.f32.mxu0 %v1388
        %1641 = vmatmul.mubr.f32.gmra.mxu0 %v1386
        %v1642 = vpop.f32.mrf.mxu0
        %v1643 = vadd.f32 0.0, %v1642
        %v1644 = vpop.f32.mrf.mxu0
        %v1645 = vadd.f32 0.0, %v1644
        %1646 = vmatprep.mubr.f32.mxu0 %v1394
        %1647 = vmatmul.mubr.f32.gmra.mxu0 %v1392
        %v1648 = vpop.f32.mrf.mxu0
        %v1649 = vadd.f32 0.0, %v1648
        %v1650 = vpop.f32.mrf.mxu0
        %v1651 = vadd.f32 0.0, %v1650
        %1652 = vmatprep.mubr.f32.mxu0 %v1400
        %1653 = vmatmul.mubr.f32.gmra.mxu0 %v1398
        %v1654 = vpop.f32.mrf.mxu0
        %v1655 = vadd.f32 0.0, %v1654
        %v1656 = vpop.f32.mrf.mxu0
        %v1657 = vadd.f32 0.0, %v1656
        %1658 = vmatprep.mubr.f32.mxu0 %v1406
        %1659 = vmatmul.mubr.f32.gmra.mxu0 %v1404
        %v1660 = vpop.f32.mrf.mxu0
        %v1661 = vadd.f32 0.0, %v1660
        %v1662 = vpop.f32.mrf.mxu0
        %v1663 = vadd.f32 0.0, %v1662
        %1664 = vmatprep.mubr.f32.mxu0 %v1412
        %1665 = vmatmul.mubr.f32.gmra.mxu0 %v1410
        %v1666 = vpop.f32.mrf.mxu0
        %v1667 = vadd.f32 0.0, %v1666
        %v1668 = vpop.f32.mrf.mxu0
        %v1669 = vadd.f32 0.0, %v1668
        %1670 = vmatprep.mubr.f32.mxu0 %v1418
        %1671 = vmatmul.mubr.f32.gmra.mxu0 %v1416
        %v1672 = vpop.f32.mrf.mxu0
        %v1673 = vadd.f32 0.0, %v1672
        %v1674 = vpop.f32.mrf.mxu0
        %v1675 = vadd.f32 0.0, %v1674
        %1676 = vmatprep.mubr.f32.mxu0 %v1424
        %1677 = vmatmul.mubr.f32.gmra.mxu0 %v1422
        %v1678 = vpop.f32.mrf.mxu0
        %v1679 = vadd.f32 0.0, %v1678
        %v1680 = vpop.f32.mrf.mxu0
        %v1681 = vadd.f32 0.0, %v1680
        %1682 = vmatprep.mubr.f32.mxu0 %v1430
        %1683 = vmatmul.mubr.f32.gmra.mxu0 %v1428
        %v1684 = vpop.f32.mrf.mxu0
        %v1685 = vadd.f32 0.0, %v1684
        %v1686 = vpop.f32.mrf.mxu0
        %v1687 = vadd.f32 0.0, %v1686
        %1688 = vmatprep.mubr.f32.mxu0 %v1436
        %1689 = vmatmul.mubr.f32.gmra.mxu0 %v1434
        %v1690 = vpop.f32.mrf.mxu0
        %v1691 = vadd.f32 0.0, %v1690
        %v1692 = vpop.f32.mrf.mxu0
        %v1693 = vadd.f32 0.0, %v1692
        %1694 = vmatprep.mubr.f32.mxu0 %v1442
        %1695 = vmatmul.mubr.f32.gmra.mxu0 %v1440
        %v1696 = vpop.f32.mrf.mxu0
        %v1697 = vadd.f32 0.0, %v1696
        %v1698 = vpop.f32.mrf.mxu0
        %v1699 = vadd.f32 0.0, %v1698
        %1700 = vmatprep.mubr.f32.mxu0 %v1448
        %1701 = vmatmul.mubr.f32.gmra.mxu0 %v1446
        %v1702 = vpop.f32.mrf.mxu0
        %v1703 = vadd.f32 0.0, %v1702
        %v1704 = vpop.f32.mrf.mxu0
        %v1705 = vadd.f32 0.0, %v1704
        %1706 = vmatprep.mubr.f32.mxu0 %v1454
        %1707 = vmatmul.mubr.f32.gmra.mxu0 %v1452
        %v1708 = vpop.f32.mrf.mxu0
        %v1709 = vadd.f32 0.0, %v1708
        %v1710 = vpop.f32.mrf.mxu0
        %v1711 = vadd.f32 0.0, %v1710
        %1712 = vmatprep.mubr.f32.mxu0 %v1460
        %1713 = vmatmul.mubr.f32.gmra.mxu0 %v1458
        %v1714 = vpop.f32.mrf.mxu0
        %v1715 = vadd.f32 0.0, %v1714
        %v1716 = vpop.f32.mrf.mxu0
        %v1717 = vadd.f32 0.0, %v1716
        %1718 = vmatprep.mubr.f32.mxu0 %v1466
        %1719 = vmatmul.mubr.f32.gmra.mxu0 %v1464
        %v1720 = vpop.f32.mrf.mxu0
        %v1721 = vadd.f32 0.0, %v1720
        %v1722 = vpop.f32.mrf.mxu0
        %v1723 = vadd.f32 0.0, %v1722
        %1724 = vmatprep.mubr.f32.mxu0 %v1472
        %1725 = vmatmul.mubr.f32.gmra.mxu0 %v1470
        %v1726 = vpop.f32.mrf.mxu0
        %v1727 = vadd.f32 0.0, %v1726
        %v1728 = vpop.f32.mrf.mxu0
        %v1729 = vadd.f32 0.0, %v1728
        %1730 = vdwg.mxu0
        %v1731 = vld [vmem:[%s149] sm:$0xff]
        %v1732 = vld [vmem:[%s149 + $0x8] sm:$0xff]
        %v1733 = vld [vmem:[%s149 + $0x10] sm:$0xff]
        %v1734 = vld [vmem:[%s149 + $0x18] sm:$0xff]
        %v1735 = vld [vmem:[%s149 + $0x20] sm:$0xff]
        %v1736 = vld [vmem:[%s149 + $0x28] sm:$0xff]
        %v1737 = vld [vmem:[%s149 + $0x30] sm:$0xff]
        %v1738 = vld [vmem:[%s149 + $0x38] sm:$0xff]
        %v1739 = vld [vmem:[%s149 + $0x40] sm:$0xff]
        %v1740 = vld [vmem:[%s149 + $0x48] sm:$0xff]
        %v1741 = vld [vmem:[%s149 + $0x50] sm:$0xff]
        %v1742 = vld [vmem:[%s149 + $0x58] sm:$0xff]
        %v1743 = vld [vmem:[%s149 + $0x60] sm:$0xff]
        %v1744 = vld [vmem:[%s149 + $0x68] sm:$0xff]
        %v1745 = vld [vmem:[%s149 + $0x70] sm:$0xff]
        %v1746 = vld [vmem:[%s149 + $0x78] sm:$0xff]
        %v1747 = vld [vmem:[%s149 + $0x80] sm:$0xff]
        %v1748 = vld [vmem:[%s149 + $0x88] sm:$0xff]
        %v1749 = vld [vmem:[%s149 + $0x90] sm:$0xff]
        %v1750 = vld [vmem:[%s149 + $0x98] sm:$0xff]
        %v1751 = vld [vmem:[%s149 + $0xa0] sm:$0xff]
        %v1752 = vld [vmem:[%s149 + $0xa8] sm:$0xff]
        %v1753 = vld [vmem:[%s149 + $0xb0] sm:$0xff]
        %v1754 = vld [vmem:[%s149 + $0xb8] sm:$0xff]
        %v1755 = vld [vmem:[%s149 + $0xc0] sm:$0xff]
        %v1756 = vld [vmem:[%s149 + $0xc8] sm:$0xff]
        %v1757 = vld [vmem:[%s149 + $0xd0] sm:$0xff]
        %v1758 = vld [vmem:[%s149 + $0xd8] sm:$0xff]
        %v1759 = vld [vmem:[%s149 + $0xe0] sm:$0xff]
        %v1760 = vld [vmem:[%s149 + $0xe8] sm:$0xff]
        %v1761 = vld [vmem:[%s149 + $0xf0] sm:$0xff]
        %v1762 = vld [vmem:[%s149 + $0xf8] sm:$0xff]
        %v1763 = vadd.f32 %v1731, %v1637
        %v1764 = vadd.f32 %v1732, %v1639
        %v1765 = vadd.f32 %v1733, %v1643
        %v1766 = vadd.f32 %v1734, %v1645
        %v1767 = vadd.f32 %v1735, %v1649
        %v1768 = vadd.f32 %v1736, %v1651
        %v1769 = vadd.f32 %v1737, %v1655
        %v1770 = vadd.f32 %v1738, %v1657
        %v1771 = vadd.f32 %v1739, %v1661
        %v1772 = vadd.f32 %v1740, %v1663
        %v1773 = vadd.f32 %v1741, %v1667
        %v1774 = vadd.f32 %v1742, %v1669
        %v1775 = vadd.f32 %v1743, %v1673
        %v1776 = vadd.f32 %v1744, %v1675
        %v1777 = vadd.f32 %v1745, %v1679
        %v1778 = vadd.f32 %v1746, %v1681
        %v1779 = vadd.f32 %v1747, %v1685
        %v1780 = vadd.f32 %v1748, %v1687
        %v1781 = vadd.f32 %v1749, %v1691
        %v1782 = vadd.f32 %v1750, %v1693
        %v1783 = vadd.f32 %v1751, %v1697
        %v1784 = vadd.f32 %v1752, %v1699
        %v1785 = vadd.f32 %v1753, %v1703
        %v1786 = vadd.f32 %v1754, %v1705
        %v1787 = vadd.f32 %v1755, %v1709
        %v1788 = vadd.f32 %v1756, %v1711
        %v1789 = vadd.f32 %v1757, %v1715
        %v1790 = vadd.f32 %v1758, %v1717
        %v1791 = vadd.f32 %v1759, %v1721
        %v1792 = vadd.f32 %v1760, %v1723
        %v1793 = vadd.f32 %v1761, %v1727
        %v1794 = vadd.f32 %v1762, %v1729
        %1795 = vst [vmem:[%s149] sm:$0xff] %v1763
        %1796 = vst [vmem:[%s149 + $0x8] sm:$0xff] %v1764
        %1797 = vst [vmem:[%s149 + $0x10] sm:$0xff] %v1765
        %1798 = vst [vmem:[%s149 + $0x18] sm:$0xff] %v1766
        %1799 = vst [vmem:[%s149 + $0x20] sm:$0xff] %v1767
        %1800 = vst [vmem:[%s149 + $0x28] sm:$0xff] %v1768
        %1801 = vst [vmem:[%s149 + $0x30] sm:$0xff] %v1769
        %1802 = vst [vmem:[%s149 + $0x38] sm:$0xff] %v1770
        %1803 = vst [vmem:[%s149 + $0x40] sm:$0xff] %v1771
        %1804 = vst [vmem:[%s149 + $0x48] sm:$0xff] %v1772
        %1805 = vst [vmem:[%s149 + $0x50] sm:$0xff] %v1773
        %1806 = vst [vmem:[%s149 + $0x58] sm:$0xff] %v1774
        %1807 = vst [vmem:[%s149 + $0x60] sm:$0xff] %v1775
        %1808 = vst [vmem:[%s149 + $0x68] sm:$0xff] %v1776
        %1809 = vst [vmem:[%s149 + $0x70] sm:$0xff] %v1777
        %1810 = vst [vmem:[%s149 + $0x78] sm:$0xff] %v1778
        %1811 = vst [vmem:[%s149 + $0x80] sm:$0xff] %v1779
        %1812 = vst [vmem:[%s149 + $0x88] sm:$0xff] %v1780
        %1813 = vst [vmem:[%s149 + $0x90] sm:$0xff] %v1781
        %1814 = vst [vmem:[%s149 + $0x98] sm:$0xff] %v1782
        %1815 = vst [vmem:[%s149 + $0xa0] sm:$0xff] %v1783
        %1816 = vst [vmem:[%s149 + $0xa8] sm:$0xff] %v1784
        %1817 = vst [vmem:[%s149 + $0xb0] sm:$0xff] %v1785
        %1818 = vst [vmem:[%s149 + $0xb8] sm:$0xff] %v1786
        %1819 = vst [vmem:[%s149 + $0xc0] sm:$0xff] %v1787
        %1820 = vst [vmem:[%s149 + $0xc8] sm:$0xff] %v1788
        %1821 = vst [vmem:[%s149 + $0xd0] sm:$0xff] %v1789
        %1822 = vst [vmem:[%s149 + $0xd8] sm:$0xff] %v1790
        %1823 = vst [vmem:[%s149 + $0xe0] sm:$0xff] %v1791
        %1824 = vst [vmem:[%s149 + $0xe8] sm:$0xff] %v1792
        %1825 = vst [vmem:[%s149 + $0xf0] sm:$0xff] %v1793
        %1826 = vst [vmem:[%s149 + $0xf8] sm:$0xff] %v1794
        %1827 = vmatprep.subr.mxu0 %v183
        %1828 = vmatpush1.msra.mxu0 %v182
        %1829 = vmatprep.subr.mxu0 %v181
        %1830 = vmatpush1.msra.mxu0 %v180
        %1831 = vmatprep.subr.mxu0 %v179
        %1832 = vmatpush1.msra.mxu0 %v178
        %1833 = vmatprep.subr.mxu0 %v177
        %1834 = vmatpush1.msra.mxu0 %v176
        %1835 = vmatprep.subr.mxu0 %v175
        %1836 = vmatpush1.msra.mxu0 %v174
        %1837 = vmatprep.subr.mxu0 %v173
        %1838 = vmatpush1.msra.mxu0 %v172
        %1839 = vmatprep.subr.mxu0 %v171
        %1840 = vmatpush1.msra.mxu0 %v170
        %1841 = vmatprep.subr.mxu0 %v169
        %1842 = vmatpush1.msra.mxu0 %v168
        %1843 = vmatprep.subr.mxu0 %v167
        %1844 = vmatpush1.msra.mxu0 %v166
        %1845 = vmatprep.subr.mxu0 %v165
        %1846 = vmatpush1.msra.mxu0 %v164
        %1847 = vmatprep.subr.mxu0 %v163
        %1848 = vmatpush1.msra.mxu0 %v162
        %1849 = vmatprep.subr.mxu0 %v161
        %1850 = vmatpush1.msra.mxu0 %v160
        %1851 = vmatprep.subr.mxu0 %v159
        %1852 = vmatpush1.msra.mxu0 %v158
        %1853 = vmatprep.subr.mxu0 %v157
        %1854 = vmatpush1.msra.mxu0 %v156
        %1855 = vmatprep.subr.mxu0 %v155
        %1856 = vmatpush1.msra.mxu0 %v154
        %1857 = vmatprep.subr.mxu0 %v153
        %1858 = vmatpush1.msra.mxu0 %v152
        %1859 = vmatprep.subr.mxu0 %v215
        %1860 = vmatpush2.msra.mxu0 %v214
        %1861 = vmatprep.subr.mxu0 %v213
        %1862 = vmatpush2.msra.mxu0 %v212
        %1863 = vmatprep.subr.mxu0 %v211
        %1864 = vmatpush2.msra.mxu0 %v210
        %1865 = vmatprep.subr.mxu0 %v209
        %1866 = vmatpush2.msra.mxu0 %v208
        %1867 = vmatprep.subr.mxu0 %v207
        %1868 = vmatpush2.msra.mxu0 %v206
        %1869 = vmatprep.subr.mxu0 %v205
        %1870 = vmatpush2.msra.mxu0 %v204
        %1871 = vmatprep.subr.mxu0 %v203
        %1872 = vmatpush2.msra.mxu0 %v202
        %1873 = vmatprep.subr.mxu0 %v201
        %1874 = vmatpush2.msra.mxu0 %v200
        %1875 = vmatprep.subr.mxu0 %v199
        %1876 = vmatpush2.msra.mxu0 %v198
        %1877 = vmatprep.subr.mxu0 %v197
        %1878 = vmatpush2.msra.mxu0 %v196
        %1879 = vmatprep.subr.mxu0 %v195
        %1880 = vmatpush2.msra.mxu0 %v194
        %1881 = vmatprep.subr.mxu0 %v193
        %1882 = vmatpush2.msra.mxu0 %v192
        %1883 = vmatprep.subr.mxu0 %v191
        %1884 = vmatpush2.msra.mxu0 %v190
        %1885 = vmatprep.subr.mxu0 %v189
        %1886 = vmatpush2.msra.mxu0 %v188
        %1887 = vmatprep.subr.mxu0 %v187
        %1888 = vmatpush2.msra.mxu0 %v186
        %1889 = vmatprep.subr.mxu0 %v185
        %1890 = vmatpush2.msra.mxu0 %v184
        %1891 = vmatprep.mubr.f32.mxu0 %v1639
        %1892 = vmatmul.mubr.f32.gmra.mxu0 %v1637
        %v1893 = vpop.f32.mrf.mxu0
        %v1894 = vadd.f32 0.0, %v1893
        %v1895 = vpop.f32.mrf.mxu0
        %v1896 = vadd.f32 0.0, %v1895
        %1897 = vmatprep.mubr.f32.mxu0 %v1645
        %1898 = vmatmul.mubr.f32.gmra.mxu0 %v1643
        %v1899 = vpop.f32.mrf.mxu0
        %v1900 = vadd.f32 0.0, %v1899
        %v1901 = vpop.f32.mrf.mxu0
        %v1902 = vadd.f32 0.0, %v1901
        %1903 = vmatprep.mubr.f32.mxu0 %v1651
        %1904 = vmatmul.mubr.f32.gmra.mxu0 %v1649
        %v1905 = vpop.f32.mrf.mxu0
        %v1906 = vadd.f32 0.0, %v1905
        %v1907 = vpop.f32.mrf.mxu0
        %v1908 = vadd.f32 0.0, %v1907
        %1909 = vmatprep.mubr.f32.mxu0 %v1657
        %1910 = vmatmul.mubr.f32.gmra.mxu0 %v1655
        %v1911 = vpop.f32.mrf.mxu0
        %v1912 = vadd.f32 0.0, %v1911
        %v1913 = vpop.f32.mrf.mxu0
        %v1914 = vadd.f32 0.0, %v1913
        %1915 = vmatprep.mubr.f32.mxu0 %v1663
        %1916 = vmatmul.mubr.f32.gmra.mxu0 %v1661
        %v1917 = vpop.f32.mrf.mxu0
        %v1918 = vadd.f32 0.0, %v1917
        %v1919 = vpop.f32.mrf.mxu0
        %v1920 = vadd.f32 0.0, %v1919
        %1921 = vmatprep.mubr.f32.mxu0 %v1669
        %1922 = vmatmul.mubr.f32.gmra.mxu0 %v1667
        %v1923 = vpop.f32.mrf.mxu0
        %v1924 = vadd.f32 0.0, %v1923
        %v1925 = vpop.f32.mrf.mxu0
        %v1926 = vadd.f32 0.0, %v1925
        %1927 = vmatprep.mubr.f32.mxu0 %v1675
        %1928 = vmatmul.mubr.f32.gmra.mxu0 %v1673
        %v1929 = vpop.f32.mrf.mxu0
        %v1930 = vadd.f32 0.0, %v1929
        %v1931 = vpop.f32.mrf.mxu0
        %v1932 = vadd.f32 0.0, %v1931
        %1933 = vmatprep.mubr.f32.mxu0 %v1681
        %1934 = vmatmul.mubr.f32.gmra.mxu0 %v1679
        %v1935 = vpop.f32.mrf.mxu0
        %v1936 = vadd.f32 0.0, %v1935
        %v1937 = vpop.f32.mrf.mxu0
        %v1938 = vadd.f32 0.0, %v1937
        %1939 = vmatprep.mubr.f32.mxu0 %v1687
        %1940 = vmatmul.mubr.f32.gmra.mxu0 %v1685
        %v1941 = vpop.f32.mrf.mxu0
        %v1942 = vadd.f32 0.0, %v1941
        %v1943 = vpop.f32.mrf.mxu0
        %v1944 = vadd.f32 0.0, %v1943
        %1945 = vmatprep.mubr.f32.mxu0 %v1693
        %1946 = vmatmul.mubr.f32.gmra.mxu0 %v1691
        %v1947 = vpop.f32.mrf.mxu0
        %v1948 = vadd.f32 0.0, %v1947
        %v1949 = vpop.f32.mrf.mxu0
        %v1950 = vadd.f32 0.0, %v1949
        %1951 = vmatprep.mubr.f32.mxu0 %v1699
        %1952 = vmatmul.mubr.f32.gmra.mxu0 %v1697
        %v1953 = vpop.f32.mrf.mxu0
        %v1954 = vadd.f32 0.0, %v1953
        %v1955 = vpop.f32.mrf.mxu0
        %v1956 = vadd.f32 0.0, %v1955
        %1957 = vmatprep.mubr.f32.mxu0 %v1705
        %1958 = vmatmul.mubr.f32.gmra.mxu0 %v1703
        %v1959 = vpop.f32.mrf.mxu0
        %v1960 = vadd.f32 0.0, %v1959
        %v1961 = vpop.f32.mrf.mxu0
        %v1962 = vadd.f32 0.0, %v1961
        %1963 = vmatprep.mubr.f32.mxu0 %v1711
        %1964 = vmatmul.mubr.f32.gmra.mxu0 %v1709
        %v1965 = vpop.f32.mrf.mxu0
        %v1966 = vadd.f32 0.0, %v1965
        %v1967 = vpop.f32.mrf.mxu0
        %v1968 = vadd.f32 0.0, %v1967
        %1969 = vmatprep.mubr.f32.mxu0 %v1717
        %1970 = vmatmul.mubr.f32.gmra.mxu0 %v1715
        %v1971 = vpop.f32.mrf.mxu0
        %v1972 = vadd.f32 0.0, %v1971
        %v1973 = vpop.f32.mrf.mxu0
        %v1974 = vadd.f32 0.0, %v1973
        %1975 = vmatprep.mubr.f32.mxu0 %v1723
        %1976 = vmatmul.mubr.f32.gmra.mxu0 %v1721
        %v1977 = vpop.f32.mrf.mxu0
        %v1978 = vadd.f32 0.0, %v1977
        %v1979 = vpop.f32.mrf.mxu0
        %v1980 = vadd.f32 0.0, %v1979
        %1981 = vmatprep.mubr.f32.mxu0 %v1729
        %1982 = vmatmul.mubr.f32.gmra.mxu0 %v1727
        %v1983 = vpop.f32.mrf.mxu0
        %v1984 = vadd.f32 0.0, %v1983
        %v1985 = vpop.f32.mrf.mxu0
        %v1986 = vadd.f32 0.0, %v1985
        %1987 = vdwg.mxu0
        %v1988 = vld [vmem:[%s149] sm:$0xff]
        %v1989 = vld [vmem:[%s149 + $0x8] sm:$0xff]
        %v1990 = vld [vmem:[%s149 + $0x10] sm:$0xff]
        %v1991 = vld [vmem:[%s149 + $0x18] sm:$0xff]
        %v1992 = vld [vmem:[%s149 + $0x20] sm:$0xff]
        %v1993 = vld [vmem:[%s149 + $0x28] sm:$0xff]
        %v1994 = vld [vmem:[%s149 + $0x30] sm:$0xff]
        %v1995 = vld [vmem:[%s149 + $0x38] sm:$0xff]
        %v1996 = vld [vmem:[%s149 + $0x40] sm:$0xff]
        %v1997 = vld [vmem:[%s149 + $0x48] sm:$0xff]
        %v1998 = vld [vmem:[%s149 + $0x50] sm:$0xff]
        %v1999 = vld [vmem:[%s149 + $0x58] sm:$0xff]
        %v2000 = vld [vmem:[%s149 + $0x60] sm:$0xff]
        %v2001 = vld [vmem:[%s149 + $0x68] sm:$0xff]
        %v2002 = vld [vmem:[%s149 + $0x70] sm:$0xff]
        %v2003 = vld [vmem:[%s149 + $0x78] sm:$0xff]
        %v2004 = vld [vmem:[%s149 + $0x80] sm:$0xff]
        %v2005 = vld [vmem:[%s149 + $0x88] sm:$0xff]
        %v2006 = vld [vmem:[%s149 + $0x90] sm:$0xff]
        %v2007 = vld [vmem:[%s149 + $0x98] sm:$0xff]
        %v2008 = vld [vmem:[%s149 + $0xa0] sm:$0xff]
        %v2009 = vld [vmem:[%s149 + $0xa8] sm:$0xff]
        %v2010 = vld [vmem:[%s149 + $0xb0] sm:$0xff]
        %v2011 = vld [vmem:[%s149 + $0xb8] sm:$0xff]
        %v2012 = vld [vmem:[%s149 + $0xc0] sm:$0xff]
        %v2013 = vld [vmem:[%s149 + $0xc8] sm:$0xff]
        %v2014 = vld [vmem:[%s149 + $0xd0] sm:$0xff]
        %v2015 = vld [vmem:[%s149 + $0xd8] sm:$0xff]
        %v2016 = vld [vmem:[%s149 + $0xe0] sm:$0xff]
        %v2017 = vld [vmem:[%s149 + $0xe8] sm:$0xff]
        %v2018 = vld [vmem:[%s149 + $0xf0] sm:$0xff]
        %v2019 = vld [vmem:[%s149 + $0xf8] sm:$0xff]
        %v2020 = vadd.f32 %v1988, %v1894
        %v2021 = vadd.f32 %v1989, %v1896
        %v2022 = vadd.f32 %v1990, %v1900
        %v2023 = vadd.f32 %v1991, %v1902
        %v2024 = vadd.f32 %v1992, %v1906
        %v2025 = vadd.f32 %v1993, %v1908
        %v2026 = vadd.f32 %v1994, %v1912
        %v2027 = vadd.f32 %v1995, %v1914
        %v2028 = vadd.f32 %v1996, %v1918
        %v2029 = vadd.f32 %v1997, %v1920
        %v2030 = vadd.f32 %v1998, %v1924
        %v2031 = vadd.f32 %v1999, %v1926
        %v2032 = vadd.f32 %v2000, %v1930
        %v2033 = vadd.f32 %v2001, %v1932
        %v2034 = vadd.f32 %v2002, %v1936
        %v2035 = vadd.f32 %v2003, %v1938
        %v2036 = vadd.f32 %v2004, %v1942
        %v2037 = vadd.f32 %v2005, %v1944
        %v2038 = vadd.f32 %v2006, %v1948
        %v2039 = vadd.f32 %v2007, %v1950
        %v2040 = vadd.f32 %v2008, %v1954
        %v2041 = vadd.f32 %v2009, %v1956
        %v2042 = vadd.f32 %v2010, %v1960
        %v2043 = vadd.f32 %v2011, %v1962
        %v2044 = vadd.f32 %v2012, %v1966
        %v2045 = vadd.f32 %v2013, %v1968
        %v2046 = vadd.f32 %v2014, %v1972
        %v2047 = vadd.f32 %v2015, %v1974
        %v2048 = vadd.f32 %v2016, %v1978
        %v2049 = vadd.f32 %v2017, %v1980
        %v2050 = vadd.f32 %v2018, %v1984
        %v2051 = vadd.f32 %v2019, %v1986
        %2052 = vst [vmem:[%s149] sm:$0xff] %v2020
        %2053 = vst [vmem:[%s149 + $0x8] sm:$0xff] %v2021
        %2054 = vst [vmem:[%s149 + $0x10] sm:$0xff] %v2022
        %2055 = vst [vmem:[%s149 + $0x18] sm:$0xff] %v2023
        %2056 = vst [vmem:[%s149 + $0x20] sm:$0xff] %v2024
        %2057 = vst [vmem:[%s149 + $0x28] sm:$0xff] %v2025
        %2058 = vst [vmem:[%s149 + $0x30] sm:$0xff] %v2026
        %2059 = vst [vmem:[%s149 + $0x38] sm:$0xff] %v2027
        %2060 = vst [vmem:[%s149 + $0x40] sm:$0xff] %v2028
        %2061 = vst [vmem:[%s149 + $0x48] sm:$0xff] %v2029
        %2062 = vst [vmem:[%s149 + $0x50] sm:$0xff] %v2030
        %2063 = vst [vmem:[%s149 + $0x58] sm:$0xff] %v2031
        %2064 = vst [vmem:[%s149 + $0x60] sm:$0xff] %v2032
        %2065 = vst [vmem:[%s149 + $0x68] sm:$0xff] %v2033
        %2066 = vst [vmem:[%s149 + $0x70] sm:$0xff] %v2034
        %2067 = vst [vmem:[%s149 + $0x78] sm:$0xff] %v2035
        %2068 = vst [vmem:[%s149 + $0x80] sm:$0xff] %v2036
        %2069 = vst [vmem:[%s149 + $0x88] sm:$0xff] %v2037
        %2070 = vst [vmem:[%s149 + $0x90] sm:$0xff] %v2038
        %2071 = vst [vmem:[%s149 + $0x98] sm:$0xff] %v2039
        %2072 = vst [vmem:[%s149 + $0xa0] sm:$0xff] %v2040
        %2073 = vst [vmem:[%s149 + $0xa8] sm:$0xff] %v2041
        %2074 = vst [vmem:[%s149 + $0xb0] sm:$0xff] %v2042
        %2075 = vst [vmem:[%s149 + $0xb8] sm:$0xff] %v2043
        %2076 = vst [vmem:[%s149 + $0xc0] sm:$0xff] %v2044
        %2077 = vst [vmem:[%s149 + $0xc8] sm:$0xff] %v2045
        %2078 = vst [vmem:[%s149 + $0xd0] sm:$0xff] %v2046
        %2079 = vst [vmem:[%s149 + $0xd8] sm:$0xff] %v2047
        %2080 = vst [vmem:[%s149 + $0xe0] sm:$0xff] %v2048
        %2081 = vst [vmem:[%s149 + $0xe8] sm:$0xff] %v2049
        %2082 = vst [vmem:[%s149 + $0xf0] sm:$0xff] %v2050
        %2083 = vst [vmem:[%s149 + $0xf8] sm:$0xff] %v2051
        %2084 = vmatprep.subr.mxu0 %v183
        %2085 = vmatpush1.msra.mxu0 %v182
        %2086 = vmatprep.subr.mxu0 %v181
        %2087 = vmatpush1.msra.mxu0 %v180
        %2088 = vmatprep.subr.mxu0 %v179
        %2089 = vmatpush1.msra.mxu0 %v178
        %2090 = vmatprep.subr.mxu0 %v177
        %2091 = vmatpush1.msra.mxu0 %v176
        %2092 = vmatprep.subr.mxu0 %v175
        %2093 = vmatpush1.msra.mxu0 %v174
        %2094 = vmatprep.subr.mxu0 %v173
        %2095 = vmatpush1.msra.mxu0 %v172
        %2096 = vmatprep.subr.mxu0 %v171
        %2097 = vmatpush1.msra.mxu0 %v170
        %2098 = vmatprep.subr.mxu0 %v169
        %2099 = vmatpush1.msra.mxu0 %v168
        %2100 = vmatprep.subr.mxu0 %v167
        %2101 = vmatpush1.msra.mxu0 %v166
        %2102 = vmatprep.subr.mxu0 %v165
        %2103 = vmatpush1.msra.mxu0 %v164
        %2104 = vmatprep.subr.mxu0 %v163
        %2105 = vmatpush1.msra.mxu0 %v162
        %2106 = vmatprep.subr.mxu0 %v161
        %2107 = vmatpush1.msra.mxu0 %v160
        %2108 = vmatprep.subr.mxu0 %v159
        %2109 = vmatpush1.msra.mxu0 %v158
        %2110 = vmatprep.subr.mxu0 %v157
        %2111 = vmatpush1.msra.mxu0 %v156
        %2112 = vmatprep.subr.mxu0 %v155
        %2113 = vmatpush1.msra.mxu0 %v154
        %2114 = vmatprep.subr.mxu0 %v153
        %2115 = vmatpush1.msra.mxu0 %v152
        %2116 = vmatprep.subr.mxu0 %v215
        %2117 = vmatpush2.msra.mxu0 %v214
        %2118 = vmatprep.subr.mxu0 %v213
        %2119 = vmatpush2.msra.mxu0 %v212
        %2120 = vmatprep.subr.mxu0 %v211
        %2121 = vmatpush2.msra.mxu0 %v210
        %2122 = vmatprep.subr.mxu0 %v209
        %2123 = vmatpush2.msra.mxu0 %v208
        %2124 = vmatprep.subr.mxu0 %v207
        %2125 = vmatpush2.msra.mxu0 %v206
        %2126 = vmatprep.subr.mxu0 %v205
        %2127 = vmatpush2.msra.mxu0 %v204
        %2128 = vmatprep.subr.mxu0 %v203
        %2129 = vmatpush2.msra.mxu0 %v202
        %2130 = vmatprep.subr.mxu0 %v201
        %2131 = vmatpush2.msra.mxu0 %v200
        %2132 = vmatprep.subr.mxu0 %v199
        %2133 = vmatpush2.msra.mxu0 %v198
        %2134 = vmatprep.subr.mxu0 %v197
        %2135 = vmatpush2.msra.mxu0 %v196
        %2136 = vmatprep.subr.mxu0 %v195
        %2137 = vmatpush2.msra.mxu0 %v194
        %2138 = vmatprep.subr.mxu0 %v193
        %2139 = vmatpush2.msra.mxu0 %v192
        %2140 = vmatprep.subr.mxu0 %v191
        %2141 = vmatpush2.msra.mxu0 %v190
        %2142 = vmatprep.subr.mxu0 %v189
        %2143 = vmatpush2.msra.mxu0 %v188
        %2144 = vmatprep.subr.mxu0 %v187
        %2145 = vmatpush2.msra.mxu0 %v186
        %2146 = vmatprep.subr.mxu0 %v185
        %2147 = vmatpush2.msra.mxu0 %v184
        %2148 = vmatprep.mubr.f32.mxu0 %v1896
        %2149 = vmatmul.mubr.f32.gmra.mxu0 %v1894
        %v2150 = vpop.f32.mrf.mxu0
        %v2151 = vadd.f32 0.0, %v2150
        %v2152 = vpop.f32.mrf.mxu0
        %v2153 = vadd.f32 0.0, %v2152
        %2154 = vmatprep.mubr.f32.mxu0 %v1902
        %2155 = vmatmul.mubr.f32.gmra.mxu0 %v1900
        %v2156 = vpop.f32.mrf.mxu0
        %v2157 = vadd.f32 0.0, %v2156
        %v2158 = vpop.f32.mrf.mxu0
        %v2159 = vadd.f32 0.0, %v2158
        %2160 = vmatprep.mubr.f32.mxu0 %v1908
        %2161 = vmatmul.mubr.f32.gmra.mxu0 %v1906
        %v2162 = vpop.f32.mrf.mxu0
        %v2163 = vadd.f32 0.0, %v2162
        %v2164 = vpop.f32.mrf.mxu0
        %v2165 = vadd.f32 0.0, %v2164
        %2166 = vmatprep.mubr.f32.mxu0 %v1914
        %2167 = vmatmul.mubr.f32.gmra.mxu0 %v1912
        %v2168 = vpop.f32.mrf.mxu0
        %v2169 = vadd.f32 0.0, %v2168
        %v2170 = vpop.f32.mrf.mxu0
        %v2171 = vadd.f32 0.0, %v2170
        %2172 = vmatprep.mubr.f32.mxu0 %v1920
        %2173 = vmatmul.mubr.f32.gmra.mxu0 %v1918
        %v2174 = vpop.f32.mrf.mxu0
        %v2175 = vadd.f32 0.0, %v2174
        %v2176 = vpop.f32.mrf.mxu0
        %v2177 = vadd.f32 0.0, %v2176
        %2178 = vmatprep.mubr.f32.mxu0 %v1926
        %2179 = vmatmul.mubr.f32.gmra.mxu0 %v1924
        %v2180 = vpop.f32.mrf.mxu0
        %v2181 = vadd.f32 0.0, %v2180
        %v2182 = vpop.f32.mrf.mxu0
        %v2183 = vadd.f32 0.0, %v2182
        %2184 = vmatprep.mubr.f32.mxu0 %v1932
        %2185 = vmatmul.mubr.f32.gmra.mxu0 %v1930
        %v2186 = vpop.f32.mrf.mxu0
        %v2187 = vadd.f32 0.0, %v2186
        %v2188 = vpop.f32.mrf.mxu0
        %v2189 = vadd.f32 0.0, %v2188
        %2190 = vmatprep.mubr.f32.mxu0 %v1938
        %2191 = vmatmul.mubr.f32.gmra.mxu0 %v1936
        %v2192 = vpop.f32.mrf.mxu0
        %v2193 = vadd.f32 0.0, %v2192
        %v2194 = vpop.f32.mrf.mxu0
        %v2195 = vadd.f32 0.0, %v2194
        %2196 = vmatprep.mubr.f32.mxu0 %v1944
        %2197 = vmatmul.mubr.f32.gmra.mxu0 %v1942
        %v2198 = vpop.f32.mrf.mxu0
        %v2199 = vadd.f32 0.0, %v2198
        %v2200 = vpop.f32.mrf.mxu0
        %v2201 = vadd.f32 0.0, %v2200
        %2202 = vmatprep.mubr.f32.mxu0 %v1950
        %2203 = vmatmul.mubr.f32.gmra.mxu0 %v1948
        %v2204 = vpop.f32.mrf.mxu0
        %v2205 = vadd.f32 0.0, %v2204
        %v2206 = vpop.f32.mrf.mxu0
        %v2207 = vadd.f32 0.0, %v2206
        %2208 = vmatprep.mubr.f32.mxu0 %v1956
        %2209 = vmatmul.mubr.f32.gmra.mxu0 %v1954
        %v2210 = vpop.f32.mrf.mxu0
        %v2211 = vadd.f32 0.0, %v2210
        %v2212 = vpop.f32.mrf.mxu0
        %v2213 = vadd.f32 0.0, %v2212
        %2214 = vmatprep.mubr.f32.mxu0 %v1962
        %2215 = vmatmul.mubr.f32.gmra.mxu0 %v1960
        %v2216 = vpop.f32.mrf.mxu0
        %v2217 = vadd.f32 0.0, %v2216
        %v2218 = vpop.f32.mrf.mxu0
        %v2219 = vadd.f32 0.0, %v2218
        %2220 = vmatprep.mubr.f32.mxu0 %v1968
        %2221 = vmatmul.mubr.f32.gmra.mxu0 %v1966
        %v2222 = vpop.f32.mrf.mxu0
        %v2223 = vadd.f32 0.0, %v2222
        %v2224 = vpop.f32.mrf.mxu0
        %v2225 = vadd.f32 0.0, %v2224
        %2226 = vmatprep.mubr.f32.mxu0 %v1974
        %2227 = vmatmul.mubr.f32.gmra.mxu0 %v1972
        %v2228 = vpop.f32.mrf.mxu0
        %v2229 = vadd.f32 0.0, %v2228
        %v2230 = vpop.f32.mrf.mxu0
        %v2231 = vadd.f32 0.0, %v2230
        %2232 = vmatprep.mubr.f32.mxu0 %v1980
        %2233 = vmatmul.mubr.f32.gmra.mxu0 %v1978
        %v2234 = vpop.f32.mrf.mxu0
        %v2235 = vadd.f32 0.0, %v2234
        %v2236 = vpop.f32.mrf.mxu0
        %v2237 = vadd.f32 0.0, %v2236
        %2238 = vmatprep.mubr.f32.mxu0 %v1986
        %2239 = vmatmul.mubr.f32.gmra.mxu0 %v1984
        %v2240 = vpop.f32.mrf.mxu0
        %v2241 = vadd.f32 0.0, %v2240
        %v2242 = vpop.f32.mrf.mxu0
        %v2243 = vadd.f32 0.0, %v2242
        %2244 = vdwg.mxu0
        %v2245 = vld [vmem:[%s149] sm:$0xff]
        %v2246 = vld [vmem:[%s149 + $0x8] sm:$0xff]
        %v2247 = vld [vmem:[%s149 + $0x10] sm:$0xff]
        %v2248 = vld [vmem:[%s149 + $0x18] sm:$0xff]
        %v2249 = vld [vmem:[%s149 + $0x20] sm:$0xff]
        %v2250 = vld [vmem:[%s149 + $0x28] sm:$0xff]
        %v2251 = vld [vmem:[%s149 + $0x30] sm:$0xff]
        %v2252 = vld [vmem:[%s149 + $0x38] sm:$0xff]
        %v2253 = vld [vmem:[%s149 + $0x40] sm:$0xff]
        %v2254 = vld [vmem:[%s149 + $0x48] sm:$0xff]
        %v2255 = vld [vmem:[%s149 + $0x50] sm:$0xff]
        %v2256 = vld [vmem:[%s149 + $0x58] sm:$0xff]
        %v2257 = vld [vmem:[%s149 + $0x60] sm:$0xff]
        %v2258 = vld [vmem:[%s149 + $0x68] sm:$0xff]
        %v2259 = vld [vmem:[%s149 + $0x70] sm:$0xff]
        %v2260 = vld [vmem:[%s149 + $0x78] sm:$0xff]
        %v2261 = vld [vmem:[%s149 + $0x80] sm:$0xff]
        %v2262 = vld [vmem:[%s149 + $0x88] sm:$0xff]
        %v2263 = vld [vmem:[%s149 + $0x90] sm:$0xff]
        %v2264 = vld [vmem:[%s149 + $0x98] sm:$0xff]
        %v2265 = vld [vmem:[%s149 + $0xa0] sm:$0xff]
        %v2266 = vld [vmem:[%s149 + $0xa8] sm:$0xff]
        %v2267 = vld [vmem:[%s149 + $0xb0] sm:$0xff]
        %v2268 = vld [vmem:[%s149 + $0xb8] sm:$0xff]
        %v2269 = vld [vmem:[%s149 + $0xc0] sm:$0xff]
        %v2270 = vld [vmem:[%s149 + $0xc8] sm:$0xff]
        %v2271 = vld [vmem:[%s149 + $0xd0] sm:$0xff]
        %v2272 = vld [vmem:[%s149 + $0xd8] sm:$0xff]
        %v2273 = vld [vmem:[%s149 + $0xe0] sm:$0xff]
        %v2274 = vld [vmem:[%s149 + $0xe8] sm:$0xff]
        %v2275 = vld [vmem:[%s149 + $0xf0] sm:$0xff]
        %v2276 = vld [vmem:[%s149 + $0xf8] sm:$0xff]
        %v2277 = vadd.f32 %v2245, %v2151
        %v2278 = vadd.f32 %v2246, %v2153
        %v2279 = vadd.f32 %v2247, %v2157
        %v2280 = vadd.f32 %v2248, %v2159
        %v2281 = vadd.f32 %v2249, %v2163
        %v2282 = vadd.f32 %v2250, %v2165
        %v2283 = vadd.f32 %v2251, %v2169
        %v2284 = vadd.f32 %v2252, %v2171
        %v2285 = vadd.f32 %v2253, %v2175
        %v2286 = vadd.f32 %v2254, %v2177
        %v2287 = vadd.f32 %v2255, %v2181
        %v2288 = vadd.f32 %v2256, %v2183
        %v2289 = vadd.f32 %v2257, %v2187
        %v2290 = vadd.f32 %v2258, %v2189
        %v2291 = vadd.f32 %v2259, %v2193
        %v2292 = vadd.f32 %v2260, %v2195
        %v2293 = vadd.f32 %v2261, %v2199
        %v2294 = vadd.f32 %v2262, %v2201
        %v2295 = vadd.f32 %v2263, %v2205
        %v2296 = vadd.f32 %v2264, %v2207
        %v2297 = vadd.f32 %v2265, %v2211
        %v2298 = vadd.f32 %v2266, %v2213
        %v2299 = vadd.f32 %v2267, %v2217
        %v2300 = vadd.f32 %v2268, %v2219
        %v2301 = vadd.f32 %v2269, %v2223
        %v2302 = vadd.f32 %v2270, %v2225
        %v2303 = vadd.f32 %v2271, %v2229
        %v2304 = vadd.f32 %v2272, %v2231
        %v2305 = vadd.f32 %v2273, %v2235
        %v2306 = vadd.f32 %v2274, %v2237
        %v2307 = vadd.f32 %v2275, %v2241
        %v2308 = vadd.f32 %v2276, %v2243
        %2309 = vst [vmem:[%s149] sm:$0xff] %v2277
        %2310 = vst [vmem:[%s149 + $0x8] sm:$0xff] %v2278
        %2311 = vst [vmem:[%s149 + $0x10] sm:$0xff] %v2279
        %2312 = vst [vmem:[%s149 + $0x18] sm:$0xff] %v2280
        %2313 = vst [vmem:[%s149 + $0x20] sm:$0xff] %v2281
        %2314 = vst [vmem:[%s149 + $0x28] sm:$0xff] %v2282
        %2315 = vst [vmem:[%s149 + $0x30] sm:$0xff] %v2283
        %2316 = vst [vmem:[%s149 + $0x38] sm:$0xff] %v2284
        %2317 = vst [vmem:[%s149 + $0x40] sm:$0xff] %v2285
        %2318 = vst [vmem:[%s149 + $0x48] sm:$0xff] %v2286
        %2319 = vst [vmem:[%s149 + $0x50] sm:$0xff] %v2287
        %2320 = vst [vmem:[%s149 + $0x58] sm:$0xff] %v2288
        %2321 = vst [vmem:[%s149 + $0x60] sm:$0xff] %v2289
        %2322 = vst [vmem:[%s149 + $0x68] sm:$0xff] %v2290
        %2323 = vst [vmem:[%s149 + $0x70] sm:$0xff] %v2291
        %2324 = vst [vmem:[%s149 + $0x78] sm:$0xff] %v2292
        %2325 = vst [vmem:[%s149 + $0x80] sm:$0xff] %v2293
        %2326 = vst [vmem:[%s149 + $0x88] sm:$0xff] %v2294
        %2327 = vst [vmem:[%s149 + $0x90] sm:$0xff] %v2295
        %2328 = vst [vmem:[%s149 + $0x98] sm:$0xff] %v2296
        %2329 = vst [vmem:[%s149 + $0xa0] sm:$0xff] %v2297
        %2330 = vst [vmem:[%s149 + $0xa8] sm:$0xff] %v2298
        %2331 = vst [vmem:[%s149 + $0xb0] sm:$0xff] %v2299
        %2332 = vst [vmem:[%s149 + $0xb8] sm:$0xff] %v2300
        %2333 = vst [vmem:[%s149 + $0xc0] sm:$0xff] %v2301
        %2334 = vst [vmem:[%s149 + $0xc8] sm:$0xff] %v2302
        %2335 = vst [vmem:[%s149 + $0xd0] sm:$0xff] %v2303
        %2336 = vst [vmem:[%s149 + $0xd8] sm:$0xff] %v2304
        %2337 = vst [vmem:[%s149 + $0xe0] sm:$0xff] %v2305
        %2338 = vst [vmem:[%s149 + $0xe8] sm:$0xff] %v2306
        %2339 = vst [vmem:[%s149 + $0xf0] sm:$0xff] %v2307
        %2340 = vst [vmem:[%s149 + $0xf8] sm:$0xff] %v2308
        %2341 = vmatprep.subr.mxu0 %v183
        %2342 = vmatpush1.msra.mxu0 %v182
        %2343 = vmatprep.subr.mxu0 %v181
        %2344 = vmatpush1.msra.mxu0 %v180
        %2345 = vmatprep.subr.mxu0 %v179
        %2346 = vmatpush1.msra.mxu0 %v178
        %2347 = vmatprep.subr.mxu0 %v177
        %2348 = vmatpush1.msra.mxu0 %v176
        %2349 = vmatprep.subr.mxu0 %v175
        %2350 = vmatpush1.msra.mxu0 %v174
        %2351 = vmatprep.subr.mxu0 %v173
        %2352 = vmatpush1.msra.mxu0 %v172
        %2353 = vmatprep.subr.mxu0 %v171
        %2354 = vmatpush1.msra.mxu0 %v170
        %2355 = vmatprep.subr.mxu0 %v169
        %2356 = vmatpush1.msra.mxu0 %v168
        %2357 = vmatprep.subr.mxu0 %v167
        %2358 = vmatpush1.msra.mxu0 %v166
        %2359 = vmatprep.subr.mxu0 %v165
        %2360 = vmatpush1.msra.mxu0 %v164
        %2361 = vmatprep.subr.mxu0 %v163
        %2362 = vmatpush1.msra.mxu0 %v162
        %2363 = vmatprep.subr.mxu0 %v161
        %2364 = vmatpush1.msra.mxu0 %v160
        %2365 = vmatprep.subr.mxu0 %v159
        %2366 = vmatpush1.msra.mxu0 %v158
        %2367 = vmatprep.subr.mxu0 %v157
        %2368 = vmatpush1.msra.mxu0 %v156
        %2369 = vmatprep.subr.mxu0 %v155
        %2370 = vmatpush1.msra.mxu0 %v154
        %2371 = vmatprep.subr.mxu0 %v153
        %2372 = vmatpush1.msra.mxu0 %v152
        %2373 = vmatprep.subr.mxu0 %v215
        %2374 = vmatpush2.msra.mxu0 %v214
        %2375 = vmatprep.subr.mxu0 %v213
        %2376 = vmatpush2.msra.mxu0 %v212
        %2377 = vmatprep.subr.mxu0 %v211
        %2378 = vmatpush2.msra.mxu0 %v210
        %2379 = vmatprep.subr.mxu0 %v209
        %2380 = vmatpush2.msra.mxu0 %v208
        %2381 = vmatprep.subr.mxu0 %v207
        %2382 = vmatpush2.msra.mxu0 %v206
        %2383 = vmatprep.subr.mxu0 %v205
        %2384 = vmatpush2.msra.mxu0 %v204
        %2385 = vmatprep.subr.mxu0 %v203
        %2386 = vmatpush2.msra.mxu0 %v202
        %2387 = vmatprep.subr.mxu0 %v201
        %2388 = vmatpush2.msra.mxu0 %v200
        %2389 = vmatprep.subr.mxu0 %v199
        %2390 = vmatpush2.msra.mxu0 %v198
        %2391 = vmatprep.subr.mxu0 %v197
        %2392 = vmatpush2.msra.mxu0 %v196
        %2393 = vmatprep.subr.mxu0 %v195
        %2394 = vmatpush2.msra.mxu0 %v194
        %2395 = vmatprep.subr.mxu0 %v193
        %2396 = vmatpush2.msra.mxu0 %v192
        %2397 = vmatprep.subr.mxu0 %v191
        %2398 = vmatpush2.msra.mxu0 %v190
        %2399 = vmatprep.subr.mxu0 %v189
        %2400 = vmatpush2.msra.mxu0 %v188
        %2401 = vmatprep.subr.mxu0 %v187
        %2402 = vmatpush2.msra.mxu0 %v186
        %2403 = vmatprep.subr.mxu0 %v185
        %2404 = vmatpush2.msra.mxu0 %v184
        %2405 = vmatprep.mubr.f32.mxu0 %v2153
        %2406 = vmatmul.mubr.f32.gmra.mxu0 %v2151
        %v2407 = vpop.f32.mrf.mxu0
        %v2408 = vadd.f32 0.0, %v2407
        %v2409 = vpop.f32.mrf.mxu0
        %v2410 = vadd.f32 0.0, %v2409
        %2411 = vmatprep.mubr.f32.mxu0 %v2159
        %2412 = vmatmul.mubr.f32.gmra.mxu0 %v2157
        %v2413 = vpop.f32.mrf.mxu0
        %v2414 = vadd.f32 0.0, %v2413
        %v2415 = vpop.f32.mrf.mxu0
        %v2416 = vadd.f32 0.0, %v2415
        %2417 = vmatprep.mubr.f32.mxu0 %v2165
        %2418 = vmatmul.mubr.f32.gmra.mxu0 %v2163
        %v2419 = vpop.f32.mrf.mxu0
        %v2420 = vadd.f32 0.0, %v2419
        %v2421 = vpop.f32.mrf.mxu0
        %v2422 = vadd.f32 0.0, %v2421
        %2423 = vmatprep.mubr.f32.mxu0 %v2171
        %2424 = vmatmul.mubr.f32.gmra.mxu0 %v2169
        %v2425 = vpop.f32.mrf.mxu0
        %v2426 = vadd.f32 0.0, %v2425
        %v2427 = vpop.f32.mrf.mxu0
        %v2428 = vadd.f32 0.0, %v2427
        %2429 = vmatprep.mubr.f32.mxu0 %v2177
        %2430 = vmatmul.mubr.f32.gmra.mxu0 %v2175
        %v2431 = vpop.f32.mrf.mxu0
        %v2432 = vadd.f32 0.0, %v2431
        %v2433 = vpop.f32.mrf.mxu0
        %v2434 = vadd.f32 0.0, %v2433
        %2435 = vmatprep.mubr.f32.mxu0 %v2183
        %2436 = vmatmul.mubr.f32.gmra.mxu0 %v2181
        %v2437 = vpop.f32.mrf.mxu0
        %v2438 = vadd.f32 0.0, %v2437
        %v2439 = vpop.f32.mrf.mxu0
        %v2440 = vadd.f32 0.0, %v2439
        %2441 = vmatprep.mubr.f32.mxu0 %v2189
        %2442 = vmatmul.mubr.f32.gmra.mxu0 %v2187
        %v2443 = vpop.f32.mrf.mxu0
        %v2444 = vadd.f32 0.0, %v2443
        %v2445 = vpop.f32.mrf.mxu0
        %v2446 = vadd.f32 0.0, %v2445
        %2447 = vmatprep.mubr.f32.mxu0 %v2195
        %2448 = vmatmul.mubr.f32.gmra.mxu0 %v2193
        %v2449 = vpop.f32.mrf.mxu0
        %v2450 = vadd.f32 0.0, %v2449
        %v2451 = vpop.f32.mrf.mxu0
        %v2452 = vadd.f32 0.0, %v2451
        %2453 = vmatprep.mubr.f32.mxu0 %v2201
        %2454 = vmatmul.mubr.f32.gmra.mxu0 %v2199
        %v2455 = vpop.f32.mrf.mxu0
        %v2456 = vadd.f32 0.0, %v2455
        %v2457 = vpop.f32.mrf.mxu0
        %v2458 = vadd.f32 0.0, %v2457
        %2459 = vmatprep.mubr.f32.mxu0 %v2207
        %2460 = vmatmul.mubr.f32.gmra.mxu0 %v2205
        %v2461 = vpop.f32.mrf.mxu0
        %v2462 = vadd.f32 0.0, %v2461
        %v2463 = vpop.f32.mrf.mxu0
        %v2464 = vadd.f32 0.0, %v2463
        %2465 = vmatprep.mubr.f32.mxu0 %v2213
        %2466 = vmatmul.mubr.f32.gmra.mxu0 %v2211
        %v2467 = vpop.f32.mrf.mxu0
        %v2468 = vadd.f32 0.0, %v2467
        %v2469 = vpop.f32.mrf.mxu0
        %v2470 = vadd.f32 0.0, %v2469
        %2471 = vmatprep.mubr.f32.mxu0 %v2219
        %2472 = vmatmul.mubr.f32.gmra.mxu0 %v2217
        %v2473 = vpop.f32.mrf.mxu0
        %v2474 = vadd.f32 0.0, %v2473
        %v2475 = vpop.f32.mrf.mxu0
        %v2476 = vadd.f32 0.0, %v2475
        %2477 = vmatprep.mubr.f32.mxu0 %v2225
        %2478 = vmatmul.mubr.f32.gmra.mxu0 %v2223
        %v2479 = vpop.f32.mrf.mxu0
        %v2480 = vadd.f32 0.0, %v2479
        %v2481 = vpop.f32.mrf.mxu0
        %v2482 = vadd.f32 0.0, %v2481
        %2483 = vmatprep.mubr.f32.mxu0 %v2231
        %2484 = vmatmul.mubr.f32.gmra.mxu0 %v2229
        %v2485 = vpop.f32.mrf.mxu0
        %v2486 = vadd.f32 0.0, %v2485
        %v2487 = vpop.f32.mrf.mxu0
        %v2488 = vadd.f32 0.0, %v2487
        %2489 = vmatprep.mubr.f32.mxu0 %v2237
        %2490 = vmatmul.mubr.f32.gmra.mxu0 %v2235
        %v2491 = vpop.f32.mrf.mxu0
        %v2492 = vadd.f32 0.0, %v2491
        %v2493 = vpop.f32.mrf.mxu0
        %v2494 = vadd.f32 0.0, %v2493
        %2495 = vmatprep.mubr.f32.mxu0 %v2243
        %2496 = vmatmul.mubr.f32.gmra.mxu0 %v2241
        %v2497 = vpop.f32.mrf.mxu0
        %v2498 = vadd.f32 0.0, %v2497
        %v2499 = vpop.f32.mrf.mxu0
        %v2500 = vadd.f32 0.0, %v2499
        %2501 = vdwg.mxu0
        %v2502 = vld [vmem:[%s149] sm:$0xff]
        %v2503 = vld [vmem:[%s149 + $0x8] sm:$0xff]
        %v2504 = vld [vmem:[%s149 + $0x10] sm:$0xff]
        %v2505 = vld [vmem:[%s149 + $0x18] sm:$0xff]
        %v2506 = vld [vmem:[%s149 + $0x20] sm:$0xff]
        %v2507 = vld [vmem:[%s149 + $0x28] sm:$0xff]
        %v2508 = vld [vmem:[%s149 + $0x30] sm:$0xff]
        %v2509 = vld [vmem:[%s149 + $0x38] sm:$0xff]
        %v2510 = vld [vmem:[%s149 + $0x40] sm:$0xff]
        %v2511 = vld [vmem:[%s149 + $0x48] sm:$0xff]
        %v2512 = vld [vmem:[%s149 + $0x50] sm:$0xff]
        %v2513 = vld [vmem:[%s149 + $0x58] sm:$0xff]
        %v2514 = vld [vmem:[%s149 + $0x60] sm:$0xff]
        %v2515 = vld [vmem:[%s149 + $0x68] sm:$0xff]
        %v2516 = vld [vmem:[%s149 + $0x70] sm:$0xff]
        %v2517 = vld [vmem:[%s149 + $0x78] sm:$0xff]
        %v2518 = vld [vmem:[%s149 + $0x80] sm:$0xff]
        %v2519 = vld [vmem:[%s149 + $0x88] sm:$0xff]
        %v2520 = vld [vmem:[%s149 + $0x90] sm:$0xff]
        %v2521 = vld [vmem:[%s149 + $0x98] sm:$0xff]
        %v2522 = vld [vmem:[%s149 + $0xa0] sm:$0xff]
        %v2523 = vld [vmem:[%s149 + $0xa8] sm:$0xff]
        %v2524 = vld [vmem:[%s149 + $0xb0] sm:$0xff]
        %v2525 = vld [vmem:[%s149 + $0xb8] sm:$0xff]
        %v2526 = vld [vmem:[%s149 + $0xc0] sm:$0xff]
        %v2527 = vld [vmem:[%s149 + $0xc8] sm:$0xff]
        %v2528 = vld [vmem:[%s149 + $0xd0] sm:$0xff]
        %v2529 = vld [vmem:[%s149 + $0xd8] sm:$0xff]
        %v2530 = vld [vmem:[%s149 + $0xe0] sm:$0xff]
        %v2531 = vld [vmem:[%s149 + $0xe8] sm:$0xff]
        %v2532 = vld [vmem:[%s149 + $0xf0] sm:$0xff]
        %v2533 = vld [vmem:[%s149 + $0xf8] sm:$0xff]
        %v2534 = vadd.f32 %v2502, %v2408
        %v2535 = vadd.f32 %v2503, %v2410
        %v2536 = vadd.f32 %v2504, %v2414
        %v2537 = vadd.f32 %v2505, %v2416
        %v2538 = vadd.f32 %v2506, %v2420
        %v2539 = vadd.f32 %v2507, %v2422
        %v2540 = vadd.f32 %v2508, %v2426
        %v2541 = vadd.f32 %v2509, %v2428
        %v2542 = vadd.f32 %v2510, %v2432
        %v2543 = vadd.f32 %v2511, %v2434
        %v2544 = vadd.f32 %v2512, %v2438
        %v2545 = vadd.f32 %v2513, %v2440
        %v2546 = vadd.f32 %v2514, %v2444
        %v2547 = vadd.f32 %v2515, %v2446
        %v2548 = vadd.f32 %v2516, %v2450
        %v2549 = vadd.f32 %v2517, %v2452
        %v2550 = vadd.f32 %v2518, %v2456
        %v2551 = vadd.f32 %v2519, %v2458
        %v2552 = vadd.f32 %v2520, %v2462
        %v2553 = vadd.f32 %v2521, %v2464
        %v2554 = vadd.f32 %v2522, %v2468
        %v2555 = vadd.f32 %v2523, %v2470
        %v2556 = vadd.f32 %v2524, %v2474
        %v2557 = vadd.f32 %v2525, %v2476
        %v2558 = vadd.f32 %v2526, %v2480
        %v2559 = vadd.f32 %v2527, %v2482
        %v2560 = vadd.f32 %v2528, %v2486
        %v2561 = vadd.f32 %v2529, %v2488
        %v2562 = vadd.f32 %v2530, %v2492
        %v2563 = vadd.f32 %v2531, %v2494
        %v2564 = vadd.f32 %v2532, %v2498
        %v2565 = vadd.f32 %v2533, %v2500
        %2566 = vst [vmem:[%s149] sm:$0xff] %v2534
        %2567 = vst [vmem:[%s149 + $0x8] sm:$0xff] %v2535
        %2568 = vst [vmem:[%s149 + $0x10] sm:$0xff] %v2536
        %2569 = vst [vmem:[%s149 + $0x18] sm:$0xff] %v2537
        %2570 = vst [vmem:[%s149 + $0x20] sm:$0xff] %v2538
        %2571 = vst [vmem:[%s149 + $0x28] sm:$0xff] %v2539
        %2572 = vst [vmem:[%s149 + $0x30] sm:$0xff] %v2540
        %2573 = vst [vmem:[%s149 + $0x38] sm:$0xff] %v2541
        %2574 = vst [vmem:[%s149 + $0x40] sm:$0xff] %v2542
        %2575 = vst [vmem:[%s149 + $0x48] sm:$0xff] %v2543
        %2576 = vst [vmem:[%s149 + $0x50] sm:$0xff] %v2544
        %2577 = vst [vmem:[%s149 + $0x58] sm:$0xff] %v2545
        %2578 = vst [vmem:[%s149 + $0x60] sm:$0xff] %v2546
        %2579 = vst [vmem:[%s149 + $0x68] sm:$0xff] %v2547
        %2580 = vst [vmem:[%s149 + $0x70] sm:$0xff] %v2548
        %2581 = vst [vmem:[%s149 + $0x78] sm:$0xff] %v2549
        %2582 = vst [vmem:[%s149 + $0x80] sm:$0xff] %v2550
        %2583 = vst [vmem:[%s149 + $0x88] sm:$0xff] %v2551
        %2584 = vst [vmem:[%s149 + $0x90] sm:$0xff] %v2552
        %2585 = vst [vmem:[%s149 + $0x98] sm:$0xff] %v2553
        %2586 = vst [vmem:[%s149 + $0xa0] sm:$0xff] %v2554
        %2587 = vst [vmem:[%s149 + $0xa8] sm:$0xff] %v2555
        %2588 = vst [vmem:[%s149 + $0xb0] sm:$0xff] %v2556
        %2589 = vst [vmem:[%s149 + $0xb8] sm:$0xff] %v2557
        %2590 = vst [vmem:[%s149 + $0xc0] sm:$0xff] %v2558
        %2591 = vst [vmem:[%s149 + $0xc8] sm:$0xff] %v2559
        %2592 = vst [vmem:[%s149 + $0xd0] sm:$0xff] %v2560
        %2593 = vst [vmem:[%s149 + $0xd8] sm:$0xff] %v2561
        %2594 = vst [vmem:[%s149 + $0xe0] sm:$0xff] %v2562
        %2595 = vst [vmem:[%s149 + $0xe8] sm:$0xff] %v2563
        %2596 = vst [vmem:[%s149 + $0xf0] sm:$0xff] %v2564
        %2597 = vst [vmem:[%s149 + $0xf8] sm:$0xff] %v2565
        %v2598 = vld [vmem:[%s149] sm:$0xff]
        %v2599 = vld [vmem:[%s149 + $0x8] sm:$0xff]
        %v2600 = vld [vmem:[%s149 + $0x10] sm:$0xff]
        %v2601 = vld [vmem:[%s149 + $0x18] sm:$0xff]
        %v2602 = vld [vmem:[%s149 + $0x20] sm:$0xff]
        %v2603 = vld [vmem:[%s149 + $0x28] sm:$0xff]
        %v2604 = vld [vmem:[%s149 + $0x30] sm:$0xff]
        %v2605 = vld [vmem:[%s149 + $0x38] sm:$0xff]
        %v2606 = vld [vmem:[%s149 + $0x40] sm:$0xff]
        %v2607 = vld [vmem:[%s149 + $0x48] sm:$0xff]
        %v2608 = vld [vmem:[%s149 + $0x50] sm:$0xff]
        %v2609 = vld [vmem:[%s149 + $0x58] sm:$0xff]
        %v2610 = vld [vmem:[%s149 + $0x60] sm:$0xff]
        %v2611 = vld [vmem:[%s149 + $0x68] sm:$0xff]
        %v2612 = vld [vmem:[%s149 + $0x70] sm:$0xff]
        %v2613 = vld [vmem:[%s149 + $0x78] sm:$0xff]
        %v2614 = vld [vmem:[%s149 + $0x80] sm:$0xff]
        %v2615 = vld [vmem:[%s149 + $0x88] sm:$0xff]
        %v2616 = vld [vmem:[%s149 + $0x90] sm:$0xff]
        %v2617 = vld [vmem:[%s149 + $0x98] sm:$0xff]
        %v2618 = vld [vmem:[%s149 + $0xa0] sm:$0xff]
        %v2619 = vld [vmem:[%s149 + $0xa8] sm:$0xff]
        %v2620 = vld [vmem:[%s149 + $0xb0] sm:$0xff]
        %v2621 = vld [vmem:[%s149 + $0xb8] sm:$0xff]
        %v2622 = vld [vmem:[%s149 + $0xc0] sm:$0xff]
        %v2623 = vld [vmem:[%s149 + $0xc8] sm:$0xff]
        %v2624 = vld [vmem:[%s149 + $0xd0] sm:$0xff]
        %v2625 = vld [vmem:[%s149 + $0xd8] sm:$0xff]
        %v2626 = vld [vmem:[%s149 + $0xe0] sm:$0xff]
        %v2627 = vld [vmem:[%s149 + $0xe8] sm:$0xff]
        %v2628 = vld [vmem:[%s149 + $0xf0] sm:$0xff]
        %v2629 = vld [vmem:[%s149 + $0xf8] sm:$0xff]
        %v2630 = vld [vmem:[#allocation5] sm:$0x3]
        %v2632 = vlaneseq
        %v2633 = vshrl.u32 %v2632, 7
        %v2634 = vsub.s32 0, %v2633
        %v2635 = vrot.slane %v2630, %v2634
        %v2636 = vlaneseq
        %v2637 = vshrl.u32 %v2636, 7
        %v2638 = vsub.s32 1, %v2637
        %v2639 = vrot.slane %v2630, %v2638
        %v2642 = vmul.f32 %v2598, %v2635
        %v2643 = vmul.f32 %v2599, %v2639
        %v2644 = vmul.f32 %v2600, %v2635
        %v2645 = vmul.f32 %v2601, %v2639
        %v2646 = vmul.f32 %v2602, %v2635
        %v2647 = vmul.f32 %v2603, %v2639
        %v2648 = vmul.f32 %v2604, %v2635
        %v2649 = vmul.f32 %v2605, %v2639
        %v2650 = vmul.f32 %v2606, %v2635
        %v2651 = vmul.f32 %v2607, %v2639
        %v2652 = vmul.f32 %v2608, %v2635
        %v2653 = vmul.f32 %v2609, %v2639
        %v2654 = vmul.f32 %v2610, %v2635
        %v2655 = vmul.f32 %v2611, %v2639
        %v2656 = vmul.f32 %v2612, %v2635
        %v2657 = vmul.f32 %v2613, %v2639
        %v2658 = vmul.f32 %v2614, %v2635
        %v2659 = vmul.f32 %v2615, %v2639
        %v2660 = vmul.f32 %v2616, %v2635
        %v2661 = vmul.f32 %v2617, %v2639
        %v2662 = vmul.f32 %v2618, %v2635
        %v2663 = vmul.f32 %v2619, %v2639
        %v2664 = vmul.f32 %v2620, %v2635
        %v2665 = vmul.f32 %v2621, %v2639
        %v2666 = vmul.f32 %v2622, %v2635
        %v2667 = vmul.f32 %v2623, %v2639
        %v2668 = vmul.f32 %v2624, %v2635
        %v2669 = vmul.f32 %v2625, %v2639
        %v2670 = vmul.f32 %v2626, %v2635
        %v2671 = vmul.f32 %v2627, %v2639
        %v2672 = vmul.f32 %v2628, %v2635
        %v2673 = vmul.f32 %v2629, %v2639
        %v2674 = vmax.f32 %v2642, 0.001
        %v2675 = vmax.f32 %v2643, 0.001
        %v2676 = vmax.f32 %v2644, 0.001
        %v2677 = vmax.f32 %v2645, 0.001
        %v2678 = vmax.f32 %v2646, 0.001
        %v2679 = vmax.f32 %v2647, 0.001
        %v2680 = vmax.f32 %v2648, 0.001
        %v2681 = vmax.f32 %v2649, 0.001
        %v2682 = vmax.f32 %v2650, 0.001
        %v2683 = vmax.f32 %v2651, 0.001
        %v2684 = vmax.f32 %v2652, 0.001
        %v2685 = vmax.f32 %v2653, 0.001
        %v2686 = vmax.f32 %v2654, 0.001
        %v2687 = vmax.f32 %v2655, 0.001
        %v2688 = vmax.f32 %v2656, 0.001
        %v2689 = vmax.f32 %v2657, 0.001
        %v2690 = vmax.f32 %v2658, 0.001
        %v2691 = vmax.f32 %v2659, 0.001
        %v2692 = vmax.f32 %v2660, 0.001
        %v2693 = vmax.f32 %v2661, 0.001
        %v2694 = vmax.f32 %v2662, 0.001
        %v2695 = vmax.f32 %v2663, 0.001
        %v2696 = vmax.f32 %v2664, 0.001
        %v2697 = vmax.f32 %v2665, 0.001
        %v2698 = vmax.f32 %v2666, 0.001
        %v2699 = vmax.f32 %v2667, 0.001
        %v2700 = vmax.f32 %v2668, 0.001
        %v2701 = vmax.f32 %v2669, 0.001
        %v2702 = vmax.f32 %v2670, 0.001
        %v2703 = vmax.f32 %v2671, 0.001
        %v2704 = vmax.f32 %v2672, 0.001
        %v2705 = vmax.f32 %v2673, 0.001
        %v2706 = vlog2.pop %v2674
        %v2707 = vmul.f32 %v2706, 0.6931472
        %v2708 = vlog2.pop %v2675
        %v2709 = vmul.f32 %v2708, 0.6931472
        %v2710 = vlog2.pop %v2676
        %v2711 = vmul.f32 %v2710, 0.6931472
        %v2712 = vlog2.pop %v2677
        %v2713 = vmul.f32 %v2712, 0.6931472
        %v2714 = vlog2.pop %v2678
        %v2715 = vmul.f32 %v2714, 0.6931472
        %v2716 = vlog2.pop %v2679
        %v2717 = vmul.f32 %v2716, 0.6931472
        %v2718 = vlog2.pop %v2680
        %v2719 = vmul.f32 %v2718, 0.6931472
        %v2720 = vlog2.pop %v2681
        %v2721 = vmul.f32 %v2720, 0.6931472
        %v2722 = vlog2.pop %v2682
        %v2723 = vmul.f32 %v2722, 0.6931472
        %v2724 = vlog2.pop %v2683
        %v2725 = vmul.f32 %v2724, 0.6931472
        %v2726 = vlog2.pop %v2684
        %v2727 = vmul.f32 %v2726, 0.6931472
        %v2728 = vlog2.pop %v2685
        %v2729 = vmul.f32 %v2728, 0.6931472
        %v2730 = vlog2.pop %v2686
        %v2731 = vmul.f32 %v2730, 0.6931472
        %v2732 = vlog2.pop %v2687
        %v2733 = vmul.f32 %v2732, 0.6931472
        %v2734 = vlog2.pop %v2688
        %v2735 = vmul.f32 %v2734, 0.6931472
        %v2736 = vlog2.pop %v2689
        %v2737 = vmul.f32 %v2736, 0.6931472
        %v2738 = vlog2.pop %v2690
        %v2739 = vmul.f32 %v2738, 0.6931472
        %v2740 = vlog2.pop %v2691
        %v2741 = vmul.f32 %v2740, 0.6931472
        %v2742 = vlog2.pop %v2692
        %v2743 = vmul.f32 %v2742, 0.6931472
        %v2744 = vlog2.pop %v2693
        %v2745 = vmul.f32 %v2744, 0.6931472
        %v2746 = vlog2.pop %v2694
        %v2747 = vmul.f32 %v2746, 0.6931472
        %v2748 = vlog2.pop %v2695
        %v2749 = vmul.f32 %v2748, 0.6931472
        %v2750 = vlog2.pop %v2696
        %v2751 = vmul.f32 %v2750, 0.6931472
        %v2752 = vlog2.pop %v2697
        %v2753 = vmul.f32 %v2752, 0.6931472
        %v2754 = vlog2.pop %v2698
        %v2755 = vmul.f32 %v2754, 0.6931472
        %v2756 = vlog2.pop %v2699
        %v2757 = vmul.f32 %v2756, 0.6931472
        %v2758 = vlog2.pop %v2700
        %v2759 = vmul.f32 %v2758, 0.6931472
        %v2760 = vlog2.pop %v2701
        %v2761 = vmul.f32 %v2760, 0.6931472
        %v2762 = vlog2.pop %v2702
        %v2763 = vmul.f32 %v2762, 0.6931472
        %v2764 = vlog2.pop %v2703
        %v2765 = vmul.f32 %v2764, 0.6931472
        %v2766 = vlog2.pop %v2704
        %v2767 = vmul.f32 %v2766, 0.6931472
        %v2768 = vlog2.pop %v2705
        %v2769 = vmul.f32 %v2768, 0.6931472
        %2770 = vst [vmem:[%s149] sm:$0xff] %v2707
        %2771 = vst [vmem:[%s149 + $0x8] sm:$0xff] %v2709
        %2772 = vst [vmem:[%s149 + $0x10] sm:$0xff] %v2711
        %2773 = vst [vmem:[%s149 + $0x18] sm:$0xff] %v2713
        %2774 = vst [vmem:[%s149 + $0x20] sm:$0xff] %v2715
        %2775 = vst [vmem:[%s149 + $0x28] sm:$0xff] %v2717
        %2776 = vst [vmem:[%s149 + $0x30] sm:$0xff] %v2719
        %2777 = vst [vmem:[%s149 + $0x38] sm:$0xff] %v2721
        %2778 = vst [vmem:[%s149 + $0x40] sm:$0xff] %v2723
        %2779 = vst [vmem:[%s149 + $0x48] sm:$0xff] %v2725
        %2780 = vst [vmem:[%s149 + $0x50] sm:$0xff] %v2727
        %2781 = vst [vmem:[%s149 + $0x58] sm:$0xff] %v2729
        %2782 = vst [vmem:[%s149 + $0x60] sm:$0xff] %v2731
        %2783 = vst [vmem:[%s149 + $0x68] sm:$0xff] %v2733
        %2784 = vst [vmem:[%s149 + $0x70] sm:$0xff] %v2735
        %2785 = vst [vmem:[%s149 + $0x78] sm:$0xff] %v2737
        %2786 = vst [vmem:[%s149 + $0x80] sm:$0xff] %v2739
        %2787 = vst [vmem:[%s149 + $0x88] sm:$0xff] %v2741
        %2788 = vst [vmem:[%s149 + $0x90] sm:$0xff] %v2743
        %2789 = vst [vmem:[%s149 + $0x98] sm:$0xff] %v2745
        %2790 = vst [vmem:[%s149 + $0xa0] sm:$0xff] %v2747
        %2791 = vst [vmem:[%s149 + $0xa8] sm:$0xff] %v2749
        %2792 = vst [vmem:[%s149 + $0xb0] sm:$0xff] %v2751
        %2793 = vst [vmem:[%s149 + $0xb8] sm:$0xff] %v2753
        %2794 = vst [vmem:[%s149 + $0xc0] sm:$0xff] %v2755
        %2795 = vst [vmem:[%s149 + $0xc8] sm:$0xff] %v2757
        %2796 = vst [vmem:[%s149 + $0xd0] sm:$0xff] %v2759
        %2797 = vst [vmem:[%s149 + $0xd8] sm:$0xff] %v2761
        %2798 = vst [vmem:[%s149 + $0xe0] sm:$0xff] %v2763
        %2799 = vst [vmem:[%s149 + $0xe8] sm:$0xff] %v2765
        %2800 = vst [vmem:[%s149 + $0xf0] sm:$0xff] %v2767
        %2801 = vst [vmem:[%s149 + $0xf8] sm:$0xff] %v2769
        %s2802 = sand.u32 %s68, 1
        %s2803 = scalar_lea.sflag [#allocation4], %s2802
        %s2804 = sand.u32 %s68, 1
        %s2805 = smul.addr %s2804, 256
        %s2806 = scalar_lea.vmem [#allocation7], %s2805
        // Predicated region
        $region37: #{tpu_custom_call.1} parent=27 // pred_check
          %p2807 = pneg %p78
        $region38: #{tpu_custom_call.1} parent=27 // pred_check_branch
          %2809 = sbr.rel (%p2807) target = $region40
        $region39: #{tpu_custom_call.1} parent=27 // pred_region
          %s2810 = smul.u32 16, %s18
          %s2812 = ssub.s32 4096, 4096
          %2813 = vsyncadd %s2803, %s2812
          %s2814 = smul.addr %s2810, 2
          %s2815 = smul.addr %s2814, 128
          %s2816 = scalar_lea.hbm %s2, %s2815
          %s2817 = sshll.u32 %s2806, 4
          %s2818 = int_to_ptr.vmem [resolvable:$true] %s2817
          %2823 = dma.vmem_to_hbm [thread:$0]  %s2818, 4096, %s2816, %s2803, 256, 256, 16
        $region40: #{tpu_custom_call.1} parent=27 // pred_fallthru
          _
      $region28: #{tpu_custom_call.1} parent=5 // pred_fallthru
        _
      %p2824 = scmp.le.s32.totalorder 2, %s13
      // Predicated region
      $region41: #{tpu_custom_call.1} parent=5 // pred_check
        %p2825 = pneg %p2824
      $region42: #{tpu_custom_call.1} parent=5 // pred_check_branch
        %2827 = sbr.rel (%p2825) target = $region44
      $region43: #{tpu_custom_call.1} parent=5 // pred_region
        %s2828 = ssub.s32 %s13, 2
        // Predicated region
        $region45: #{tpu_custom_call.1} parent=43 // pred_check
          %p2829 = pneg %p84
        $region46: #{tpu_custom_call.1} parent=43 // pred_check_branch
          %2831 = sbr.rel (%p2829) target = $region48
        $region47: #{tpu_custom_call.1} parent=43 // pred_region
          %s2832 = sand.u32 %s69, 1
          %s2833 = scalar_lea.sflag [#allocation4], %s2832
          %s2834 = sand.u32 %s69, 1
          %s2835 = smul.addr %s2834, 256
          %s2836 = scalar_lea.vmem [#allocation7], %s2835
          %2837 = dma.done %s2833, 4096
        $region48: #{tpu_custom_call.1} parent=43 // pred_fallthru
          _
      $region44: #{tpu_custom_call.1} parent=5 // pred_fallthru
        _
    $region6: #{tpu_custom_call.1} parent=1 // loop_footer
      %s17 = sadd.s32 1, %s13
    $region7: #{tpu_custom_call.1} parent=1 // loop_footer_branch
      %12 = sbr.rel target = $region3
    $region8: #{tpu_custom_call.1} parent=1 // loop_exit
      _
    %2838 = vsyncpa [#allocation3], 1
    %s2839 = scalar_lea.sflag [#allocation3], 1
    %2840 = vsyncpa %s2839, 1
    %2841 = vsyncpa [#allocation6], 1
    %2842 = vsyncpa [#allocation4], 1
    %s2843 = scalar_lea.sflag [#allocation4], 1
    %2844 = vsyncpa %s2843, 1

</llo_original>
